<compile_context>
chip_gen: v7x
topology: tpu7x:2x2x1
jax: 0.10.0
libtpu: 0.0.40
codegen_flags: <defaults>
</compile_context>

<pallas_src>
import functools
import math

import jax
import jax.numpy as jnp
from jax.experimental import pallas as pl
from jax.experimental.pallas import tpu as pltpu

EPS = 1e-6          # Layer_Normalization eps
NEG_INF = -1e9      # masked_fill value used in the PyTorch module


# ----------------------------- in-kernel helpers -----------------------------

def _layer_norm(x, alpha, bias):
    # Matches torch: mean / unbiased std (N-1), then alpha*(x-mean)/(std+eps)+bias
    # Exact reciprocal here (tighter parity); approx reciprocal only in softmax.
    mean = jnp.mean(x, axis=-1, keepdims=True)
    var = jnp.sum((x - mean) ** 2, axis=-1, keepdims=True) / (x.shape[-1] - 1)
    return alpha * (x - mean) / (jnp.sqrt(var) + EPS) + bias


def _softmax(s):
    m = jnp.max(s, axis=-1, keepdims=True)
    e = jnp.exp(s - m)
    return e * pl.reciprocal(jnp.sum(e, axis=-1, keepdims=True), approx=True)


def _split_heads(x2d, b, s, h, dk):
    # (b*s, h*dk) f32 -> (b*h, s, dk) bf16 via one reshape + one transpose
    # (relayout done in f32, cast last).  No per-head lane slicing.
    x = x2d.reshape(b, s, h, dk).transpose(0, 2, 1, 3)
    return x.reshape(b * h, s, dk).astype(jnp.bfloat16)


def _attention(q2d, k2d, v2d, wo, bo, add_mask, b, s_q, s_k, h, dk):
    # q2d : (b*s_q, D) f32, already projected + biased + pre-scaled by 1/sqrt(dk)
    # k2d/v2d : (b*s_k, D) f32 projected + biased
    # wo : (D, D) bf16, bo : (1, D) f32
    # add_mask : (b, s_q or 1, s_k) additive f32 mask (0 / NEG_INF)
    qh = _split_heads(q2d, b, s_q, h, dk)            # (b*h, s_q, dk) bf16
    kh = _split_heads(k2d, b, s_k, h, dk)            # (b*h, s_k, dk) bf16
    vh = _split_heads(v2d, b, s_k, h, dk)            # (b*h, s_k, dk) bf16

    # One batched contraction over all (batch, head) pairs: no per-batch loop.
    s = jnp.einsum('gqd,gkd->gqk', qh, kh,
                   preferred_element_type=jnp.float32)        # (b*h, s_q, s_k)
    s = s.reshape(b, h, s_q, s_k) + add_mask[:, None]          # mask applied once
    p = _softmax(s).reshape(b * h, s_q, s_k).astype(jnp.bfloat16)
    ctx = jnp.einsum('gqk,gkd->gqd', p, vh,
                     preferred_element_type=jnp.float32)       # (b*h, s_q, dk)

    # Merge heads back into rows and do ONE (rows, D) @ (D, D) output projection:
    # contraction dim is D (= h*dk), with the head-sum fused into the matmul.
    ctx2d = (ctx.reshape(b, h, s_q, dk).transpose(0, 2, 1, 3)
                .reshape(b * s_q, h * dk).astype(jnp.bfloat16))
    return jnp.dot(ctx2d, wo, preferred_element_type=jnp.float32) + bo


# --------------------------------- kernel ------------------------------------

def decoder_block_kernel(
    ln_ref,                                      # SMEM (3, 2): [alpha_i, bias_i]
    x_ref, enc_ref, tmask_ref, smask_ref,
    s_wqkv, s_wo,                                # self-attn weights (bf16)
    c_wq, c_wkv, c_wo,                           # cross-attn weights (bf16)
    f_w1, f_w2,                                  # feed-forward weights (bf16)
    b_sqkv_ref, b_ckv_ref, b_misc_ref, f_b1_ref,  # packed f32 biases
    out_ref,
    *, h, b_blk, s_t, s_s):
    bf16 = jnp.bfloat16
    d_model = x_ref.shape[-1]
    dk = d_model // h
    scale = 1.0 / math.sqrt(dk)

    x = x_ref[...]                               # (b_blk*s_t, D) f32
    enc = enc_ref[...]                           # (b_blk*s_s, D) f32
    b_misc = b_misc_ref[...]                     # (4, D) f32
    s_bo, c_bq, c_bo, f_b2 = (b_misc[0:1], b_misc[1:2], b_misc[2:3], b_misc[3:4])

    # Additive masks, computed once per attention call (hoisted out of heads).
    tgt_add = jnp.where(tmask_ref[...] == 0.0, NEG_INF, 0.0)   # (b_blk, s_t, s_t)
    src_add = jnp.where(smask_ref[...] == 0.0, NEG_INF, 0.0)   # (b_blk, 1,  s_s)

    # --- Residual connection 0: self-attention (dropout = identity, eval mode)
    n0 = _layer_norm(x, ln_ref[0, 0], ln_ref[0, 1])
    qkv = jnp.dot(n0.astype(bf16), s_wqkv[...],
                  preferred_element_type=jnp.float32) + b_sqkv_ref[...]
    q = qkv[:, :d_model] * scale                 # scale once on q
    k = qkv[:, d_model:2 * d_model]
    v = qkv[:, 2 * d_model:]
    x1 = x + _attention(q, k, v, s_wo[...], s_bo, tgt_add,
                        b_blk, s_t, s_t, h, dk)

    # --- Residual connection 1: cross-attention over the encoder output
    n1 = _layer_norm(x1, ln_ref[1, 0], ln_ref[1, 1])
    q = (jnp.dot(n1.astype(bf16), c_wq[...],
                 preferred_element_type=jnp.float32) + c_bq) * scale
    kv = jnp.dot(enc.astype(bf16), c_wkv[...],
                 preferred_element_type=jnp.float32) + b_ckv_ref[...]
    k = kv[:, :d_model]
    v = kv[:, d_model:]
    x2 = x1 + _attention(q, k, v, c_wo[...], c_bo, src_add,
                         b_blk, s_t, s_s, h, dk)

    # --- Residual connection 2: feed-forward block
    n2 = _layer_norm(x2, ln_ref[2, 0], ln_ref[2, 1])
    hdn = jnp.maximum(
        jnp.dot(n2.astype(bf16), f_w1[...],
                preferred_element_type=jnp.float32) + f_b1_ref[...], 0.0)
    ff = jnp.dot(hdn.astype(bf16), f_w2[...],
                 preferred_element_type=jnp.float32) + f_b2

    out_ref[...] = x2 + ff


# --------------------------------- wrapper -----------------------------------

def _vmem_capacity_bytes():
    try:
        return int(pltpu.get_tpu_info().vmem_capacity_bytes)
    except Exception:
        return 64 * 1024 * 1024      # conservative (v7x-sized) fallback


def _default_batch_block(B):
    # Keep the grid >= 2 steps so the BlockSpec pipeline can overlap DMA with
    # compute and both v7x TensorCores get work.  (At production sizes, bump
    # towards batch_block*S_t >= 256 rows while keeping grid >= 2.)
    best = B
    for d in range(B - 1, 0, -1):
        if B % d == 0 and B // d >= 2:
            best = d
            break
    return best


def decoder_block(x, enc, tgt_mask, src_mask, params, *, h, batch_block=None):
    """x: (B,S_t,D), enc: (B,S_s,D), tgt_mask: (B,S_t,S_t), src_mask: (B,1,S_s)."""
    B, S_t, D = x.shape
    S_s = enc.shape[1]
    d_ff = params["f_w1"].shape[1]
    assert D % h == 0
    if batch_block is None:
        batch_block = _default_batch_block(B)
    assert B % batch_block == 0
    grid = (B // batch_block,)

    # ---- host-side repacking (free XLA ops, outside the kernel) ----
    f32, bf16 = jnp.float32, jnp.bfloat16
    x2d = x.reshape(B * S_t, D).astype(f32)
    enc2d = enc.reshape(B * S_s, D).astype(f32)

    # Fused projection weights: w_q|w_k|w_v -> (D, 3D), cross w_k|w_v -> (D, 2D)
    s_wqkv = jnp.concatenate(
        [params["s_wq"], params["s_wk"], params["s_wv"]], axis=1).astype(bf16)
    s_wo = params["s_wo"].astype(bf16)
    c_wq = params["c_wq"].astype(bf16)
    c_wkv = jnp.concatenate(
        [params["c_wk"], params["c_wv"]], axis=1).astype(bf16)
    c_wo = params["c_wo"].astype(bf16)
    f_w1 = params["f_w1"].astype(bf16)
    f_w2 = params["f_w2"].astype(bf16)

    b_sqkv = jnp.concatenate(
        [params["s_bq"], params["s_bk"], params["s_bv"]],
        axis=1).reshape(1, 3 * D).astype(f32)
    b_ckv = jnp.concatenate(
        [params["c_bk"], params["c_bv"]], axis=1).reshape(1, 2 * D).astype(f32)
    b_misc = jnp.concatenate(
        [params["s_bo"].reshape(1, D), params["c_bq"].reshape(1, D),
         params["c_bo"].reshape(1, D), params["f_b2"].reshape(1, D)],
        axis=0).astype(f32)                                          # (4, D)
    f_b1 = params["f_b1"].reshape(1, d_ff).astype(f32)

    shared = lambda shape: pl.BlockSpec(shape, lambda g: (0,) * len(shape))
    in_specs = [
        pl.BlockSpec(memory_space=pltpu.MemorySpace.SMEM),                 # ln (3,2)
        pl.BlockSpec((batch_block * S_t, D), lambda g: (g, 0)),            # x rows
        pl.BlockSpec((batch_block * S_s, D), lambda g: (g, 0)),            # enc rows
        pl.BlockSpec((batch_block, S_t, S_t), lambda g: (g, 0, 0)),        # tgt mask
        pl.BlockSpec((batch_block, 1, S_s), lambda g: (g, 0, 0)),          # src mask
        shared((D, 3 * D)), shared((D, D)),                                # self W
        shared((D, D)), shared((D, 2 * D)), shared((D, D)),                # cross W
        shared((D, d_ff)), shared((d_ff, D)),                              # FFN W
        shared((1, 3 * D)), shared((1, 2 * D)), shared((4, D)),            # biases
        shared((1, d_ff)),
    ]
    out_specs = pl.BlockSpec((batch_block * S_t, D), lambda g: (g, 0))

    # Advisory cost estimate for the XLA scheduler.
    flops = 2 * B * (4 * S_t * D * D + 2 * S_t * S_t * D          # self attention
                     + 2 * S_t * D * D + 2 * S_s * D * D
                     + 2 * S_t * S_s * D                          # cross attention
                     + 2 * S_t * D * d_ff)                        # feed-forward
    transcendentals = B * h * (S_t * S_t + S_t * S_s)
    bytes_accessed = int(
        4 * (x2d.size + enc2d.size + tgt_mask.size + src_mask.size
             + B * S_t * D + b_sqkv.size + b_ckv.size + b_misc.size
             + f_b1.size + 6)
        + 2 * (8 * D * D + 2 * D * d_ff))
    cost = pl.CostEstimate(flops=int(flops), transcendentals=int(transcendentals),
                           bytes_accessed=bytes_accessed)

    # VMEM budget sized from the actual blocks, clamped to the chip's capacity
    # (v7x has 64 MiB per TensorCore; do not over-request).
    block_bytes = (
        4 * (2 * batch_block * S_t * D + batch_block * S_s * D
             + batch_block * S_t * S_t + batch_block * S_s
             + 9 * D + 2 * d_ff)
        + 2 * (8 * D * D + 2 * D * d_ff))
    vmem_cap = _vmem_capacity_bytes()
    vmem_limit = int(min(int(0.75 * vmem_cap),
                         max(8 * 1024 * 1024, 8 * block_bytes)))

    kernel = functools.partial(decoder_block_kernel, h=h, b_blk=batch_block,
                               s_t=S_t, s_s=S_s)
    out2d = pl.pallas_call(
        kernel,
        out_shape=jax.ShapeDtypeStruct((B * S_t, D), jnp.float32),
        grid=grid,
        in_specs=in_specs,
        out_specs=out_specs,
        compiler_params=pltpu.CompilerParams(
            dimension_semantics=("parallel",),
            vmem_limit_bytes=vmem_limit),
        cost_estimate=cost,
    )(params["ln"], x2d, enc2d, tgt_mask, src_mask,
      s_wqkv, s_wo, c_wq, c_wkv, c_wo, f_w1, f_w2,
      b_sqkv, b_ckv, b_misc, f_b1)
    return out2d.reshape(B, S_t, D)


# ------------------------------ pure-JAX reference ----------------------------

def reference(x, enc, tgt_mask, src_mask, params, *, h):
    def ln(v, alpha, bias):
        mean = v.mean(-1, keepdims=True)
        std = jnp.sqrt(((v - mean) ** 2).sum(-1, keepdims=True) / (v.shape[-1] - 1))
        return alpha * (v - mean) / (std + EPS) + bias

    def mha(xq, xkv, wq, bq, wk, bk, wv, bv, wo, bo, mask):
        B, Sq, D = xq.shape
        Sk = xkv.shape[1]
        d_k = D // h
        q = (xq @ wq + bq).reshape(B, Sq, h, d_k).transpose(0, 2, 1, 3)
        k = (xkv @ wk + bk).reshape(B, Sk, h, d_k).transpose(0, 2, 1, 3)
        v = (xkv @ wv + bv).reshape(B, Sk, h, d_k).transpose(0, 2, 1, 3)
        s = q @ k.transpose(0, 1, 3, 2) / math.sqrt(d_k)
        s = jnp.where(mask[:, None, :, :] == 0.0, NEG_INF, s)
        p = jax.nn.softmax(s, axis=-1)
        o = (p @ v).transpose(0, 2, 1, 3).reshape(B, Sq, D)
        return o @ wo + bo

    p = params
    lnp = p["ln"]
    n0 = ln(x, lnp[0, 0], lnp[0, 1])
    x1 = x + mha(n0, n0, p["s_wq"], p["s_bq"], p["s_wk"], p["s_bk"],
                 p["s_wv"], p["s_bv"], p["s_wo"], p["s_bo"], tgt_mask)
    n1 = ln(x1, lnp[1, 0], lnp[1, 1])
    x2 = x1 + mha(n1, enc, p["c_wq"], p["c_bq"], p["c_wk"], p["c_bk"],
                  p["c_wv"], p["c_bv"], p["c_wo"], p["c_bo"], src_mask)
    n2 = ln(x2, lnp[2, 0], lnp[2, 1])
    ff = jnp.maximum(n2 @ p["f_w1"] + p["f_b1"], 0.0) @ p["f_w2"] + p["f_b2"]
    return x2 + ff


# ----------------------------------- main -------------------------------------

if __name__ == "__main__":
    B, S_t, S_s, D, H, D_FF = 2, 8, 16, 32, 4, 64

    key = jax.random.PRNGKey(0)
    keys = jax.random.split(key, 24)

    def init(k, shape, scale=0.1):
        return (scale * jax.random.normal(k, shape)).astype(jnp.float32)

    params = {
        # Layer_Normalization params (3 LNs): col 0 = alpha, col 1 = bias
        "ln": jnp.stack([1.0 + 0.1 * jax.random.normal(keys[16], (3,)),
                         0.1 * jax.random.normal(keys[17], (3,))],
                        axis=1).astype(jnp.float32),
        # self-attention
        "s_wq": init(keys[0], (D, D)), "s_bq": init(keys[1], (1, D)),
        "s_wk": init(keys[2], (D, D)), "s_bk": init(keys[3], (1, D)),
        "s_wv": init(keys[4], (D, D)), "s_bv": init(keys[5], (1, D)),
        "s_wo": init(keys[6], (D, D)), "s_bo": init(keys[7], (1, D)),
        # cross-attention
        "c_wq": init(keys[8], (D, D)),  "c_bq": init(keys[9], (1, D)),
        "c_wk": init(keys[10], (D, D)), "c_bk": init(keys[11], (1, D)),
        "c_wv": init(keys[12], (D, D)), "c_bv": init(keys[13], (1, D)),
        "c_wo": init(keys[14], (D, D)), "c_bo": init(keys[15], (1, D)),
        # feed-forward
        "f_w1": init(keys[20], (D, D_FF)), "f_b1": init(keys[21], (1, D_FF)),
        "f_w2": init(keys[22], (D_FF, D)), "f_b2": init(keys[23], (1, D)),
    }

    x = init(jax.random.PRNGKey(200), (B, S_t, D), scale=1.0)
    enc = init(jax.random.PRNGKey(201), (B, S_s, D), scale=1.0)

    # tgt mask: causal (B, S_t, S_t); src mask: compact padding mask (B, 1, S_s)
    causal = jnp.tril(jnp.ones((S_t, S_t), jnp.float32))
    tgt_mask = jnp.broadcast_to(causal, (B, S_t, S_t))
    src_valid = jnp.stack([
        jnp.ones((S_s,), jnp.float32),
        jnp.concatenate([jnp.ones((S_s - 3,), jnp.float32),
                         jnp.zeros((3,), jnp.float32)]),
    ])  # batch 1 has 3 padded source positions
    src_mask = src_valid[:, None, :]                      # (B, 1, S_s)

    ref = reference(x, enc, tgt_mask, src_mask, params, h=H)

    # Default path (grid >= 2 for pipelining / multi-core) and the fully folded one.
    for bb in (None, 2):
        out = jax.block_until_ready(
            decoder_block(x, enc, tgt_mask, src_mask, params, h=H, batch_block=bb))
        assert out.shape == (B, S_t, D)
        err = float(jnp.max(jnp.abs(out - ref)))
        # bf16 matmul operands (f32 accumulation) -> looser tolerance than pure f32
        assert jnp.allclose(out, ref, atol=3e-2, rtol=3e-2), (
            f"batch_block={bb}: max abs err {err}")

    print("KERNEL_OK")
</pallas_src>

<mosaic_0001>
module attributes {stable_mosaic.version = 11 : i64} {
  func.func @decoder_block_kernel(%arg0: i32, %arg1: memref<3x2xf32, #tpu.memory_space<smem>>, %arg2: memref<8x32xf32, #tpu.memory_space<vmem>>, %arg3: memref<16x32xf32, #tpu.memory_space<vmem>>, %arg4: memref<1x8x8xf32, #tpu.memory_space<vmem>>, %arg5: memref<1x1x16xf32, #tpu.memory_space<vmem>>, %arg6: memref<32x96xbf16, #tpu.memory_space<vmem>>, %arg7: memref<32x32xbf16, #tpu.memory_space<vmem>>, %arg8: memref<32x32xbf16, #tpu.memory_space<vmem>>, %arg9: memref<32x64xbf16, #tpu.memory_space<vmem>>, %arg10: memref<32x32xbf16, #tpu.memory_space<vmem>>, %arg11: memref<32x64xbf16, #tpu.memory_space<vmem>>, %arg12: memref<64x32xbf16, #tpu.memory_space<vmem>>, %arg13: memref<1x96xf32, #tpu.memory_space<vmem>>, %arg14: memref<1x64xf32, #tpu.memory_space<vmem>>, %arg15: memref<4x32xf32, #tpu.memory_space<vmem>>, %arg16: memref<1x64xf32, #tpu.memory_space<vmem>>, %arg17: memref<8x32xf32, #tpu.memory_space<vmem>>) attributes {dimension_semantics = [#tpu.dimension_semantics<parallel>], iteration_bounds = array<i64: 2>, scalar_prefetch = 0 : i64, scratch_operands = 0 : i64, tpu.core_type = #tpu.core_type<tc>, window_params = [{transform_indices = @transform_0, window_bounds = array<i64: 3, 2>}, {transform_indices = @transform_1, window_bounds = array<i64: 8, 32>}, {transform_indices = @transform_2, window_bounds = array<i64: 16, 32>}, {transform_indices = @transform_3, window_bounds = array<i64: 1, 8, 8>}, {transform_indices = @transform_4, window_bounds = array<i64: 1, 1, 16>}, {pipeline_mode = #tpu.pipeline_mode<synchronous>, transform_indices = @transform_5, window_bounds = array<i64: 32, 96>}, {pipeline_mode = #tpu.pipeline_mode<synchronous>, transform_indices = @transform_6, window_bounds = array<i64: 32, 32>}, {pipeline_mode = #tpu.pipeline_mode<synchronous>, transform_indices = @transform_7, window_bounds = array<i64: 32, 32>}, {pipeline_mode = #tpu.pipeline_mode<synchronous>, transform_indices = @transform_8, window_bounds = array<i64: 32, 64>}, {pipeline_mode = #tpu.pipeline_mode<synchronous>, transform_indices = @transform_9, window_bounds = array<i64: 32, 32>}, {pipeline_mode = #tpu.pipeline_mode<synchronous>, transform_indices = @transform_10, window_bounds = array<i64: 32, 64>}, {pipeline_mode = #tpu.pipeline_mode<synchronous>, transform_indices = @transform_11, window_bounds = array<i64: 64, 32>}, {pipeline_mode = #tpu.pipeline_mode<synchronous>, transform_indices = @transform_12, window_bounds = array<i64: 1, 96>}, {pipeline_mode = #tpu.pipeline_mode<synchronous>, transform_indices = @transform_13, window_bounds = array<i64: 1, 64>}, {pipeline_mode = #tpu.pipeline_mode<synchronous>, transform_indices = @transform_14, window_bounds = array<i64: 4, 32>}, {pipeline_mode = #tpu.pipeline_mode<synchronous>, transform_indices = @transform_15, window_bounds = array<i64: 1, 64>}, {transform_indices = @transform_16, window_bounds = array<i64: 8, 32>}]} {
    %c0 = arith.constant 0 : index
    %c0_0 = arith.constant 0 : index
    %0 = vector.load %arg2[%c0, %c0_0] : memref<8x32xf32, #tpu.memory_space<vmem>>, vector<8x32xf32>
    %c0_1 = arith.constant 0 : index
    %c0_2 = arith.constant 0 : index
    %1 = vector.load %arg3[%c0_1, %c0_2] : memref<16x32xf32, #tpu.memory_space<vmem>>, vector<16x32xf32>
    %c0_3 = arith.constant 0 : index
    %c0_4 = arith.constant 0 : index
    %2 = vector.load %arg15[%c0_3, %c0_4] : memref<4x32xf32, #tpu.memory_space<vmem>>, vector<4x32xf32>
    %3 = vector.extract_strided_slice %2 {offsets = [0, 0], sizes = [1, 32], strides = [1, 1]} : vector<4x32xf32> to vector<1x32xf32>
    %4 = vector.extract_strided_slice %2 {offsets = [1, 0], sizes = [1, 32], strides = [1, 1]} : vector<4x32xf32> to vector<1x32xf32>
    %5 = vector.extract_strided_slice %2 {offsets = [2, 0], sizes = [1, 32], strides = [1, 1]} : vector<4x32xf32> to vector<1x32xf32>
    %6 = vector.extract_strided_slice %2 {offsets = [3, 0], sizes = [1, 32], strides = [1, 1]} : vector<4x32xf32> to vector<1x32xf32>
    %c0_5 = arith.constant 0 : index
    %c0_6 = arith.constant 0 : index
    %c0_7 = arith.constant 0 : index
    %7 = vector.load %arg4[%c0_5, %c0_6, %c0_7] : memref<1x8x8xf32, #tpu.memory_space<vmem>>, vector<1x8x8xf32>
    %cst = arith.constant 0.000000e+00 : f32
    %8 = vector.broadcast %cst : f32 to vector<1x8x8xf32>
    %9 = arith.cmpf oeq, %7, %8 : vector<1x8x8xf32>
    %cst_8 = arith.constant -1.000000e+09 : f32
    %cst_9 = arith.constant 0.000000e+00 : f32
    %10 = vector.broadcast %cst_8 : f32 to vector<1x8x8xf32>
    %11 = vector.broadcast %cst_9 : f32 to vector<1x8x8xf32>
    %12 = arith.select %9, %10, %11 : vector<1x8x8xi1>, vector<1x8x8xf32>
    %c0_10 = arith.constant 0 : index
    %c0_11 = arith.constant 0 : index
    %c0_12 = arith.constant 0 : index
    %13 = vector.load %arg5[%c0_10, %c0_11, %c0_12] : memref<1x1x16xf32, #tpu.memory_space<vmem>>, vector<1x1x16xf32>
    %cst_13 = arith.constant 0.000000e+00 : f32
    %14 = vector.broadcast %cst_13 : f32 to vector<1x1x16xf32>
    %15 = arith.cmpf oeq, %13, %14 : vector<1x1x16xf32>
    %cst_14 = arith.constant -1.000000e+09 : f32
    %cst_15 = arith.constant 0.000000e+00 : f32
    %16 = vector.broadcast %cst_14 : f32 to vector<1x1x16xf32>
    %17 = vector.broadcast %cst_15 : f32 to vector<1x1x16xf32>
    %18 = arith.select %15, %16, %17 : vector<1x1x16xi1>, vector<1x1x16xf32>
    %c0_16 = arith.constant 0 : index
    %c0_17 = arith.constant 0 : index
    %19 = memref.load %arg1[%c0_16, %c0_17] : memref<3x2xf32, #tpu.memory_space<smem>>
    %c0_18 = arith.constant 0 : index
    %c1 = arith.constant 1 : index
    %20 = memref.load %arg1[%c0_18, %c1] : memref<3x2xf32, #tpu.memory_space<smem>>
    %cst_19 = arith.constant dense<0.000000e+00> : vector<8xf32>
    %21 = vector.multi_reduction <add>, %0, %cst_19 [1] : vector<8x32xf32> to vector<8xf32>
    %22 = vector.shape_cast %21 : vector<8xf32> to vector<8x1xf32>
    %cst_20 = arith.constant 3.200000e+01 : f32
    %23 = vector.broadcast %cst_20 : f32 to vector<8x1xf32>
    %24 = arith.divf %22, %23 : vector<8x1xf32>
    %25 = vector.broadcast %24 : vector<8x1xf32> to vector<8x32xf32>
    %26 = arith.subf %0, %25 : vector<8x32xf32>
    %27 = arith.mulf %26, %26 : vector<8x32xf32>
    %cst_21 = arith.constant dense<0.000000e+00> : vector<8xf32>
    %28 = vector.multi_reduction <add>, %27, %cst_21 [1] : vector<8x32xf32> to vector<8xf32>
    %29 = vector.shape_cast %28 : vector<8xf32> to vector<8x1xf32>
    %cst_22 = arith.constant 3.100000e+01 : f32
    %30 = vector.broadcast %cst_22 : f32 to vector<8x1xf32>
    %31 = arith.divf %29, %30 : vector<8x1xf32>
    %32 = vector.broadcast %24 : vector<8x1xf32> to vector<8x32xf32>
    %33 = arith.subf %0, %32 : vector<8x32xf32>
    %34 = vector.broadcast %19 : f32 to vector<8x32xf32>
    %35 = arith.mulf %34, %33 : vector<8x32xf32>
    %36 = math.sqrt %31 : vector<8x1xf32>
    %cst_23 = arith.constant 9.99999997E-7 : f32
    %37 = vector.broadcast %cst_23 : f32 to vector<8x1xf32>
    %38 = arith.addf %36, %37 : vector<8x1xf32>
    %39 = vector.broadcast %38 : vector<8x1xf32> to vector<8x32xf32>
    %40 = arith.divf %35, %39 : vector<8x32xf32>
    %41 = vector.broadcast %20 : f32 to vector<8x32xf32>
    %42 = arith.addf %40, %41 : vector<8x32xf32>
    %43 = arith.truncf %42 : vector<8x32xf32> to vector<8x32xbf16>
    %c0_24 = arith.constant 0 : index
    %c0_25 = arith.constant 0 : index
    %44 = vector.load %arg6[%c0_24, %c0_25] : memref<32x96xbf16, #tpu.memory_space<vmem>>, vector<32x96xbf16>
    %cst_26 = arith.constant dense<0.000000e+00> : vector<8x96xf32>
    %45 = tpu.matmul %43, %44, %cst_26 {dimension_numbers = #tpu.dot_dimension_numbers<[1], [0], [0], [1], [0, 0, 1, 1], [], []>} : vector<8x32xbf16>, vector<32x96xbf16>, vector<8x96xf32> -> vector<8x96xf32>
    %c0_27 = arith.constant 0 : index
    %c0_28 = arith.constant 0 : index
    %46 = vector.load %arg13[%c0_27, %c0_28] : memref<1x96xf32, #tpu.memory_space<vmem>>, vector<1x96xf32>
    %47 = vector.broadcast %46 : vector<1x96xf32> to vector<8x96xf32>
    %48 = arith.addf %45, %47 : vector<8x96xf32>
    %49 = vector.extract_strided_slice %48 {offsets = [0, 0], sizes = [8, 32], strides = [1, 1]} : vector<8x96xf32> to vector<8x32xf32>
    %cst_29 = arith.constant 0.353553385 : f32
    %50 = vector.broadcast %cst_29 : f32 to vector<8x32xf32>
    %51 = arith.mulf %49, %50 : vector<8x32xf32>
    %52 = vector.extract_strided_slice %48 {offsets = [0, 32], sizes = [8, 32], strides = [1, 1]} : vector<8x96xf32> to vector<8x32xf32>
    %53 = vector.extract_strided_slice %48 {offsets = [0, 64], sizes = [8, 32], strides = [1, 1]} : vector<8x96xf32> to vector<8x32xf32>
    %c0_30 = arith.constant 0 : index
    %c0_31 = arith.constant 0 : index
    %54 = vector.load %arg7[%c0_30, %c0_31] : memref<32x32xbf16, #tpu.memory_space<vmem>>, vector<32x32xbf16>
    %55 = vector.shape_cast %51 : vector<8x32xf32> to vector<1x8x4x8xf32>
    %56 = tpu.transpose %55, [0, 2, 1, 3] : vector<1x8x4x8xf32> -> vector<1x4x8x8xf32>
    %57 = vector.shape_cast %56 : vector<1x4x8x8xf32> to vector<4x8x8xf32>
    %58 = arith.truncf %57 : vector<4x8x8xf32> to vector<4x8x8xbf16>
    %59 = vector.shape_cast %52 : vector<8x32xf32> to vector<1x8x4x8xf32>
    %60 = tpu.transpose %59, [0, 2, 1, 3] : vector<1x8x4x8xf32> -> vector<1x4x8x8xf32>
    %61 = vector.shape_cast %60 : vector<1x4x8x8xf32> to vector<4x8x8xf32>
    %62 = arith.truncf %61 : vector<4x8x8xf32> to vector<4x8x8xbf16>
    %63 = vector.shape_cast %53 : vector<8x32xf32> to vector<1x8x4x8xf32>
    %64 = tpu.transpose %63, [0, 2, 1, 3] : vector<1x8x4x8xf32> -> vector<1x4x8x8xf32>
    %65 = vector.shape_cast %64 : vector<1x4x8x8xf32> to vector<4x8x8xf32>
    %66 = arith.truncf %65 : vector<4x8x8xf32> to vector<4x8x8xbf16>
    "tpu.trace_start"() <{level = 10 : i32, message = "gqd,gkd->gqk"}> : () -> ()
    %cst_32 = arith.constant dense<0.000000e+00> : vector<4x8x8xf32>
    %67 = tpu.matmul %58, %62, %cst_32 {dimension_numbers = #tpu.dot_dimension_numbers<[2], [2], [1], [1], [0, 0, 0, 1, 1, 1], [0], [0]>} : vector<4x8x8xbf16>, vector<4x8x8xbf16>, vector<4x8x8xf32> -> vector<4x8x8xf32>
    "tpu.trace_stop"() : () -> ()
    %68 = vector.shape_cast %67 : vector<4x8x8xf32> to vector<1x4x8x8xf32>
    %69 = vector.shape_cast %12 : vector<1x8x8xf32> to vector<1x1x8x8xf32>
    %70 = vector.broadcast %69 : vector<1x1x8x8xf32> to vector<1x4x8x8xf32>
    %71 = arith.addf %68, %70 : vector<1x4x8x8xf32>
    %cst_33 = arith.constant dense<0xFF800000> : vector<1x4x8xf32>
    %72 = vector.multi_reduction <maximumf>, %71, %cst_33 [3] : vector<1x4x8x8xf32> to vector<1x4x8xf32>
    %73 = vector.shape_cast %72 : vector<1x4x8xf32> to vector<1x4x8x1xf32>
    %74 = vector.broadcast %73 : vector<1x4x8x1xf32> to vector<1x4x8x8xf32>
    %75 = arith.subf %71, %74 : vector<1x4x8x8xf32>
    %76 = math.exp %75 : vector<1x4x8x8xf32>
    %cst_34 = arith.constant dense<0.000000e+00> : vector<1x4x8xf32>
    %77 = vector.multi_reduction <add>, %76, %cst_34 [3] : vector<1x4x8x8xf32> to vector<1x4x8xf32>
    %78 = vector.shape_cast %77 : vector<1x4x8xf32> to vector<1x4x8x1xf32>
    %79 = tpu.reciprocal %78 {approx = true} : vector<1x4x8x1xf32> -> vector<1x4x8x1xf32>
    %80 = vector.broadcast %79 : vector<1x4x8x1xf32> to vector<1x4x8x8xf32>
    %81 = arith.mulf %76, %80 : vector<1x4x8x8xf32>
    %82 = vector.shape_cast %81 : vector<1x4x8x8xf32> to vector<4x8x8xf32>
    %83 = arith.truncf %82 : vector<4x8x8xf32> to vector<4x8x8xbf16>
    "tpu.trace_start"() <{level = 10 : i32, message = "gqk,gkd->gqd"}> : () -> ()
    %cst_35 = arith.constant dense<0.000000e+00> : vector<4x8x8xf32>
    %84 = tpu.matmul %83, %66, %cst_35 {dimension_numbers = #tpu.dot_dimension_numbers<[2], [1], [1], [2], [0, 0, 0, 1, 1, 2], [0], [0]>} : vector<4x8x8xbf16>, vector<4x8x8xbf16>, vector<4x8x8xf32> -> vector<4x8x8xf32>
    "tpu.trace_stop"() : () -> ()
    %85 = vector.shape_cast %84 : vector<4x8x8xf32> to vector<1x4x8x8xf32>
    %86 = tpu.transpose %85, [0, 2, 1, 3] : vector<1x4x8x8xf32> -> vector<1x8x4x8xf32>
    %87 = vector.shape_cast %86 : vector<1x8x4x8xf32> to vector<8x32xf32>
    %88 = arith.truncf %87 : vector<8x32xf32> to vector<8x32xbf16>
    %cst_36 = arith.constant dense<0.000000e+00> : vector<8x32xf32>
    %89 = tpu.matmul %88, %54, %cst_36 {dimension_numbers = #tpu.dot_dimension_numbers<[1], [0], [0], [1], [0, 0, 1, 1], [], []>} : vector<8x32xbf16>, vector<32x32xbf16>, vector<8x32xf32> -> vector<8x32xf32>
    %90 = vector.broadcast %3 : vector<1x32xf32> to vector<8x32xf32>
    %91 = arith.addf %89, %90 : vector<8x32xf32>
    %92 = arith.addf %0, %91 : vector<8x32xf32>
    %c1_37 = arith.constant 1 : index
    %c0_38 = arith.constant 0 : index
    %93 = memref.load %arg1[%c1_37, %c0_38] : memref<3x2xf32, #tpu.memory_space<smem>>
    %c1_39 = arith.constant 1 : index
    %c1_40 = arith.constant 1 : index
    %94 = memref.load %arg1[%c1_39, %c1_40] : memref<3x2xf32, #tpu.memory_space<smem>>
    %cst_41 = arith.constant dense<0.000000e+00> : vector<8xf32>
    %95 = vector.multi_reduction <add>, %92, %cst_41 [1] : vector<8x32xf32> to vector<8xf32>
    %96 = vector.shape_cast %95 : vector<8xf32> to vector<8x1xf32>
    %cst_42 = arith.constant 3.200000e+01 : f32
    %97 = vector.broadcast %cst_42 : f32 to vector<8x1xf32>
    %98 = arith.divf %96, %97 : vector<8x1xf32>
    %99 = vector.broadcast %98 : vector<8x1xf32> to vector<8x32xf32>
    %100 = arith.subf %92, %99 : vector<8x32xf32>
    %101 = arith.mulf %100, %100 : vector<8x32xf32>
    %cst_43 = arith.constant dense<0.000000e+00> : vector<8xf32>
    %102 = vector.multi_reduction <add>, %101, %cst_43 [1] : vector<8x32xf32> to vector<8xf32>
    %103 = vector.shape_cast %102 : vector<8xf32> to vector<8x1xf32>
    %cst_44 = arith.constant 3.100000e+01 : f32
    %104 = vector.broadcast %cst_44 : f32 to vector<8x1xf32>
    %105 = arith.divf %103, %104 : vector<8x1xf32>
    %106 = vector.broadcast %98 : vector<8x1xf32> to vector<8x32xf32>
    %107 = arith.subf %92, %106 : vector<8x32xf32>
    %108 = vector.broadcast %93 : f32 to vector<8x32xf32>
    %109 = arith.mulf %108, %107 : vector<8x32xf32>
    %110 = math.sqrt %105 : vector<8x1xf32>
    %cst_45 = arith.constant 9.99999997E-7 : f32
    %111 = vector.broadcast %cst_45 : f32 to vector<8x1xf32>
    %112 = arith.addf %110, %111 : vector<8x1xf32>
    %113 = vector.broadcast %112 : vector<8x1xf32> to vector<8x32xf32>
    %114 = arith.divf %109, %113 : vector<8x32xf32>
    %115 = vector.broadcast %94 : f32 to vector<8x32xf32>
    %116 = arith.addf %114, %115 : vector<8x32xf32>
    %117 = arith.truncf %116 : vector<8x32xf32> to vector<8x32xbf16>
    %c0_46 = arith.constant 0 : index
    %c0_47 = arith.constant 0 : index
    %118 = vector.load %arg8[%c0_46, %c0_47] : memref<32x32xbf16, #tpu.memory_space<vmem>>, vector<32x32xbf16>
    %cst_48 = arith.constant dense<0.000000e+00> : vector<8x32xf32>
    %119 = tpu.matmul %117, %118, %cst_48 {dimension_numbers = #tpu.dot_dimension_numbers<[1], [0], [0], [1], [0, 0, 1, 1], [], []>} : vector<8x32xbf16>, vector<32x32xbf16>, vector<8x32xf32> -> vector<8x32xf32>
    %120 = vector.broadcast %4 : vector<1x32xf32> to vector<8x32xf32>
    %121 = arith.addf %119, %120 : vector<8x32xf32>
    %cst_49 = arith.constant 0.353553385 : f32
    %122 = vector.broadcast %cst_49 : f32 to vector<8x32xf32>
    %123 = arith.mulf %121, %122 : vector<8x32xf32>
    %124 = arith.truncf %1 : vector<16x32xf32> to vector<16x32xbf16>
    %c0_50 = arith.constant 0 : index
    %c0_51 = arith.constant 0 : index
    %125 = vector.load %arg9[%c0_50, %c0_51] : memref<32x64xbf16, #tpu.memory_space<vmem>>, vector<32x64xbf16>
    %cst_52 = arith.constant dense<0.000000e+00> : vector<16x64xf32>
    %126 = tpu.matmul %124, %125, %cst_52 {dimension_numbers = #tpu.dot_dimension_numbers<[1], [0], [0], [1], [0, 0, 1, 1], [], []>} : vector<16x32xbf16>, vector<32x64xbf16>, vector<16x64xf32> -> vector<16x64xf32>
    %c0_53 = arith.constant 0 : index
    %c0_54 = arith.constant 0 : index
    %127 = vector.load %arg14[%c0_53, %c0_54] : memref<1x64xf32, #tpu.memory_space<vmem>>, vector<1x64xf32>
    %128 = vector.broadcast %127 : vector<1x64xf32> to vector<16x64xf32>
    %129 = arith.addf %126, %128 : vector<16x64xf32>
    %130 = vector.extract_strided_slice %129 {offsets = [0, 0], sizes = [16, 32], strides = [1, 1]} : vector<16x64xf32> to vector<16x32xf32>
    %131 = vector.extract_strided_slice %129 {offsets = [0, 32], sizes = [16, 32], strides = [1, 1]} : vector<16x64xf32> to vector<16x32xf32>
    %c0_55 = arith.constant 0 : index
    %c0_56 = arith.constant 0 : index
    %132 = vector.load %arg10[%c0_55, %c0_56] : memref<32x32xbf16, #tpu.memory_space<vmem>>, vector<32x32xbf16>
    %133 = vector.shape_cast %123 : vector<8x32xf32> to vector<1x8x4x8xf32>
    %134 = tpu.transpose %133, [0, 2, 1, 3] : vector<1x8x4x8xf32> -> vector<1x4x8x8xf32>
    %135 = vector.shape_cast %134 : vector<1x4x8x8xf32> to vector<4x8x8xf32>
    %136 = arith.truncf %135 : vector<4x8x8xf32> to vector<4x8x8xbf16>
    %137 = vector.shape_cast %130 : vector<16x32xf32> to vector<1x16x4x8xf32>
    %138 = tpu.transpose %137, [0, 2, 1, 3] : vector<1x16x4x8xf32> -> vector<1x4x16x8xf32>
    %139 = vector.shape_cast %138 : vector<1x4x16x8xf32> to vector<4x16x8xf32>
    %140 = arith.truncf %139 : vector<4x16x8xf32> to vector<4x16x8xbf16>
    %141 = vector.shape_cast %131 : vector<16x32xf32> to vector<1x16x4x8xf32>
    %142 = tpu.transpose %141, [0, 2, 1, 3] : vector<1x16x4x8xf32> -> vector<1x4x16x8xf32>
    %143 = vector.shape_cast %142 : vector<1x4x16x8xf32> to vector<4x16x8xf32>
    %144 = arith.truncf %143 : vector<4x16x8xf32> to vector<4x16x8xbf16>
    "tpu.trace_start"() <{level = 10 : i32, message = "gqd,gkd->gqk"}> : () -> ()
    %cst_57 = arith.constant dense<0.000000e+00> : vector<4x8x16xf32>
    %145 = tpu.matmul %136, %140, %cst_57 {dimension_numbers = #tpu.dot_dimension_numbers<[2], [2], [1], [1], [0, 0, 0, 1, 1, 1], [0], [0]>} : vector<4x8x8xbf16>, vector<4x16x8xbf16>, vector<4x8x16xf32> -> vector<4x8x16xf32>
    "tpu.trace_stop"() : () -> ()
    %146 = vector.shape_cast %145 : vector<4x8x16xf32> to vector<1x4x8x16xf32>
    %147 = vector.shape_cast %18 : vector<1x1x16xf32> to vector<1x1x1x16xf32>
    %148 = vector.broadcast %147 : vector<1x1x1x16xf32> to vector<1x4x8x16xf32>
    %149 = arith.addf %146, %148 : vector<1x4x8x16xf32>
    %cst_58 = arith.constant dense<0xFF800000> : vector<1x4x8xf32>
    %150 = vector.multi_reduction <maximumf>, %149, %cst_58 [3] : vector<1x4x8x16xf32> to vector<1x4x8xf32>
    %151 = vector.shape_cast %150 : vector<1x4x8xf32> to vector<1x4x8x1xf32>
    %152 = vector.broadcast %151 : vector<1x4x8x1xf32> to vector<1x4x8x16xf32>
    %153 = arith.subf %149, %152 : vector<1x4x8x16xf32>
    %154 = math.exp %153 : vector<1x4x8x16xf32>
    %cst_59 = arith.constant dense<0.000000e+00> : vector<1x4x8xf32>
    %155 = vector.multi_reduction <add>, %154, %cst_59 [3] : vector<1x4x8x16xf32> to vector<1x4x8xf32>
    %156 = vector.shape_cast %155 : vector<1x4x8xf32> to vector<1x4x8x1xf32>
    %157 = tpu.reciprocal %156 {approx = true} : vector<1x4x8x1xf32> -> vector<1x4x8x1xf32>
    %158 = vector.broadcast %157 : vector<1x4x8x1xf32> to vector<1x4x8x16xf32>
    %159 = arith.mulf %154, %158 : vector<1x4x8x16xf32>
    %160 = vector.shape_cast %159 : vector<1x4x8x16xf32> to vector<4x8x16xf32>
    %161 = arith.truncf %160 : vector<4x8x16xf32> to vector<4x8x16xbf16>
    "tpu.trace_start"() <{level = 10 : i32, message = "gqk,gkd->gqd"}> : () -> ()
    %cst_60 = arith.constant dense<0.000000e+00> : vector<4x8x8xf32>
    %162 = tpu.matmul %161, %144, %cst_60 {dimension_numbers = #tpu.dot_dimension_numbers<[2], [1], [1], [2], [0, 0, 0, 1, 1, 2], [0], [0]>} : vector<4x8x16xbf16>, vector<4x16x8xbf16>, vector<4x8x8xf32> -> vector<4x8x8xf32>
    "tpu.trace_stop"() : () -> ()
    %163 = vector.shape_cast %162 : vector<4x8x8xf32> to vector<1x4x8x8xf32>
    %164 = tpu.transpose %163, [0, 2, 1, 3] : vector<1x4x8x8xf32> -> vector<1x8x4x8xf32>
    %165 = vector.shape_cast %164 : vector<1x8x4x8xf32> to vector<8x32xf32>
    %166 = arith.truncf %165 : vector<8x32xf32> to vector<8x32xbf16>
    %cst_61 = arith.constant dense<0.000000e+00> : vector<8x32xf32>
    %167 = tpu.matmul %166, %132, %cst_61 {dimension_numbers = #tpu.dot_dimension_numbers<[1], [0], [0], [1], [0, 0, 1, 1], [], []>} : vector<8x32xbf16>, vector<32x32xbf16>, vector<8x32xf32> -> vector<8x32xf32>
    %168 = vector.broadcast %5 : vector<1x32xf32> to vector<8x32xf32>
    %169 = arith.addf %167, %168 : vector<8x32xf32>
    %170 = arith.addf %92, %169 : vector<8x32xf32>
    %c2 = arith.constant 2 : index
    %c0_62 = arith.constant 0 : index
    %171 = memref.load %arg1[%c2, %c0_62] : memref<3x2xf32, #tpu.memory_space<smem>>
    %c2_63 = arith.constant 2 : index
    %c1_64 = arith.constant 1 : index
    %172 = memref.load %arg1[%c2_63, %c1_64] : memref<3x2xf32, #tpu.memory_space<smem>>
    %cst_65 = arith.constant dense<0.000000e+00> : vector<8xf32>
    %173 = vector.multi_reduction <add>, %170, %cst_65 [1] : vector<8x32xf32> to vector<8xf32>
    %174 = vector.shape_cast %173 : vector<8xf32> to vector<8x1xf32>
    %cst_66 = arith.constant 3.200000e+01 : f32
    %175 = vector.broadcast %cst_66 : f32 to vector<8x1xf32>
    %176 = arith.divf %174, %175 : vector<8x1xf32>
    %177 = vector.broadcast %176 : vector<8x1xf32> to vector<8x32xf32>
    %178 = arith.subf %170, %177 : vector<8x32xf32>
    %179 = arith.mulf %178, %178 : vector<8x32xf32>
    %cst_67 = arith.constant dense<0.000000e+00> : vector<8xf32>
    %180 = vector.multi_reduction <add>, %179, %cst_67 [1] : vector<8x32xf32> to vector<8xf32>
    %181 = vector.shape_cast %180 : vector<8xf32> to vector<8x1xf32>
    %cst_68 = arith.constant 3.100000e+01 : f32
    %182 = vector.broadcast %cst_68 : f32 to vector<8x1xf32>
    %183 = arith.divf %181, %182 : vector<8x1xf32>
    %184 = vector.broadcast %176 : vector<8x1xf32> to vector<8x32xf32>
    %185 = arith.subf %170, %184 : vector<8x32xf32>
    %186 = vector.broadcast %171 : f32 to vector<8x32xf32>
    %187 = arith.mulf %186, %185 : vector<8x32xf32>
    %188 = math.sqrt %183 : vector<8x1xf32>
    %cst_69 = arith.constant 9.99999997E-7 : f32
    %189 = vector.broadcast %cst_69 : f32 to vector<8x1xf32>
    %190 = arith.addf %188, %189 : vector<8x1xf32>
    %191 = vector.broadcast %190 : vector<8x1xf32> to vector<8x32xf32>
    %192 = arith.divf %187, %191 : vector<8x32xf32>
    %193 = vector.broadcast %172 : f32 to vector<8x32xf32>
    %194 = arith.addf %192, %193 : vector<8x32xf32>
    %195 = arith.truncf %194 : vector<8x32xf32> to vector<8x32xbf16>
    %c0_70 = arith.constant 0 : index
    %c0_71 = arith.constant 0 : index
    %196 = vector.load %arg11[%c0_70, %c0_71] : memref<32x64xbf16, #tpu.memory_space<vmem>>, vector<32x64xbf16>
    %cst_72 = arith.constant dense<0.000000e+00> : vector<8x64xf32>
    %197 = tpu.matmul %195, %196, %cst_72 {dimension_numbers = #tpu.dot_dimension_numbers<[1], [0], [0], [1], [0, 0, 1, 1], [], []>} : vector<8x32xbf16>, vector<32x64xbf16>, vector<8x64xf32> -> vector<8x64xf32>
    %c0_73 = arith.constant 0 : index
    %c0_74 = arith.constant 0 : index
    %198 = vector.load %arg16[%c0_73, %c0_74] : memref<1x64xf32, #tpu.memory_space<vmem>>, vector<1x64xf32>
    %199 = vector.broadcast %198 : vector<1x64xf32> to vector<8x64xf32>
    %200 = arith.addf %197, %199 : vector<8x64xf32>
    %cst_75 = arith.constant 0.000000e+00 : f32
    %201 = vector.broadcast %cst_75 : f32 to vector<8x64xf32>
    %202 = arith.maximumf %200, %201 : vector<8x64xf32>
    %203 = arith.truncf %202 : vector<8x64xf32> to vector<8x64xbf16>
    %c0_76 = arith.constant 0 : index
    %c0_77 = arith.constant 0 : index
    %204 = vector.load %arg12[%c0_76, %c0_77] : memref<64x32xbf16, #tpu.memory_space<vmem>>, vector<64x32xbf16>
    %cst_78 = arith.constant dense<0.000000e+00> : vector<8x32xf32>
    %205 = tpu.matmul %203, %204, %cst_78 {dimension_numbers = #tpu.dot_dimension_numbers<[1], [0], [0], [1], [0, 0, 1, 1], [], []>} : vector<8x64xbf16>, vector<64x32xbf16>, vector<8x32xf32> -> vector<8x32xf32>
    %206 = vector.broadcast %6 : vector<1x32xf32> to vector<8x32xf32>
    %207 = arith.addf %205, %206 : vector<8x32xf32>
    %208 = arith.addf %170, %207 : vector<8x32xf32>
    %c0_79 = arith.constant 0 : index
    %c0_80 = arith.constant 0 : index
    %209 = vector.load %arg17[%c0_79, %c0_80] : memref<8x32xf32, #tpu.memory_space<vmem>>, vector<8x32xf32>
    tpu.vector_store %arg17[%c0_79, %c0_80], %208 {strides = array<i32>} : memref<8x32xf32, #tpu.memory_space<vmem>>, vector<8x32xf32>,
    return
  }
  func.func @transform_0(%arg0: i32) -> (i32, i32) {
    %c0_i32 = arith.constant 0 : i32
    %c0_i32_0 = arith.constant 0 : i32
    %c0_i32_1 = arith.constant 0 : i32
    return %c0_i32, %c0_i32_0 : i32, i32
  }
  func.func @transform_1(%arg0: i32) -> (i32, i32) {
    %c0_i32 = arith.constant 0 : i32
    %c0_i32_0 = arith.constant 0 : i32
    return %arg0, %c0_i32 : i32, i32
  }
  func.func @transform_2(%arg0: i32) -> (i32, i32) {
    %c0_i32 = arith.constant 0 : i32
    %c0_i32_0 = arith.constant 0 : i32
    return %arg0, %c0_i32 : i32, i32
  }
  func.func @transform_3(%arg0: i32) -> (i32, i32, i32) {
    %c0_i32 = arith.constant 0 : i32
    %c0_i32_0 = arith.constant 0 : i32
    %c0_i32_1 = arith.constant 0 : i32
    return %arg0, %c0_i32, %c0_i32_0 : i32, i32, i32
  }
  func.func @transform_4(%arg0: i32) -> (i32, i32, i32) {
    %c0_i32 = arith.constant 0 : i32
    %c0_i32_0 = arith.constant 0 : i32
    %c0_i32_1 = arith.constant 0 : i32
    return %arg0, %c0_i32, %c0_i32_0 : i32, i32, i32
  }
  func.func @transform_5(%arg0: i32) -> (i32, i32) {
    %c0_i32 = arith.constant 0 : i32
    %c0_i32_0 = arith.constant 0 : i32
    %c0_i32_1 = arith.constant 0 : i32
    return %c0_i32, %c0_i32_0 : i32, i32
  }
  func.func @transform_6(%arg0: i32) -> (i32, i32) {
    %c0_i32 = arith.constant 0 : i32
    %c0_i32_0 = arith.constant 0 : i32
    %c0_i32_1 = arith.constant 0 : i32
    return %c0_i32, %c0_i32_0 : i32, i32
  }
  func.func @transform_7(%arg0: i32) -> (i32, i32) {
    %c0_i32 = arith.constant 0 : i32
    %c0_i32_0 = arith.constant 0 : i32
    %c0_i32_1 = arith.constant 0 : i32
    return %c0_i32, %c0_i32_0 : i32, i32
  }
  func.func @transform_8(%arg0: i32) -> (i32, i32) {
    %c0_i32 = arith.constant 0 : i32
    %c0_i32_0 = arith.constant 0 : i32
    %c0_i32_1 = arith.constant 0 : i32
    return %c0_i32, %c0_i32_0 : i32, i32
  }
  func.func @transform_9(%arg0: i32) -> (i32, i32) {
    %c0_i32 = arith.constant 0 : i32
    %c0_i32_0 = arith.constant 0 : i32
    %c0_i32_1 = arith.constant 0 : i32
    return %c0_i32, %c0_i32_0 : i32, i32
  }
  func.func @transform_10(%arg0: i32) -> (i32, i32) {
    %c0_i32 = arith.constant 0 : i32
    %c0_i32_0 = arith.constant 0 : i32
    %c0_i32_1 = arith.constant 0 : i32
    return %c0_i32, %c0_i32_0 : i32, i32
  }
  func.func @transform_11(%arg0: i32) -> (i32, i32) {
    %c0_i32 = arith.constant 0 : i32
    %c0_i32_0 = arith.constant 0 : i32
    %c0_i32_1 = arith.constant 0 : i32
    return %c0_i32, %c0_i32_0 : i32, i32
  }
  func.func @transform_12(%arg0: i32) -> (i32, i32) {
    %c0_i32 = arith.constant 0 : i32
    %c0_i32_0 = arith.constant 0 : i32
    %c0_i32_1 = arith.constant 0 : i32
    return %c0_i32, %c0_i32_0 : i32, i32
  }
  func.func @transform_13(%arg0: i32) -> (i32, i32) {
    %c0_i32 = arith.constant 0 : i32
    %c0_i32_0 = arith.constant 0 : i32
    %c0_i32_1 = arith.constant 0 : i32
    return %c0_i32, %c0_i32_0 : i32, i32
  }
  func.func @transform_14(%arg0: i32) -> (i32, i32) {
    %c0_i32 = arith.constant 0 : i32
    %c0_i32_0 = arith.constant 0 : i32
    %c0_i32_1 = arith.constant 0 : i32
    return %c0_i32, %c0_i32_0 : i32, i32
  }
  func.func @transform_15(%arg0: i32) -> (i32, i32) {
    %c0_i32 = arith.constant 0 : i32
    %c0_i32_0 = arith.constant 0 : i32
    %c0_i32_1 = arith.constant 0 : i32
    return %c0_i32, %c0_i32_0 : i32, i32
  }
  func.func @transform_16(%arg0: i32) -> (i32, i32) {
    %c0_i32 = arith.constant 0 : i32
    %c0_i32_0 = arith.constant 0 : i32
    return %arg0, %c0_i32 : i32, i32
  }
}

</mosaic_0001>

<llo_original>
// kernel: tpu_custom_call.1
$region0: #{tpu_custom_call.1}
  #allocation0 [shape = 'u32[]', space=smem, size = 0x4, offset = 0x4, fixed_abs, tag = 'smem constant byte address 0x4 - core index']
  #allocation1 [shape = 'u32[144,128]{1,0:T(1,128)}', space=vmem, size = 0x12000, scoped, tag = 'internal scratch']
  %s0 = inlined_call_operand.vmem [shape: f32[3,2], index: 0, kind: input, shape index: {}]
  %s1 = inlined_call_operand.vmem [shape: f32[16,32], index: 1, kind: input, shape index: {}]
  %s2 = inlined_call_operand.vmem [shape: f32[32,32], index: 2, kind: input, shape index: {}]
  %s3 = inlined_call_operand.vmem [shape: f32[2,8,8], index: 3, kind: input, shape index: {}]
  %s4 = inlined_call_operand.hbm [shape: f32[2,1,16], index: 4, kind: input, shape index: {}]
  %s5 = inlined_call_operand.hbm [shape: bf16[32,96], index: 5, kind: input, shape index: {}]
  %s6 = inlined_call_operand.hbm [shape: bf16[32,32], index: 6, kind: input, shape index: {}]
  %s7 = inlined_call_operand.hbm [shape: bf16[32,32], index: 7, kind: input, shape index: {}]
  %s8 = inlined_call_operand.hbm [shape: bf16[32,64], index: 8, kind: input, shape index: {}]
  %s9 = inlined_call_operand.hbm [shape: bf16[32,32], index: 9, kind: input, shape index: {}]
  %s10 = inlined_call_operand.hbm [shape: bf16[32,64], index: 10, kind: input, shape index: {}]
  %s11 = inlined_call_operand.vmem [shape: bf16[64,32], index: 11, kind: input, shape index: {}]
  %s12 = inlined_call_operand.vmem [shape: f32[1,96], index: 12, kind: input, shape index: {}]
  %s13 = inlined_call_operand.vmem [shape: f32[1,64], index: 13, kind: input, shape index: {}]
  %s14 = inlined_call_operand.vmem [shape: f32[4,32], index: 14, kind: input, shape index: {}]
  %s15 = inlined_call_operand.vmem [shape: f32[1,64], index: 15, kind: input, shape index: {}]
  %s16 = inlined_call_operand.hbm [shape: f32[16,32], index: 16, kind: output, shape index: {}]
  %s17 = sld [smem:[#allocation0]]
  $region129: #{tpu_custom_call.1} parent=0
    _
  %s19 = ssub.s32 1, %s17
  %s20 = scalar_select 0, %s19, %s17
  $region1: #{tpu_custom_call.1} parent=0
    #allocation2 [shape = 'u8[2048]{0}', space=smem, size = 0x800, scoped, tag = 'input window, operand 0, single buffered']
    #allocation3 [shape = 's32[2]{0}', space=sflag, size = 0x8, scoped, tag = 'scoped memory for tpu_custom_call.1']
    #allocation4 [shape = 's32[2]{0}', space=sflag, size = 0x8, scoped, tag = 'scoped memory for tpu_custom_call.1']
    #allocation5 [shape = 's32[2]{0}', space=sflag, size = 0x8, scoped, tag = 'scoped memory for tpu_custom_call.1']
    #allocation6 [shape = 'u8[1024]{0}', space=vmem, size = 0x400, scoped, tag = 'input window, operand 4']
    #allocation7 [shape = 'u8[8192]{0}', space=vmem, size = 0x2000, scoped, tag = 'input window, operand 5, single buffered']
    #allocation8 [shape = 's32[1]{0}', space=sflag, size = 0x4, scoped, tag = 'scoped memory for tpu_custom_call.1']
    #allocation9 [shape = 'u8[8192]{0}', space=vmem, size = 0x2000, scoped, tag = 'input window, operand 6, single buffered']
    #allocation10 [shape = 'u8[8192]{0}', space=vmem, size = 0x2000, scoped, tag = 'input window, operand 7, single buffered']
    #allocation11 [shape = 's32[1]{0}', space=sflag, size = 0x4, scoped, tag = 'scoped memory for tpu_custom_call.1']
    #allocation12 [shape = 'u8[8192]{0}', space=vmem, size = 0x2000, scoped, tag = 'input window, operand 8, single buffered']
    #allocation13 [shape = 'u8[8192]{0}', space=vmem, size = 0x2000, scoped, tag = 'input window, operand 9, single buffered']
    #allocation14 [shape = 's32[1]{0}', space=sflag, size = 0x4, scoped, tag = 'scoped memory for tpu_custom_call.1']
    #allocation15 [shape = 'u8[8192]{0}', space=vmem, size = 0x2000, scoped, tag = 'input window, operand 10, single buffered']
    #allocation16 [shape = 'u8[8192]{0}', space=vmem, size = 0x2000, scoped, tag = 'output window, operand 0']
    %21 = vsyncpa [#allocation5], 0
    %22 = vsyncpa [#allocation3], 0
    %s23 = scalar_lea.sflag [#allocation3], 1
    %24 = vsyncpa %s23, 0
    %25 = vsyncpa [#allocation8], 0
    %26 = vsyncpa [#allocation11], 0
    %27 = vsyncpa [#allocation14], 0
    %28 = vsyncpa [#allocation4], 0
    %s29 = scalar_lea.sflag [#allocation4], 1
    %30 = vsyncpa %s29, 0
    loop: start=0, step=1, limit=4
    $region2: #{tpu_custom_call.1} parent=1 // loop_pre_header
      _
    $region3: #{tpu_custom_call.1} parent=1 // loop_header
      %s32 = sphi 0, %s36
      %p33 = scmp.ge.s32.totalorder %s32, 4
      %s40 = sphi 0, %s40
      %s42 = sphi 0, %s40
      %s43 = sphi 0, %s42
      %s57 = sphi 0, %s43
      %s63 = sphi 0, %s65
      %s66 = sphi 0, %s63
      %s67 = sphi 0, %s66
      %s83 = sphi 0, %s67
      %s89 = sphi 0, %s91
      %s92 = sphi 0, %s89
      %s93 = sphi 0, %s92
      %s109 = sphi 0, %s93
      %s115 = sphi 0, %s117
      %s118 = sphi 0, %s115
      %s119 = sphi 0, %s118
      %s135 = sphi 0, %s119
      %s141 = sphi 0, %s143
      %s144 = sphi 0, %s141
      %s145 = sphi 0, %s144
      %s161 = sphi 0, %s145
      %s165 = sphi 0, %s165
      %s167 = sphi 0, %s165
      %s168 = sphi 0, %s167
      %s182 = sphi 0, %s168
      %s186 = sphi 0, %s186
      %s188 = sphi 0, %s186
      %s189 = sphi 0, %s188
      %s203 = sphi 0, %s189
      %s207 = sphi 0, %s207
      %s209 = sphi 0, %s207
      %s210 = sphi 0, %s209
      %s224 = sphi 0, %s210
      %s228 = sphi 0, %s228
      %s230 = sphi 0, %s228
      %s231 = sphi 0, %s230
      %s245 = sphi 0, %s231
      %s249 = sphi 0, %s249
      %s251 = sphi 0, %s249
      %s252 = sphi 0, %s251
      %s266 = sphi 0, %s252
      %s270 = sphi 0, %s270
      %s272 = sphi 0, %s270
      %s273 = sphi 0, %s272
      %s287 = sphi 0, %s273
      %s291 = sphi 0, %s291
      %s293 = sphi 0, %s291
      %s294 = sphi 0, %s293
      %s308 = sphi 0, %s294
      %s312 = sphi 0, %s312
      %s314 = sphi 0, %s312
      %s315 = sphi 0, %s314
      %s329 = sphi 0, %s315
      %s333 = sphi 0, %s333
      %s335 = sphi 0, %s333
      %s336 = sphi 0, %s335
      %s350 = sphi 0, %s336
      %s354 = sphi 0, %s354
      %s356 = sphi 0, %s354
      %s357 = sphi 0, %s356
      %s371 = sphi 0, %s357
      %s375 = sphi 0, %s375
      %s377 = sphi 0, %s375
      %s378 = sphi 0, %s377
      %s392 = sphi 0, %s378
      %s398 = sphi 0, %s400
      %s401 = sphi 0, %s398
      %s402 = sphi 0, %s401
      %s418 = sphi 0, %s402
    $region4: #{tpu_custom_call.1} parent=1 // loop_header_branch
      %35 = sbr.rel (%p33) target = $region8
    $region5: #{tpu_custom_call.1} parent=1 // loop_body
      %s37 = ssub.s32 %s32, 1
      %s38 = ssub.s32 %s32, 2
      %s39 = sadd.s32 %s32, 1
      %s41 = sadd.s32 %s40, 1
      %p44 = scmp.eq.s32.totalorder %s32, 1
      %p45 = scmp.ne.s32.totalorder %s40, %s42
      %p46 = scmp.eq.s32.totalorder %s32, 0
      %p47 = por %p45, %p46
      %p48 = scmp.ne.s32.totalorder %s40, %s42
      %p49 = scmp.eq.s32.totalorder %s37, 1
      %p50 = por %p48, %p49
      %p51 = scmp.ne.s32.totalorder %s42, %s43
      %p52 = scmp.eq.s32.totalorder %s37, 0
      %p53 = por %p51, %p52
      %p54 = scmp.ne.s32.totalorder %s42, %s43
      %p55 = scmp.eq.s32.totalorder %s38, 1
      %p56 = por %p54, %p55
      %p58 = scmp.ne.s32.totalorder %s43, %s57
      %p59 = scmp.eq.s32.totalorder %s38, 0
      %p60 = por %p58, %p59
      %s61 = ssub.s32 %s32, %s39
      %p62 = scmp.eq.s32.totalorder %s61, 0
      %s64 = sadd.s32 %s63, 1
      %s65 = scalar_select %p62, %s63, %s64
      %p68 = pneg %p62
      %p69 = scmp.eq.s32.totalorder %s32, 1
      %p70 = por %p68, %p69
      %p71 = scmp.ne.s32.totalorder %s63, %s66
      %p72 = scmp.eq.s32.totalorder %s32, 0
      %p73 = por %p71, %p72
      %p74 = scmp.ne.s32.totalorder %s63, %s66
      %p75 = scmp.eq.s32.totalorder %s37, 1
      %p76 = por %p74, %p75
      %p77 = scmp.ne.s32.totalorder %s66, %s67
      %p78 = scmp.eq.s32.totalorder %s37, 0
      %p79 = por %p77, %p78
      %p80 = scmp.ne.s32.totalorder %s66, %s67
      %p81 = scmp.eq.s32.totalorder %s38, 1
      %p82 = por %p80, %p81
      %p84 = scmp.ne.s32.totalorder %s67, %s83
      %p85 = scmp.eq.s32.totalorder %s38, 0
      %p86 = por %p84, %p85
      %s87 = ssub.s32 %s32, %s39
      %p88 = scmp.eq.s32.totalorder %s87, 0
      %s90 = sadd.s32 %s89, 1
      %s91 = scalar_select %p88, %s89, %s90
      %p94 = pneg %p88
      %p95 = scmp.eq.s32.totalorder %s32, 1
      %p96 = por %p94, %p95
      %p97 = scmp.ne.s32.totalorder %s89, %s92
      %p98 = scmp.eq.s32.totalorder %s32, 0
      %p99 = por %p97, %p98
      %p100 = scmp.ne.s32.totalorder %s89, %s92
      %p101 = scmp.eq.s32.totalorder %s37, 1
      %p102 = por %p100, %p101
      %p103 = scmp.ne.s32.totalorder %s92, %s93
      %p104 = scmp.eq.s32.totalorder %s37, 0
      %p105 = por %p103, %p104
      %p106 = scmp.ne.s32.totalorder %s92, %s93
      %p107 = scmp.eq.s32.totalorder %s38, 1
      %p108 = por %p106, %p107
      %p110 = scmp.ne.s32.totalorder %s93, %s109
      %p111 = scmp.eq.s32.totalorder %s38, 0
      %p112 = por %p110, %p111
      %s113 = ssub.s32 %s32, %s39
      %p114 = scmp.eq.s32.totalorder %s113, 0
      %s116 = sadd.s32 %s115, 1
      %s117 = scalar_select %p114, %s115, %s116
      %p120 = pneg %p114
      %p121 = scmp.eq.s32.totalorder %s32, 1
      %p122 = por %p120, %p121
      %p123 = scmp.ne.s32.totalorder %s115, %s118
      %p124 = scmp.eq.s32.totalorder %s32, 0
      %p125 = por %p123, %p124
      %p126 = scmp.ne.s32.totalorder %s115, %s118
      %p127 = scmp.eq.s32.totalorder %s37, 1
      %p128 = por %p126, %p127
      %p129 = scmp.ne.s32.totalorder %s118, %s119
      %p130 = scmp.eq.s32.totalorder %s37, 0
      %p131 = por %p129, %p130
      %p132 = scmp.ne.s32.totalorder %s118, %s119
      %p133 = scmp.eq.s32.totalorder %s38, 1
      %p134 = por %p132, %p133
      %p136 = scmp.ne.s32.totalorder %s119, %s135
      %p137 = scmp.eq.s32.totalorder %s38, 0
      %p138 = por %p136, %p137
      %s139 = ssub.s32 %s32, %s39
      %p140 = scmp.eq.s32.totalorder %s139, 0
      %s142 = sadd.s32 %s141, 1
      %s143 = scalar_select %p140, %s141, %s142
      %p146 = pneg %p140
      %p147 = scmp.eq.s32.totalorder %s32, 1
      %p148 = por %p146, %p147
      %p149 = scmp.ne.s32.totalorder %s141, %s144
      %p150 = scmp.eq.s32.totalorder %s32, 0
      %p151 = por %p149, %p150
      %p152 = scmp.ne.s32.totalorder %s141, %s144
      %p153 = scmp.eq.s32.totalorder %s37, 1
      %p154 = por %p152, %p153
      %p155 = scmp.ne.s32.totalorder %s144, %s145
      %p156 = scmp.eq.s32.totalorder %s37, 0
      %p157 = por %p155, %p156
      %p158 = scmp.ne.s32.totalorder %s144, %s145
      %p159 = scmp.eq.s32.totalorder %s38, 1
      %p160 = por %p158, %p159
      %p162 = scmp.ne.s32.totalorder %s145, %s161
      %p163 = scmp.eq.s32.totalorder %s38, 0
      %p164 = por %p162, %p163
      %s166 = sadd.s32 %s165, 1
      %p169 = scmp.eq.s32.totalorder %s32, 1
      %p170 = scmp.ne.s32.totalorder %s165, %s167
      %p171 = scmp.eq.s32.totalorder %s32, 0
      %p172 = por %p170, %p171
      %p173 = scmp.ne.s32.totalorder %s165, %s167
      %p174 = scmp.eq.s32.totalorder %s37, 1
      %p175 = por %p173, %p174
      %p176 = scmp.ne.s32.totalorder %s167, %s168
      %p177 = scmp.eq.s32.totalorder %s37, 0
      %p178 = por %p176, %p177
      %p179 = scmp.ne.s32.totalorder %s167, %s168
      %p180 = scmp.eq.s32.totalorder %s38, 1
      %p181 = por %p179, %p180
      %p183 = scmp.ne.s32.totalorder %s168, %s182
      %p184 = scmp.eq.s32.totalorder %s38, 0
      %p185 = por %p183, %p184
      %s187 = sadd.s32 %s186, 1
      %p190 = scmp.eq.s32.totalorder %s32, 1
      %p191 = scmp.ne.s32.totalorder %s186, %s188
      %p192 = scmp.eq.s32.totalorder %s32, 0
      %p193 = por %p191, %p192
      %p194 = scmp.ne.s32.totalorder %s186, %s188
      %p195 = scmp.eq.s32.totalorder %s37, 1
      %p196 = por %p194, %p195
      %p197 = scmp.ne.s32.totalorder %s188, %s189
      %p198 = scmp.eq.s32.totalorder %s37, 0
      %p199 = por %p197, %p198
      %p200 = scmp.ne.s32.totalorder %s188, %s189
      %p201 = scmp.eq.s32.totalorder %s38, 1
      %p202 = por %p200, %p201
      %p204 = scmp.ne.s32.totalorder %s189, %s203
      %p205 = scmp.eq.s32.totalorder %s38, 0
      %p206 = por %p204, %p205
      %s208 = sadd.s32 %s207, 1
      %p211 = scmp.eq.s32.totalorder %s32, 1
      %p212 = scmp.ne.s32.totalorder %s207, %s209
      %p213 = scmp.eq.s32.totalorder %s32, 0
      %p214 = por %p212, %p213
      %p215 = scmp.ne.s32.totalorder %s207, %s209
      %p216 = scmp.eq.s32.totalorder %s37, 1
      %p217 = por %p215, %p216
      %p218 = scmp.ne.s32.totalorder %s209, %s210
      %p219 = scmp.eq.s32.totalorder %s37, 0
      %p220 = por %p218, %p219
      %p221 = scmp.ne.s32.totalorder %s209, %s210
      %p222 = scmp.eq.s32.totalorder %s38, 1
      %p223 = por %p221, %p222
      %p225 = scmp.ne.s32.totalorder %s210, %s224
      %p226 = scmp.eq.s32.totalorder %s38, 0
      %p227 = por %p225, %p226
      %s229 = sadd.s32 %s228, 1
      %p232 = scmp.eq.s32.totalorder %s32, 1
      %p233 = scmp.ne.s32.totalorder %s228, %s230
      %p234 = scmp.eq.s32.totalorder %s32, 0
      %p235 = por %p233, %p234
      %p236 = scmp.ne.s32.totalorder %s228, %s230
      %p237 = scmp.eq.s32.totalorder %s37, 1
      %p238 = por %p236, %p237
      %p239 = scmp.ne.s32.totalorder %s230, %s231
      %p240 = scmp.eq.s32.totalorder %s37, 0
      %p241 = por %p239, %p240
      %p242 = scmp.ne.s32.totalorder %s230, %s231
      %p243 = scmp.eq.s32.totalorder %s38, 1
      %p244 = por %p242, %p243
      %p246 = scmp.ne.s32.totalorder %s231, %s245
      %p247 = scmp.eq.s32.totalorder %s38, 0
      %p248 = por %p246, %p247
      %s250 = sadd.s32 %s249, 1
      %p253 = scmp.eq.s32.totalorder %s32, 1
      %p254 = scmp.ne.s32.totalorder %s249, %s251
      %p255 = scmp.eq.s32.totalorder %s32, 0
      %p256 = por %p254, %p255
      %p257 = scmp.ne.s32.totalorder %s249, %s251
      %p258 = scmp.eq.s32.totalorder %s37, 1
      %p259 = por %p257, %p258
      %p260 = scmp.ne.s32.totalorder %s251, %s252
      %p261 = scmp.eq.s32.totalorder %s37, 0
      %p262 = por %p260, %p261
      %p263 = scmp.ne.s32.totalorder %s251, %s252
      %p264 = scmp.eq.s32.totalorder %s38, 1
      %p265 = por %p263, %p264
      %p267 = scmp.ne.s32.totalorder %s252, %s266
      %p268 = scmp.eq.s32.totalorder %s38, 0
      %p269 = por %p267, %p268
      %s271 = sadd.s32 %s270, 1
      %p274 = scmp.eq.s32.totalorder %s32, 1
      %p275 = scmp.ne.s32.totalorder %s270, %s272
      %p276 = scmp.eq.s32.totalorder %s32, 0
      %p277 = por %p275, %p276
      %p278 = scmp.ne.s32.totalorder %s270, %s272
      %p279 = scmp.eq.s32.totalorder %s37, 1
      %p280 = por %p278, %p279
      %p281 = scmp.ne.s32.totalorder %s272, %s273
      %p282 = scmp.eq.s32.totalorder %s37, 0
      %p283 = por %p281, %p282
      %p284 = scmp.ne.s32.totalorder %s272, %s273
      %p285 = scmp.eq.s32.totalorder %s38, 1
      %p286 = por %p284, %p285
      %p288 = scmp.ne.s32.totalorder %s273, %s287
      %p289 = scmp.eq.s32.totalorder %s38, 0
      %p290 = por %p288, %p289
      %s292 = sadd.s32 %s291, 1
      %p295 = scmp.eq.s32.totalorder %s32, 1
      %p296 = scmp.ne.s32.totalorder %s291, %s293
      %p297 = scmp.eq.s32.totalorder %s32, 0
      %p298 = por %p296, %p297
      %p299 = scmp.ne.s32.totalorder %s291, %s293
      %p300 = scmp.eq.s32.totalorder %s37, 1
      %p301 = por %p299, %p300
      %p302 = scmp.ne.s32.totalorder %s293, %s294
      %p303 = scmp.eq.s32.totalorder %s37, 0
      %p304 = por %p302, %p303
      %p305 = scmp.ne.s32.totalorder %s293, %s294
      %p306 = scmp.eq.s32.totalorder %s38, 1
      %p307 = por %p305, %p306
      %p309 = scmp.ne.s32.totalorder %s294, %s308
      %p310 = scmp.eq.s32.totalorder %s38, 0
      %p311 = por %p309, %p310
      %s313 = sadd.s32 %s312, 1
      %p316 = scmp.eq.s32.totalorder %s32, 1
      %p317 = scmp.ne.s32.totalorder %s312, %s314
      %p318 = scmp.eq.s32.totalorder %s32, 0
      %p319 = por %p317, %p318
      %p320 = scmp.ne.s32.totalorder %s312, %s314
      %p321 = scmp.eq.s32.totalorder %s37, 1
      %p322 = por %p320, %p321
      %p323 = scmp.ne.s32.totalorder %s314, %s315
      %p324 = scmp.eq.s32.totalorder %s37, 0
      %p325 = por %p323, %p324
      %p326 = scmp.ne.s32.totalorder %s314, %s315
      %p327 = scmp.eq.s32.totalorder %s38, 1
      %p328 = por %p326, %p327
      %p330 = scmp.ne.s32.totalorder %s315, %s329
      %p331 = scmp.eq.s32.totalorder %s38, 0
      %p332 = por %p330, %p331
      %s334 = sadd.s32 %s333, 1
      %p337 = scmp.eq.s32.totalorder %s32, 1
      %p338 = scmp.ne.s32.totalorder %s333, %s335
      %p339 = scmp.eq.s32.totalorder %s32, 0
      %p340 = por %p338, %p339
      %p341 = scmp.ne.s32.totalorder %s333, %s335
      %p342 = scmp.eq.s32.totalorder %s37, 1
      %p343 = por %p341, %p342
      %p344 = scmp.ne.s32.totalorder %s335, %s336
      %p345 = scmp.eq.s32.totalorder %s37, 0
      %p346 = por %p344, %p345
      %p347 = scmp.ne.s32.totalorder %s335, %s336
      %p348 = scmp.eq.s32.totalorder %s38, 1
      %p349 = por %p347, %p348
      %p351 = scmp.ne.s32.totalorder %s336, %s350
      %p352 = scmp.eq.s32.totalorder %s38, 0
      %p353 = por %p351, %p352
      %s355 = sadd.s32 %s354, 1
      %p358 = scmp.eq.s32.totalorder %s32, 1
      %p359 = scmp.ne.s32.totalorder %s354, %s356
      %p360 = scmp.eq.s32.totalorder %s32, 0
      %p361 = por %p359, %p360
      %p362 = scmp.ne.s32.totalorder %s354, %s356
      %p363 = scmp.eq.s32.totalorder %s37, 1
      %p364 = por %p362, %p363
      %p365 = scmp.ne.s32.totalorder %s356, %s357
      %p366 = scmp.eq.s32.totalorder %s37, 0
      %p367 = por %p365, %p366
      %p368 = scmp.ne.s32.totalorder %s356, %s357
      %p369 = scmp.eq.s32.totalorder %s38, 1
      %p370 = por %p368, %p369
      %p372 = scmp.ne.s32.totalorder %s357, %s371
      %p373 = scmp.eq.s32.totalorder %s38, 0
      %p374 = por %p372, %p373
      %s376 = sadd.s32 %s375, 1
      %p379 = scmp.eq.s32.totalorder %s32, 1
      %p380 = scmp.ne.s32.totalorder %s375, %s377
      %p381 = scmp.eq.s32.totalorder %s32, 0
      %p382 = por %p380, %p381
      %p383 = scmp.ne.s32.totalorder %s375, %s377
      %p384 = scmp.eq.s32.totalorder %s37, 1
      %p385 = por %p383, %p384
      %p386 = scmp.ne.s32.totalorder %s377, %s378
      %p387 = scmp.eq.s32.totalorder %s37, 0
      %p388 = por %p386, %p387
      %p389 = scmp.ne.s32.totalorder %s377, %s378
      %p390 = scmp.eq.s32.totalorder %s38, 1
      %p391 = por %p389, %p390
      %p393 = scmp.ne.s32.totalorder %s378, %s392
      %p394 = scmp.eq.s32.totalorder %s38, 0
      %p395 = por %p393, %p394
      %s396 = ssub.s32 %s32, %s39
      %p397 = scmp.eq.s32.totalorder %s396, 0
      %s399 = sadd.s32 %s398, 1
      %s400 = scalar_select %p397, %s398, %s399
      %p403 = pneg %p397
      %p404 = scmp.eq.s32.totalorder %s32, 1
      %p405 = por %p403, %p404
      %p406 = scmp.ne.s32.totalorder %s398, %s401
      %p407 = scmp.eq.s32.totalorder %s32, 0
      %p408 = por %p406, %p407
      %p409 = scmp.ne.s32.totalorder %s398, %s401
      %p410 = scmp.eq.s32.totalorder %s37, 1
      %p411 = por %p409, %p410
      %p412 = scmp.ne.s32.totalorder %s401, %s402
      %p413 = scmp.eq.s32.totalorder %s37, 0
      %p414 = por %p412, %p413
      %p415 = scmp.ne.s32.totalorder %s401, %s402
      %p416 = scmp.eq.s32.totalorder %s38, 1
      %p417 = por %p415, %p416
      %p419 = scmp.ne.s32.totalorder %s402, %s418
      %p420 = scmp.eq.s32.totalorder %s38, 0
      %p421 = por %p419, %p420
      %p422 = scmp.le.s32.totalorder 1, %s32
      %p423 = scmp.lt.s32.totalorder %s32, 3
      %p424 = pnand %p422, %p423
      %p425 = pneg %p424
      // Predicated region
      $region9: #{tpu_custom_call.1} parent=5 // pred_check
        _
      $region10: #{tpu_custom_call.1} parent=5 // pred_check_branch
        %427 = sbr.rel (%p424) target = $region12
      $region11: #{tpu_custom_call.1} parent=5 // pred_region
        %s428 = ssub.s32 %s32, 1
        // Predicated region
        $region13: #{tpu_custom_call.1} parent=11 // pred_check
          %p429 = pneg %p53
        $region14: #{tpu_custom_call.1} parent=11 // pred_check_branch
          %431 = sbr.rel (%p429) target = $region16
        $region15: #{tpu_custom_call.1} parent=11 // pred_region
          %s433 = ssub.s32 64, 64
          %434 = vsyncadd [#allocation5], %s433
          %s436 = sshll.u32 %s0, 4
          %s437 = int_to_ptr.vmem [resolvable:$true] %s436
          %439 = dma.vmem_to_smem %s437, 64, [#allocation2], [#allocation5]
        $region16: #{tpu_custom_call.1} parent=11 // pred_fallthru
          _
        // Predicated region
        $region17: #{tpu_custom_call.1} parent=11 // pred_check
          %p440 = pneg %p178
        $region18: #{tpu_custom_call.1} parent=11 // pred_check_branch
          %442 = sbr.rel (%p440) target = $region20
        $region19: #{tpu_custom_call.1} parent=11 // pred_region
          %s444 = ssub.s32 256, 256
          %445 = vsyncadd [#allocation8], %s444
          %s446 = sshll.u32 [#allocation7], 4
          %s447 = int_to_ptr.vmem [resolvable:$true] %s446
          %452 = dma.hbm_to_vmem [thread:$0]  %s5, 256, %s447, [#allocation8], 64, 64, 4
        $region20: #{tpu_custom_call.1} parent=11 // pred_fallthru
          _
        // Predicated region
        $region21: #{tpu_custom_call.1} parent=11 // pred_check
          %p453 = pneg %p199
        $region22: #{tpu_custom_call.1} parent=11 // pred_check_branch
          %455 = sbr.rel (%p453) target = $region24
        $region23: #{tpu_custom_call.1} parent=11 // pred_region
          %s457 = ssub.s32 256, 256
          %458 = vsyncadd [#allocation8], %s457
          %s459 = sshll.u32 [#allocation9], 4
          %s460 = int_to_ptr.vmem [resolvable:$true] %s459
          %465 = dma.hbm_to_vmem [thread:$0]  %s6, 256, %s460, [#allocation8], 64, 64, 4
        $region24: #{tpu_custom_call.1} parent=11 // pred_fallthru
          _
        // Predicated region
        $region25: #{tpu_custom_call.1} parent=11 // pred_check
          %p466 = pneg %p220
        $region26: #{tpu_custom_call.1} parent=11 // pred_check_branch
          %468 = sbr.rel (%p466) target = $region28
        $region27: #{tpu_custom_call.1} parent=11 // pred_region
          %s470 = ssub.s32 256, 256
          %471 = vsyncadd [#allocation11], %s470
          %s472 = sshll.u32 [#allocation10], 4
          %s473 = int_to_ptr.vmem [resolvable:$true] %s472
          %478 = dma.hbm_to_vmem [thread:$0]  %s7, 256, %s473, [#allocation11], 64, 64, 4
        $region28: #{tpu_custom_call.1} parent=11 // pred_fallthru
          _
        // Predicated region
        $region29: #{tpu_custom_call.1} parent=11 // pred_check
          %p479 = pneg %p241
        $region30: #{tpu_custom_call.1} parent=11 // pred_check_branch
          %481 = sbr.rel (%p479) target = $region32
        $region31: #{tpu_custom_call.1} parent=11 // pred_region
          %s483 = ssub.s32 256, 256
          %484 = vsyncadd [#allocation11], %s483
          %s485 = sshll.u32 [#allocation12], 4
          %s486 = int_to_ptr.vmem [resolvable:$true] %s485
          %491 = dma.hbm_to_vmem [thread:$0]  %s8, 256, %s486, [#allocation11], 64, 64, 4
        $region32: #{tpu_custom_call.1} parent=11 // pred_fallthru
          _
        // Predicated region
        $region33: #{tpu_custom_call.1} parent=11 // pred_check
          %p492 = pneg %p262
        $region34: #{tpu_custom_call.1} parent=11 // pred_check_branch
          %494 = sbr.rel (%p492) target = $region36
        $region35: #{tpu_custom_call.1} parent=11 // pred_region
          %s496 = ssub.s32 256, 256
          %497 = vsyncadd [#allocation14], %s496
          %s498 = sshll.u32 [#allocation13], 4
          %s499 = int_to_ptr.vmem [resolvable:$true] %s498
          %504 = dma.hbm_to_vmem [thread:$0]  %s9, 256, %s499, [#allocation14], 64, 64, 4
        $region36: #{tpu_custom_call.1} parent=11 // pred_fallthru
          _
        // Predicated region
        $region37: #{tpu_custom_call.1} parent=11 // pred_check
          %p505 = pneg %p283
        $region38: #{tpu_custom_call.1} parent=11 // pred_check_branch
          %507 = sbr.rel (%p505) target = $region40
        $region39: #{tpu_custom_call.1} parent=11 // pred_region
          %s509 = ssub.s32 256, 256
          %510 = vsyncadd [#allocation14], %s509
          %s511 = sshll.u32 [#allocation15], 4
          %s512 = int_to_ptr.vmem [resolvable:$true] %s511
          %517 = dma.hbm_to_vmem [thread:$0]  %s10, 256, %s512, [#allocation14], 64, 64, 4
        $region40: #{tpu_custom_call.1} parent=11 // pred_fallthru
          _
        // Predicated region
        $region41: #{tpu_custom_call.1} parent=11 // pred_check
          %p518 = pneg %p304
        $region42: #{tpu_custom_call.1} parent=11 // pred_check_branch
          %520 = sbr.rel (%p518) target = $region44
        $region43: #{tpu_custom_call.1} parent=11 // pred_region
          _
        $region44: #{tpu_custom_call.1} parent=11 // pred_fallthru
          _
        // Predicated region
        $region45: #{tpu_custom_call.1} parent=11 // pred_check
          %p521 = pneg %p325
        $region46: #{tpu_custom_call.1} parent=11 // pred_check_branch
          %523 = sbr.rel (%p521) target = $region48
        $region47: #{tpu_custom_call.1} parent=11 // pred_region
          _
        $region48: #{tpu_custom_call.1} parent=11 // pred_fallthru
          _
        // Predicated region
        $region49: #{tpu_custom_call.1} parent=11 // pred_check
          %p524 = pneg %p346
        $region50: #{tpu_custom_call.1} parent=11 // pred_check_branch
          %526 = sbr.rel (%p524) target = $region52
        $region51: #{tpu_custom_call.1} parent=11 // pred_region
          _
        $region52: #{tpu_custom_call.1} parent=11 // pred_fallthru
          _
        // Predicated region
        $region53: #{tpu_custom_call.1} parent=11 // pred_check
          %p527 = pneg %p367
        $region54: #{tpu_custom_call.1} parent=11 // pred_check_branch
          %529 = sbr.rel (%p527) target = $region56
        $region55: #{tpu_custom_call.1} parent=11 // pred_region
          _
        $region56: #{tpu_custom_call.1} parent=11 // pred_fallthru
          _
        // Predicated region
        $region57: #{tpu_custom_call.1} parent=11 // pred_check
          %p530 = pneg %p388
        $region58: #{tpu_custom_call.1} parent=11 // pred_check_branch
          %532 = sbr.rel (%p530) target = $region60
        $region59: #{tpu_custom_call.1} parent=11 // pred_region
          _
        $region60: #{tpu_custom_call.1} parent=11 // pred_fallthru
          _
      $region12: #{tpu_custom_call.1} parent=5 // pred_fallthru
        _
      %p533 = scmp.lt.s32.totalorder %s32, 2
      // Predicated region
      $region61: #{tpu_custom_call.1} parent=5 // pred_check
        %p534 = pneg %p533
      $region62: #{tpu_custom_call.1} parent=5 // pred_check_branch
        %536 = sbr.rel (%p534) target = $region64
      $region63: #{tpu_custom_call.1} parent=5 // pred_region
        // Predicated region
        $region65: #{tpu_custom_call.1} parent=63 // pred_check
          %p537 = pneg %p73
        $region66: #{tpu_custom_call.1} parent=63 // pred_check_branch
          %539 = sbr.rel (%p537) target = $region68
        $region67: #{tpu_custom_call.1} parent=63 // pred_region
          %p540 = scmp.lt.s32.totalorder %s32, 1
          %s541 = scalar_select %p540, %s32, 1
          %s542 = smul.addr %s541, 8
          %s543 = scalar_lea.vmem %s1, %s542
        $region68: #{tpu_custom_call.1} parent=63 // pred_fallthru
          _
        // Predicated region
        $region69: #{tpu_custom_call.1} parent=63 // pred_check
          %p544 = pneg %p99
        $region70: #{tpu_custom_call.1} parent=63 // pred_check_branch
          %546 = sbr.rel (%p544) target = $region72
        $region71: #{tpu_custom_call.1} parent=63 // pred_region
          %s547 = smul.u32 2, %s32
          %p548 = scmp.lt.s32.totalorder %s547, 3
          %s549 = scalar_select %p548, %s547, 3
          %s550 = smul.addr %s549, 8
          %s551 = scalar_lea.vmem %s2, %s550
          %s552 = smul.u32 2, %s32
        $region72: #{tpu_custom_call.1} parent=63 // pred_fallthru
          _
        // Predicated region
        $region73: #{tpu_custom_call.1} parent=63 // pred_check
          %p553 = pneg %p125
        $region74: #{tpu_custom_call.1} parent=63 // pred_check_branch
          %555 = sbr.rel (%p553) target = $region76
        $region75: #{tpu_custom_call.1} parent=63 // pred_region
          %p556 = scmp.lt.s32.totalorder %s32, 1
          %s557 = scalar_select %p556, %s32, 1
          %s558 = smul.addr %s557, 8
          %s559 = scalar_lea.vmem %s3, %s558
        $region76: #{tpu_custom_call.1} parent=63 // pred_fallthru
          _
        // Predicated region
        $region77: #{tpu_custom_call.1} parent=63 // pred_check
          %p560 = pneg %p151
        $region78: #{tpu_custom_call.1} parent=63 // pred_check_branch
          %562 = sbr.rel (%p560) target = $region80
        $region79: #{tpu_custom_call.1} parent=63 // pred_region
          %s563 = sand.u32 %s141, 1
          %s564 = scalar_lea.sflag [#allocation3], %s563
          %s565 = sand.u32 %s141, 1
          %s566 = scalar_lea.vmem [#allocation6], %s565
          %s568 = ssub.s32 16, 16
          %569 = vsyncadd %s564, %s568
          %s570 = smul.addr %s32, 16
          %s571 = scalar_lea.hbm %s4, %s570
          %s573 = sshll.u32 %s566, 4
          %s574 = int_to_ptr.vmem [resolvable:$true] %s573
          %576 = dma.hbm_to_vmem [thread:$0]  %s571, 16, %s574, %s564
        $region80: #{tpu_custom_call.1} parent=63 // pred_fallthru
          _
      $region64: #{tpu_custom_call.1} parent=5 // pred_fallthru
        _
      %p577 = scmp.le.s32.totalorder 1, %s32
      %p578 = scmp.lt.s32.totalorder %s32, 3
      %p579 = pnand %p577, %p578
      %p580 = pneg %p579
      // Predicated region
      $region81: #{tpu_custom_call.1} parent=5 // pred_check
        _
      $region82: #{tpu_custom_call.1} parent=5 // pred_check_branch
        %582 = sbr.rel (%p579) target = $region84
      $region83: #{tpu_custom_call.1} parent=5 // pred_region
        %s583 = ssub.s32 %s32, 1
        // Predicated region
        $region85: #{tpu_custom_call.1} parent=83 // pred_check
          %p584 = pneg %p53
        $region86: #{tpu_custom_call.1} parent=83 // pred_check_branch
          %586 = sbr.rel (%p584) target = $region88
        $region87: #{tpu_custom_call.1} parent=83 // pred_region
          %587 = dma.done [#allocation5], 64
        $region88: #{tpu_custom_call.1} parent=83 // pred_fallthru
          _
        %s588 = sand.u32 %s144, 1
        %s589 = scalar_lea.sflag [#allocation3], %s588
        %s590 = sand.u32 %s144, 1
        %s591 = scalar_lea.vmem [#allocation6], %s590
        // Predicated region
        $region89: #{tpu_custom_call.1} parent=83 // pred_check
          %p592 = pneg %p157
        $region90: #{tpu_custom_call.1} parent=83 // pred_check_branch
          %594 = sbr.rel (%p592) target = $region92
        $region91: #{tpu_custom_call.1} parent=83 // pred_region
          %595 = dma.done %s589, 16
        $region92: #{tpu_custom_call.1} parent=83 // pred_fallthru
          _
        // Predicated region
        $region93: #{tpu_custom_call.1} parent=83 // pred_check
          %p596 = pneg %p178
        $region94: #{tpu_custom_call.1} parent=83 // pred_check_branch
          %598 = sbr.rel (%p596) target = $region96
        $region95: #{tpu_custom_call.1} parent=83 // pred_region
          %599 = dma.done [#allocation8], 256
        $region96: #{tpu_custom_call.1} parent=83 // pred_fallthru
          _
        // Predicated region
        $region97: #{tpu_custom_call.1} parent=83 // pred_check
          %p600 = pneg %p199
        $region98: #{tpu_custom_call.1} parent=83 // pred_check_branch
          %602 = sbr.rel (%p600) target = $region100
        $region99: #{tpu_custom_call.1} parent=83 // pred_region
          %603 = dma.done [#allocation8], 256
        $region100: #{tpu_custom_call.1} parent=83 // pred_fallthru
          _
        // Predicated region
        $region101: #{tpu_custom_call.1} parent=83 // pred_check
          %p604 = pneg %p220
        $region102: #{tpu_custom_call.1} parent=83 // pred_check_branch
          %606 = sbr.rel (%p604) target = $region104
        $region103: #{tpu_custom_call.1} parent=83 // pred_region
          %607 = dma.done [#allocation11], 256
        $region104: #{tpu_custom_call.1} parent=83 // pred_fallthru
          _
        // Predicated region
        $region105: #{tpu_custom_call.1} parent=83 // pred_check
          %p608 = pneg %p241
        $region106: #{tpu_custom_call.1} parent=83 // pred_check_branch
          %610 = sbr.rel (%p608) target = $region108
        $region107: #{tpu_custom_call.1} parent=83 // pred_region
          %611 = dma.done [#allocation11], 256
        $region108: #{tpu_custom_call.1} parent=83 // pred_fallthru
          _
        // Predicated region
        $region109: #{tpu_custom_call.1} parent=83 // pred_check
          %p612 = pneg %p262
        $region110: #{tpu_custom_call.1} parent=83 // pred_check_branch
          %614 = sbr.rel (%p612) target = $region112
        $region111: #{tpu_custom_call.1} parent=83 // pred_region
          %615 = dma.done [#allocation14], 256
        $region112: #{tpu_custom_call.1} parent=83 // pred_fallthru
          _
        // Predicated region
        $region113: #{tpu_custom_call.1} parent=83 // pred_check
          %p616 = pneg %p283
        $region114: #{tpu_custom_call.1} parent=83 // pred_check_branch
          %618 = sbr.rel (%p616) target = $region116
        $region115: #{tpu_custom_call.1} parent=83 // pred_region
          %619 = dma.done [#allocation14], 256
        $region116: #{tpu_custom_call.1} parent=83 // pred_fallthru
          _
        %620 = sfence
        %p621 = pneg %p53
        %p622 = pneg %p50
        %p623 = scmp.lt.s32.totalorder %s37, 1
        %s624 = scalar_select %p623, %s37, 1
        %s625 = smul.addr %s624, 8
        %s626 = scalar_lea.vmem %s1, %s625
        %p627 = pneg %p79
        %p628 = pneg %p76
        %s629 = smul.u32 2, %s37
        %p630 = scmp.lt.s32.totalorder %s629, 3
        %s631 = scalar_select %p630, %s629, 3
        %s632 = smul.addr %s631, 8
        %s633 = scalar_lea.vmem %s2, %s632
        %p634 = pneg %p105
        %p635 = pneg %p102
        %p636 = scmp.lt.s32.totalorder %s37, 1
        %s637 = scalar_select %p636, %s37, 1
        %s638 = smul.addr %s637, 8
        %s639 = scalar_lea.vmem %s3, %s638
        %p640 = pneg %p131
        %p641 = pneg %p128
        %s642 = sand.u32 %s144, 1
        %s643 = scalar_lea.sflag [#allocation3], %s642
        %s644 = sand.u32 %s144, 1
        %s645 = scalar_lea.vmem [#allocation6], %s644
        %p646 = pneg %p157
        %p647 = pneg %p154
        %p648 = pneg %p178
        %p649 = pneg %p175
        %p650 = pneg %p199
        %p651 = pneg %p196
        %p652 = pneg %p220
        %p653 = pneg %p217
        %p654 = pneg %p241
        %p655 = pneg %p238
        %p656 = pneg %p262
        %p657 = pneg %p259
        %p658 = pneg %p283
        %p659 = pneg %p280
        %p660 = pneg %p304
        %p661 = pneg %p301
        %p662 = pneg %p325
        %p663 = pneg %p322
        %p664 = pneg %p346
        %p665 = pneg %p343
        %p666 = pneg %p367
        %p667 = pneg %p364
        %p668 = pneg %p388
        %p669 = pneg %p385
        %p670 = pneg %p414
        %p671 = pneg %p411
        %s672 = sand.u32 %s401, 1
        %s673 = scalar_lea.sflag [#allocation4], %s672
        %s674 = sand.u32 %s401, 1
        %s675 = smul.addr %s674, 8
        %s676 = scalar_lea.vmem [#allocation16], %s675
        %p677 = scmp.lt.s32.totalorder %s37, 1
        %s678 = scalar_select %p677, %s37, 1
        %s679 = smul.addr %s678, 8
        %s680 = scalar_lea.vmem %s1, %s679
        %s681 = smul.u32 2, %s37
        %p682 = scmp.lt.s32.totalorder %s681, 3
        %s683 = scalar_select %p682, %s681, 3
        %s684 = smul.addr %s683, 8
        %s685 = scalar_lea.vmem %s2, %s684
        %s686 = smul.u32 2, %s37
        %p687 = scmp.lt.s32.totalorder %s37, 1
        %s688 = scalar_select %p687, %s37, 1
        %s689 = smul.addr %s688, 8
        %s690 = scalar_lea.vmem %s3, %s689
        %v692 = vld [vmem:[%s680] sm:$0xff]
        %v693 = vld [vmem:[%s685] sm:$0xff]
        %v694 = vld [vmem:[%s685 + $0x8] sm:$0xff]
        %v695 = vld [vmem:[%s14] sm:$0xf]
        %v696 = vld [vmem:[%s690] sm:$0xff]
        %vm697 = vcmp.eq.f32.partialorder %v696, 0.0
        %v698 = vsel %vm697, -1e+09, 0.0
        %v699 = vld [vmem:[%s591] sm:$0x1]
        %vm700 = vcmp.eq.f32.partialorder %v699, 0.0
        %v701 = vsel %vm700, -1e+09, 0.0
        %s702 = sld [smem:[#allocation2]]
        %s703 = sld [smem:[#allocation2 + $0x1]]
        %vm704 = vcmask 261120
        %v705 = vsel %vm704, %v692, 0.0
        %706 = vadd.xlane.f32.xlu0 %v705
        %v707 = vpop.xlane.xlu0 %706
        %v708 = vrcp.pop 32.0
        %v709 = vmul.f32 %v707, %v708
        %v710 = vsub.f32 %v692, %v709
        %v711 = vmul.f32 %v710, %v710
        %v712 = vsel %vm704, %v711, 0.0
        %713 = vadd.xlane.f32.xlu0 %v712
        %v714 = vpop.xlane.xlu0 %713
        %v715 = vrcp.pop 31.0
        %v716 = vmul.f32 %v714, %v715
        %v717 = vstv %s702
        %v718 = vmul.f32 %v717, %v710
        %v719 = vrsqrt.pop %v716
        %v720 = vmul.f32 %v716, %v719
        %vm721 = vcmp.eq.f32.partialorder %v716, inf
        %v722 = vsel %vm721, %v716, %v720
        %vm723 = vcmp.eq.f32.partialorder %v716, 0.0
        %v724 = vand.u32 %v716, 2147483648
        %v725 = vsel %vm723, %v724, %v722
        %v726 = vadd.f32 %v725, 1e-06
        %v727 = vrcp.pop %v726
        %v728 = vmul.f32 %v718, %v727
        %v729 = vstv %s703
        %v730 = vadd.f32 %v728, %v729
        %v731 = vpack.c.bf16 %v730, %v730
        %v732 = vld [vmem:[#allocation7] sm:$0xf]
        %v733 = vld [vmem:[#allocation7 + $0x4] sm:$0xf]
        %v734 = vld [vmem:[#allocation7 + $0x8] sm:$0xf]
        %v735 = vld [vmem:[#allocation7 + $0xc] sm:$0xf]
        %v736 = vld [vmem:[%s12] sm:$0x1]
        %v738 = vlaneseq
        %v739 = vshrl.u32 %v738, 7
        %v740 = vsub.s32 0, %v739
        %v741 = vrot.slane %v736, %v740
        %v747 = vunpack.c.l.b16 %v732
        %v748 = vunpack.c.l.b16 %v733
        %v749 = vunpack.c.l.b16 %v734
        %v750 = vunpack.c.l.b16 %v735
        %v751 = vpack.c.b16 %v748, %v747
        %v752 = vpack.c.b16 %v750, %v749
        %v756 = vsel %vm704, %v731, 0
        %758 = vmatprep.subr.bf16.mxu0 0
        %759 = vmatpush1.bf16.msra.mxu0 %v751
        %760 = vmatprep.subr.bf16.mxu0 0
        %761 = vmatpush1.bf16.msra.mxu0 %v752
        %762 = vmatprep.subr.bf16.mxu0 0
        %763 = vmatpush1.bf16.msra.mxu0 0
        %764 = vmatprep.subr.bf16.mxu0 0
        %765 = vmatpush1.bf16.msra.mxu0 0
        %766 = vmatprep.subr.bf16.mxu0 0
        %767 = vmatpush1.bf16.msra.mxu0 0
        %768 = vmatprep.subr.bf16.mxu0 0
        %769 = vmatpush1.bf16.msra.mxu0 0
        %770 = vmatprep.subr.bf16.mxu0 0
        %771 = vmatpush1.bf16.msra.mxu0 0
        %772 = vmatprep.subr.bf16.mxu0 0
        %773 = vmatpush1.bf16.msra.mxu0 0
        %774 = vmatprep.subr.bf16.mxu0 0
        %775 = vmatpush1.bf16.msra.mxu0 0
        %776 = vmatprep.subr.bf16.mxu0 0
        %777 = vmatpush1.bf16.msra.mxu0 0
        %778 = vmatprep.subr.bf16.mxu0 0
        %779 = vmatpush1.bf16.msra.mxu0 0
        %780 = vmatprep.subr.bf16.mxu0 0
        %781 = vmatpush1.bf16.msra.mxu0 0
        %782 = vmatprep.subr.bf16.mxu0 0
        %783 = vmatpush1.bf16.msra.mxu0 0
        %784 = vmatprep.subr.bf16.mxu0 0
        %785 = vmatpush1.bf16.msra.mxu0 0
        %786 = vmatprep.subr.bf16.mxu0 0
        %787 = vmatpush1.bf16.msra.mxu0 0
        %788 = vmatprep.subr.bf16.mxu0 0
        %789 = vmatpush1.bf16.msra.mxu0 0
        %790 = vmatprep.mubr.bf16.mxu0 0
        %791 = vmatmul.mubr.bf16.gmra.mrb[0].mxu0 %v756
        %v792 = vpop.f32.mrb[0].mxu0
        %v793 = vadd.f32 %v741, %v792
        %v794 = vpop.f32.mrb[0].mxu0
        %v795 = vpop.f32.mrb[0].mxu0
        %v796 = vpop.f32.mrb[0].mxu0
        %797 = vdwg.mxu0
        %v798 = vmul.f32 %v793, 0.35355338
        %v799 = vld [vmem:[#allocation9] sm:$0xf]
        %v800 = vld [vmem:[#allocation9 + $0x4] sm:$0xf]
        %v801 = vld [vmem:[#allocation9 + $0x8] sm:$0xf]
        %v802 = vld [vmem:[#allocation9 + $0xc] sm:$0xf]
        %804 = vrot.lane.b32.xlu0 %v798, 120
        %v805 = vpop.permute.xlu0 %804
        %807 = vrot.lane.b32.xlu0 %v798, 112
        %v808 = vpop.permute.xlu0 %807
        %810 = vrot.lane.b32.xlu0 %v798, 104
        %v811 = vpop.permute.xlu0 %810
        %v813 = vcombine.low %v798, %v808
        %v814 = vcombine.high %v798, %v808
        %v816 = vunpack.c.l.s4 1983009808
        %v817 = vunpack.c.0.s8 %v816
        %v818 = vlaneseq
        %v819 = vshrl.u32 %v818, 7
        %v820 = vsub.s32 %v817, %v819
        %v821 = vrot.slane %v813, %v820
        %v823 = vunpack.c.l.s4 1983009808
        %v824 = vunpack.c.0.s8 %v823
        %v825 = vlaneseq
        %v826 = vshrl.u32 %v825, 7
        %v827 = vsub.s32 %v824, %v826
        %v828 = vrot.slane %v814, %v827
        %v829 = vcombine.low %v805, %v811
        %v830 = vcombine.high %v805, %v811
        %v832 = vunpack.c.l.s4 1983009808
        %v833 = vunpack.c.0.s8 %v832
        %v834 = vlaneseq
        %v835 = vshrl.u32 %v834, 7
        %v836 = vsub.s32 %v833, %v835
        %v837 = vrot.slane %v829, %v836
        %v839 = vunpack.c.l.s4 1983009808
        %v840 = vunpack.c.0.s8 %v839
        %v841 = vlaneseq
        %v842 = vshrl.u32 %v841, 7
        %v843 = vsub.s32 %v840, %v842
        %v844 = vrot.slane %v830, %v843
        %v845 = vcombine.low %v821, %v837
        %v846 = vcombine.high %v821, %v837
        %v848 = vunpack.c.l.s4 1934713408
        %v849 = vunpack.c.0.s8 %v848
        %v850 = vlaneseq
        %v851 = vshrl.u32 %v850, 7
        %v852 = vsub.s32 %v849, %v851
        %v853 = vrot.slane %v845, %v852
        %v855 = vunpack.c.l.s4 1934713408
        %v856 = vunpack.c.0.s8 %v855
        %v857 = vlaneseq
        %v858 = vshrl.u32 %v857, 7
        %v859 = vsub.s32 %v856, %v858
        %v860 = vrot.slane %v846, %v859
        %v861 = vcombine.low %v828, %v844
        %v862 = vcombine.high %v828, %v844
        %v864 = vunpack.c.l.s4 1934713408
        %v865 = vunpack.c.0.s8 %v864
        %v866 = vlaneseq
        %v867 = vshrl.u32 %v866, 7
        %v868 = vsub.s32 %v865, %v867
        %v869 = vrot.slane %v861, %v868
        %v871 = vunpack.c.l.s4 1934713408
        %v872 = vunpack.c.0.s8 %v871
        %v873 = vlaneseq
        %v874 = vshrl.u32 %v873, 7
        %v875 = vsub.s32 %v872, %v874
        %v876 = vrot.slane %v862, %v875
        %v877 = vcombine.high %v853, 0.0
        %v878 = vcombine.high %v860, 0.0
        %v879 = vcombine.high %v869, 0.0
        %v880 = vcombine.high %v876, 0.0
        %v881 = vcombine.low %v853, %v860
        %v883 = vunpack.c.l.s4 1983009808
        %v884 = vunpack.c.0.s8 %v883
        %v885 = vlaneseq
        %v886 = vshrl.u32 %v885, 7
        %v887 = vsub.s32 %v884, %v886
        %v888 = vrot.slane %v881, %v887
        %v889 = vcombine.low %v877, %v878
        %v891 = vunpack.c.l.s4 1983009808
        %v892 = vunpack.c.0.s8 %v891
        %v893 = vlaneseq
        %v894 = vshrl.u32 %v893, 7
        %v895 = vsub.s32 %v892, %v894
        %v896 = vrot.slane %v889, %v895
        %v897 = vcombine.low %v869, %v876
        %v899 = vunpack.c.l.s4 1983009808
        %v900 = vunpack.c.0.s8 %v899
        %v901 = vlaneseq
        %v902 = vshrl.u32 %v901, 7
        %v903 = vsub.s32 %v900, %v902
        %v904 = vrot.slane %v897, %v903
        %v905 = vcombine.low %v879, %v880
        %v907 = vunpack.c.l.s4 1983009808
        %v908 = vunpack.c.0.s8 %v907
        %v909 = vlaneseq
        %v910 = vshrl.u32 %v909, 7
        %v911 = vsub.s32 %v908, %v910
        %v912 = vrot.slane %v905, %v911
        %v913 = vcombine.low %v888, %v896
        %v914 = vcombine.high %v888, %v896
        %v916 = vunpack.c.l.s4 1934713408
        %v917 = vunpack.c.0.s8 %v916
        %v918 = vlaneseq
        %v919 = vshrl.u32 %v918, 7
        %v920 = vsub.s32 %v917, %v919
        %v921 = vrot.slane %v913, %v920
        %v923 = vunpack.c.l.s4 1934713408
        %v924 = vunpack.c.0.s8 %v923
        %v925 = vlaneseq
        %v926 = vshrl.u32 %v925, 7
        %v927 = vsub.s32 %v924, %v926
        %v928 = vrot.slane %v914, %v927
        %v929 = vcombine.low %v904, %v912
        %v930 = vcombine.high %v904, %v912
        %v932 = vunpack.c.l.s4 1934713408
        %v933 = vunpack.c.0.s8 %v932
        %v934 = vlaneseq
        %v935 = vshrl.u32 %v934, 7
        %v936 = vsub.s32 %v933, %v935
        %v937 = vrot.slane %v929, %v936
        %v939 = vunpack.c.l.s4 1934713408
        %v940 = vunpack.c.0.s8 %v939
        %v941 = vlaneseq
        %v942 = vshrl.u32 %v941, 7
        %v943 = vsub.s32 %v940, %v942
        %v944 = vrot.slane %v930, %v943
        %v945 = vcombine.low %v921, %v937
        %v946 = vcombine.high %v921, %v937
        %v947 = vcombine.low %v928, %v944
        %v948 = vcombine.high %v928, %v944
        %v949 = vpack.c.bf16 %v945, %v945
        %v950 = vpack.c.bf16 %v946, %v946
        %v951 = vpack.c.bf16 %v947, %v947
        %v952 = vpack.c.bf16 %v948, %v948
        %954 = vrot.lane.b32.xlu0 %v793, 120
        %v955 = vpop.permute.xlu0 %954
        %956 = vrot.lane.b32.xlu0 %v793, 112
        %v957 = vpop.permute.xlu0 %956
        %958 = vrot.lane.b32.xlu0 %v793, 104
        %v959 = vpop.permute.xlu0 %958
        %960 = vrot.lane.b32.xlu0 %v793, 96
        %v961 = vpop.permute.xlu0 %960
        %962 = vrot.lane.b32.xlu0 %v955, 96
        %v963 = vpop.permute.xlu0 %962
        %964 = vrot.lane.b32.xlu0 %v957, 96
        %v965 = vpop.permute.xlu0 %964
        %966 = vrot.lane.b32.xlu0 %v959, 96
        %v967 = vpop.permute.xlu0 %966
        %v972 = vcombine.low %v961, %v965
        %v973 = vcombine.high %v961, %v965
        %v975 = vunpack.c.l.s4 1983009808
        %v976 = vunpack.c.0.s8 %v975
        %v977 = vlaneseq
        %v978 = vshrl.u32 %v977, 7
        %v979 = vsub.s32 %v976, %v978
        %v980 = vrot.slane %v972, %v979
        %v982 = vunpack.c.l.s4 1983009808
        %v983 = vunpack.c.0.s8 %v982
        %v984 = vlaneseq
        %v985 = vshrl.u32 %v984, 7
        %v986 = vsub.s32 %v983, %v985
        %v987 = vrot.slane %v973, %v986
        %v988 = vcombine.low %v963, %v967
        %v989 = vcombine.high %v963, %v967
        %v991 = vunpack.c.l.s4 1983009808
        %v992 = vunpack.c.0.s8 %v991
        %v993 = vlaneseq
        %v994 = vshrl.u32 %v993, 7
        %v995 = vsub.s32 %v992, %v994
        %v996 = vrot.slane %v988, %v995
        %v998 = vunpack.c.l.s4 1983009808
        %v999 = vunpack.c.0.s8 %v998
        %v1000 = vlaneseq
        %v1001 = vshrl.u32 %v1000, 7
        %v1002 = vsub.s32 %v999, %v1001
        %v1003 = vrot.slane %v989, %v1002
        %v1004 = vcombine.low %v980, %v996
        %v1005 = vcombine.high %v980, %v996
        %v1007 = vunpack.c.l.s4 1934713408
        %v1008 = vunpack.c.0.s8 %v1007
        %v1009 = vlaneseq
        %v1010 = vshrl.u32 %v1009, 7
        %v1011 = vsub.s32 %v1008, %v1010
        %v1012 = vrot.slane %v1004, %v1011
        %v1014 = vunpack.c.l.s4 1934713408
        %v1015 = vunpack.c.0.s8 %v1014
        %v1016 = vlaneseq
        %v1017 = vshrl.u32 %v1016, 7
        %v1018 = vsub.s32 %v1015, %v1017
        %v1019 = vrot.slane %v1005, %v1018
        %v1020 = vcombine.low %v987, %v1003
        %v1021 = vcombine.high %v987, %v1003
        %v1023 = vunpack.c.l.s4 1934713408
        %v1024 = vunpack.c.0.s8 %v1023
        %v1025 = vlaneseq
        %v1026 = vshrl.u32 %v1025, 7
        %v1027 = vsub.s32 %v1024, %v1026
        %v1028 = vrot.slane %v1020, %v1027
        %v1030 = vunpack.c.l.s4 1934713408
        %v1031 = vunpack.c.0.s8 %v1030
        %v1032 = vlaneseq
        %v1033 = vshrl.u32 %v1032, 7
        %v1034 = vsub.s32 %v1031, %v1033
        %v1035 = vrot.slane %v1021, %v1034
        %v1036 = vcombine.high %v1012, 0.0
        %v1037 = vcombine.high %v1019, 0.0
        %v1038 = vcombine.high %v1028, 0.0
        %v1039 = vcombine.high %v1035, 0.0
        %v1040 = vcombine.low %v1012, %v1019
        %v1042 = vunpack.c.l.s4 1983009808
        %v1043 = vunpack.c.0.s8 %v1042
        %v1044 = vlaneseq
        %v1045 = vshrl.u32 %v1044, 7
        %v1046 = vsub.s32 %v1043, %v1045
        %v1047 = vrot.slane %v1040, %v1046
        %v1048 = vcombine.low %v1036, %v1037
        %v1050 = vunpack.c.l.s4 1983009808
        %v1051 = vunpack.c.0.s8 %v1050
        %v1052 = vlaneseq
        %v1053 = vshrl.u32 %v1052, 7
        %v1054 = vsub.s32 %v1051, %v1053
        %v1055 = vrot.slane %v1048, %v1054
        %v1056 = vcombine.low %v1028, %v1035
        %v1058 = vunpack.c.l.s4 1983009808
        %v1059 = vunpack.c.0.s8 %v1058
        %v1060 = vlaneseq
        %v1061 = vshrl.u32 %v1060, 7
        %v1062 = vsub.s32 %v1059, %v1061
        %v1063 = vrot.slane %v1056, %v1062
        %v1064 = vcombine.low %v1038, %v1039
        %v1066 = vunpack.c.l.s4 1983009808
        %v1067 = vunpack.c.0.s8 %v1066
        %v1068 = vlaneseq
        %v1069 = vshrl.u32 %v1068, 7
        %v1070 = vsub.s32 %v1067, %v1069
        %v1071 = vrot.slane %v1064, %v1070
        %v1072 = vcombine.low %v1047, %v1055
        %v1073 = vcombine.high %v1047, %v1055
        %v1075 = vunpack.c.l.s4 1934713408
        %v1076 = vunpack.c.0.s8 %v1075
        %v1077 = vlaneseq
        %v1078 = vshrl.u32 %v1077, 7
        %v1079 = vsub.s32 %v1076, %v1078
        %v1080 = vrot.slane %v1072, %v1079
        %v1082 = vunpack.c.l.s4 1934713408
        %v1083 = vunpack.c.0.s8 %v1082
        %v1084 = vlaneseq
        %v1085 = vshrl.u32 %v1084, 7
        %v1086 = vsub.s32 %v1083, %v1085
        %v1087 = vrot.slane %v1073, %v1086
        %v1088 = vcombine.low %v1063, %v1071
        %v1089 = vcombine.high %v1063, %v1071
        %v1091 = vunpack.c.l.s4 1934713408
        %v1092 = vunpack.c.0.s8 %v1091
        %v1093 = vlaneseq
        %v1094 = vshrl.u32 %v1093, 7
        %v1095 = vsub.s32 %v1092, %v1094
        %v1096 = vrot.slane %v1088, %v1095
        %v1098 = vunpack.c.l.s4 1934713408
        %v1099 = vunpack.c.0.s8 %v1098
        %v1100 = vlaneseq
        %v1101 = vshrl.u32 %v1100, 7
        %v1102 = vsub.s32 %v1099, %v1101
        %v1103 = vrot.slane %v1089, %v1102
        %v1104 = vcombine.low %v1080, %v1096
        %v1105 = vcombine.high %v1080, %v1096
        %v1106 = vcombine.low %v1087, %v1103
        %v1107 = vcombine.high %v1087, %v1103
        %v1108 = vpack.c.bf16 %v1104, %v1104
        %v1109 = vpack.c.bf16 %v1105, %v1105
        %v1110 = vpack.c.bf16 %v1106, %v1106
        %v1111 = vpack.c.bf16 %v1107, %v1107
        %1112 = vrot.lane.b32.xlu0 %v793, 64
        %v1113 = vpop.permute.xlu0 %1112
        %1114 = vrot.lane.b32.xlu0 %v955, 64
        %v1115 = vpop.permute.xlu0 %1114
        %1116 = vrot.lane.b32.xlu0 %v957, 64
        %v1117 = vpop.permute.xlu0 %1116
        %1118 = vrot.lane.b32.xlu0 %v959, 64
        %v1119 = vpop.permute.xlu0 %1118
        %v1124 = vcombine.low %v1113, %v1117
        %v1125 = vcombine.high %v1113, %v1117
        %v1127 = vunpack.c.l.s4 1983009808
        %v1128 = vunpack.c.0.s8 %v1127
        %v1129 = vlaneseq
        %v1130 = vshrl.u32 %v1129, 7
        %v1131 = vsub.s32 %v1128, %v1130
        %v1132 = vrot.slane %v1124, %v1131
        %v1134 = vunpack.c.l.s4 1983009808
        %v1135 = vunpack.c.0.s8 %v1134
        %v1136 = vlaneseq
        %v1137 = vshrl.u32 %v1136, 7
        %v1138 = vsub.s32 %v1135, %v1137
        %v1139 = vrot.slane %v1125, %v1138
        %v1140 = vcombine.low %v1115, %v1119
        %v1141 = vcombine.high %v1115, %v1119
        %v1143 = vunpack.c.l.s4 1983009808
        %v1144 = vunpack.c.0.s8 %v1143
        %v1145 = vlaneseq
        %v1146 = vshrl.u32 %v1145, 7
        %v1147 = vsub.s32 %v1144, %v1146
        %v1148 = vrot.slane %v1140, %v1147
        %v1150 = vunpack.c.l.s4 1983009808
        %v1151 = vunpack.c.0.s8 %v1150
        %v1152 = vlaneseq
        %v1153 = vshrl.u32 %v1152, 7
        %v1154 = vsub.s32 %v1151, %v1153
        %v1155 = vrot.slane %v1141, %v1154
        %v1156 = vcombine.low %v1132, %v1148
        %v1157 = vcombine.high %v1132, %v1148
        %v1159 = vunpack.c.l.s4 1934713408
        %v1160 = vunpack.c.0.s8 %v1159
        %v1161 = vlaneseq
        %v1162 = vshrl.u32 %v1161, 7
        %v1163 = vsub.s32 %v1160, %v1162
        %v1164 = vrot.slane %v1156, %v1163
        %v1166 = vunpack.c.l.s4 1934713408
        %v1167 = vunpack.c.0.s8 %v1166
        %v1168 = vlaneseq
        %v1169 = vshrl.u32 %v1168, 7
        %v1170 = vsub.s32 %v1167, %v1169
        %v1171 = vrot.slane %v1157, %v1170
        %v1172 = vcombine.low %v1139, %v1155
        %v1173 = vcombine.high %v1139, %v1155
        %v1175 = vunpack.c.l.s4 1934713408
        %v1176 = vunpack.c.0.s8 %v1175
        %v1177 = vlaneseq
        %v1178 = vshrl.u32 %v1177, 7
        %v1179 = vsub.s32 %v1176, %v1178
        %v1180 = vrot.slane %v1172, %v1179
        %v1182 = vunpack.c.l.s4 1934713408
        %v1183 = vunpack.c.0.s8 %v1182
        %v1184 = vlaneseq
        %v1185 = vshrl.u32 %v1184, 7
        %v1186 = vsub.s32 %v1183, %v1185
        %v1187 = vrot.slane %v1173, %v1186
        %v1188 = vcombine.high %v1164, 0.0
        %v1189 = vcombine.high %v1171, 0.0
        %v1190 = vcombine.high %v1180, 0.0
        %v1191 = vcombine.high %v1187, 0.0
        %v1192 = vcombine.low %v1164, %v1171
        %v1194 = vunpack.c.l.s4 1983009808
        %v1195 = vunpack.c.0.s8 %v1194
        %v1196 = vlaneseq
        %v1197 = vshrl.u32 %v1196, 7
        %v1198 = vsub.s32 %v1195, %v1197
        %v1199 = vrot.slane %v1192, %v1198
        %v1200 = vcombine.low %v1188, %v1189
        %v1202 = vunpack.c.l.s4 1983009808
        %v1203 = vunpack.c.0.s8 %v1202
        %v1204 = vlaneseq
        %v1205 = vshrl.u32 %v1204, 7
        %v1206 = vsub.s32 %v1203, %v1205
        %v1207 = vrot.slane %v1200, %v1206
        %v1208 = vcombine.low %v1180, %v1187
        %v1210 = vunpack.c.l.s4 1983009808
        %v1211 = vunpack.c.0.s8 %v1210
        %v1212 = vlaneseq
        %v1213 = vshrl.u32 %v1212, 7
        %v1214 = vsub.s32 %v1211, %v1213
        %v1215 = vrot.slane %v1208, %v1214
        %v1216 = vcombine.low %v1190, %v1191
        %v1218 = vunpack.c.l.s4 1983009808
        %v1219 = vunpack.c.0.s8 %v1218
        %v1220 = vlaneseq
        %v1221 = vshrl.u32 %v1220, 7
        %v1222 = vsub.s32 %v1219, %v1221
        %v1223 = vrot.slane %v1216, %v1222
        %v1224 = vcombine.low %v1199, %v1207
        %v1225 = vcombine.high %v1199, %v1207
        %v1227 = vunpack.c.l.s4 1934713408
        %v1228 = vunpack.c.0.s8 %v1227
        %v1229 = vlaneseq
        %v1230 = vshrl.u32 %v1229, 7
        %v1231 = vsub.s32 %v1228, %v1230
        %v1232 = vrot.slane %v1224, %v1231
        %v1234 = vunpack.c.l.s4 1934713408
        %v1235 = vunpack.c.0.s8 %v1234
        %v1236 = vlaneseq
        %v1237 = vshrl.u32 %v1236, 7
        %v1238 = vsub.s32 %v1235, %v1237
        %v1239 = vrot.slane %v1225, %v1238
        %v1240 = vcombine.low %v1215, %v1223
        %v1241 = vcombine.high %v1215, %v1223
        %v1243 = vunpack.c.l.s4 1934713408
        %v1244 = vunpack.c.0.s8 %v1243
        %v1245 = vlaneseq
        %v1246 = vshrl.u32 %v1245, 7
        %v1247 = vsub.s32 %v1244, %v1246
        %v1248 = vrot.slane %v1240, %v1247
        %v1250 = vunpack.c.l.s4 1934713408
        %v1251 = vunpack.c.0.s8 %v1250
        %v1252 = vlaneseq
        %v1253 = vshrl.u32 %v1252, 7
        %v1254 = vsub.s32 %v1251, %v1253
        %v1255 = vrot.slane %v1241, %v1254
        %v1256 = vcombine.low %v1232, %v1248
        %v1257 = vcombine.high %v1232, %v1248
        %v1258 = vcombine.low %v1239, %v1255
        %v1259 = vcombine.high %v1239, %v1255
        %v1260 = vpack.c.bf16 %v1256, %v1256
        %v1261 = vpack.c.bf16 %v1257, %v1257
        %v1262 = vpack.c.bf16 %v1258, %v1258
        %v1263 = vpack.c.bf16 %v1259, %v1259
        %vm1264 = vcmask 64512
        %v1266 = vsel %vm1264, %v949, 0
        %v1269 = vsel %vm1264, %v1108, 0
        %1271 = vmatprep.subr.bf16.mxu0 0
        %1272 = vmatpush1.bf16.xpose.msra.mxu0 %v1269
        %1273 = vmatprep.subr.bf16.mxu0 0
        %1274 = vmatpush1.bf16.xpose.msra.mxu0 0
        %1275 = vmatprep.subr.bf16.mxu0 0
        %1276 = vmatpush1.bf16.xpose.msra.mxu0 0
        %1277 = vmatprep.subr.bf16.mxu0 0
        %1278 = vmatpush1.bf16.xpose.msra.mxu0 0
        %1279 = vmatprep.subr.bf16.mxu0 0
        %1280 = vmatpush1.bf16.xpose.msra.mxu0 0
        %1281 = vmatprep.subr.bf16.mxu0 0
        %1282 = vmatpush1.bf16.xpose.msra.mxu0 0
        %1283 = vmatprep.subr.bf16.mxu0 0
        %1284 = vmatpush1.bf16.xpose.msra.mxu0 0
        %1285 = vmatprep.subr.bf16.mxu0 0
        %1286 = vmatpush1.bf16.xpose.msra.mxu0 0
        %1287 = vmatprep.subr.bf16.mxu0 0
        %1288 = vmatpush1.bf16.xpose.msra.mxu0 0
        %1289 = vmatprep.subr.bf16.mxu0 0
        %1290 = vmatpush1.bf16.xpose.msra.mxu0 0
        %1291 = vmatprep.subr.bf16.mxu0 0
        %1292 = vmatpush1.bf16.xpose.msra.mxu0 0
        %1293 = vmatprep.subr.bf16.mxu0 0
        %1294 = vmatpush1.bf16.xpose.msra.mxu0 0
        %1295 = vmatprep.subr.bf16.mxu0 0
        %1296 = vmatpush1.bf16.xpose.msra.mxu0 0
        %1297 = vmatprep.subr.bf16.mxu0 0
        %1298 = vmatpush1.bf16.xpose.msra.mxu0 0
        %1299 = vmatprep.subr.bf16.mxu0 0
        %1300 = vmatpush1.bf16.xpose.msra.mxu0 0
        %1301 = vmatprep.subr.bf16.mxu0 0
        %1302 = vmatpush1.bf16.xpose.msra.mxu0 0
        %1303 = vmatprep.mubr.bf16.mxu0 0
        %1304 = vmatmul.mubr.bf16.gmra.mrb[0].mxu0 %v1266
        %v1305 = vpop.f32.mrb[0].mxu0
        %v1306 = vadd.f32 0.0, %v1305
        %v1307 = vpop.f32.mrb[0].mxu0
        %v1308 = vpop.f32.mrb[0].mxu0
        %v1309 = vpop.f32.mrb[0].mxu0
        %1310 = vdwg.mxu0
        %v1312 = vsel %vm1264, %v950, 0
        %v1315 = vsel %vm1264, %v1109, 0
        %1317 = vmatprep.subr.bf16.mxu0 0
        %1318 = vmatpush1.bf16.xpose.msra.mxu0 %v1315
        %1319 = vmatprep.subr.bf16.mxu0 0
        %1320 = vmatpush1.bf16.xpose.msra.mxu0 0
        %1321 = vmatprep.subr.bf16.mxu0 0
        %1322 = vmatpush1.bf16.xpose.msra.mxu0 0
        %1323 = vmatprep.subr.bf16.mxu0 0
        %1324 = vmatpush1.bf16.xpose.msra.mxu0 0
        %1325 = vmatprep.subr.bf16.mxu0 0
        %1326 = vmatpush1.bf16.xpose.msra.mxu0 0
        %1327 = vmatprep.subr.bf16.mxu0 0
        %1328 = vmatpush1.bf16.xpose.msra.mxu0 0
        %1329 = vmatprep.subr.bf16.mxu0 0
        %1330 = vmatpush1.bf16.xpose.msra.mxu0 0
        %1331 = vmatprep.subr.bf16.mxu0 0
        %1332 = vmatpush1.bf16.xpose.msra.mxu0 0
        %1333 = vmatprep.subr.bf16.mxu0 0
        %1334 = vmatpush1.bf16.xpose.msra.mxu0 0
        %1335 = vmatprep.subr.bf16.mxu0 0
        %1336 = vmatpush1.bf16.xpose.msra.mxu0 0
        %1337 = vmatprep.subr.bf16.mxu0 0
        %1338 = vmatpush1.bf16.xpose.msra.mxu0 0
        %1339 = vmatprep.subr.bf16.mxu0 0
        %1340 = vmatpush1.bf16.xpose.msra.mxu0 0
        %1341 = vmatprep.subr.bf16.mxu0 0
        %1342 = vmatpush1.bf16.xpose.msra.mxu0 0
        %1343 = vmatprep.subr.bf16.mxu0 0
        %1344 = vmatpush1.bf16.xpose.msra.mxu0 0
        %1345 = vmatprep.subr.bf16.mxu0 0
        %1346 = vmatpush1.bf16.xpose.msra.mxu0 0
        %1347 = vmatprep.subr.bf16.mxu0 0
        %1348 = vmatpush1.bf16.xpose.msra.mxu0 0
        %1349 = vmatprep.mubr.bf16.mxu0 0
        %1350 = vmatmul.mubr.bf16.gmra.mrb[0].mxu0 %v1312
        %v1351 = vpop.f32.mrb[0].mxu0
        %v1352 = vadd.f32 0.0, %v1351
        %v1353 = vpop.f32.mrb[0].mxu0
        %v1354 = vpop.f32.mrb[0].mxu0
        %v1355 = vpop.f32.mrb[0].mxu0
        %1356 = vdwg.mxu0
        %v1358 = vsel %vm1264, %v951, 0
        %v1361 = vsel %vm1264, %v1110, 0
        %1363 = vmatprep.subr.bf16.mxu0 0
        %1364 = vmatpush1.bf16.xpose.msra.mxu0 %v1361
        %1365 = vmatprep.subr.bf16.mxu0 0
        %1366 = vmatpush1.bf16.xpose.msra.mxu0 0
        %1367 = vmatprep.subr.bf16.mxu0 0
        %1368 = vmatpush1.bf16.xpose.msra.mxu0 0
        %1369 = vmatprep.subr.bf16.mxu0 0
        %1370 = vmatpush1.bf16.xpose.msra.mxu0 0
        %1371 = vmatprep.subr.bf16.mxu0 0
        %1372 = vmatpush1.bf16.xpose.msra.mxu0 0
        %1373 = vmatprep.subr.bf16.mxu0 0
        %1374 = vmatpush1.bf16.xpose.msra.mxu0 0
        %1375 = vmatprep.subr.bf16.mxu0 0
        %1376 = vmatpush1.bf16.xpose.msra.mxu0 0
        %1377 = vmatprep.subr.bf16.mxu0 0
        %1378 = vmatpush1.bf16.xpose.msra.mxu0 0
        %1379 = vmatprep.subr.bf16.mxu0 0
        %1380 = vmatpush1.bf16.xpose.msra.mxu0 0
        %1381 = vmatprep.subr.bf16.mxu0 0
        %1382 = vmatpush1.bf16.xpose.msra.mxu0 0
        %1383 = vmatprep.subr.bf16.mxu0 0
        %1384 = vmatpush1.bf16.xpose.msra.mxu0 0
        %1385 = vmatprep.subr.bf16.mxu0 0
        %1386 = vmatpush1.bf16.xpose.msra.mxu0 0
        %1387 = vmatprep.subr.bf16.mxu0 0
        %1388 = vmatpush1.bf16.xpose.msra.mxu0 0
        %1389 = vmatprep.subr.bf16.mxu0 0
        %1390 = vmatpush1.bf16.xpose.msra.mxu0 0
        %1391 = vmatprep.subr.bf16.mxu0 0
        %1392 = vmatpush1.bf16.xpose.msra.mxu0 0
        %1393 = vmatprep.subr.bf16.mxu0 0
        %1394 = vmatpush1.bf16.xpose.msra.mxu0 0
        %1395 = vmatprep.mubr.bf16.mxu0 0
        %1396 = vmatmul.mubr.bf16.gmra.mrb[0].mxu0 %v1358
        %v1397 = vpop.f32.mrb[0].mxu0
        %v1398 = vadd.f32 0.0, %v1397
        %v1399 = vpop.f32.mrb[0].mxu0
        %v1400 = vpop.f32.mrb[0].mxu0
        %v1401 = vpop.f32.mrb[0].mxu0
        %1402 = vdwg.mxu0
        %v1404 = vsel %vm1264, %v952, 0
        %v1407 = vsel %vm1264, %v1111, 0
        %1409 = vmatprep.subr.bf16.mxu0 0
        %1410 = vmatpush1.bf16.xpose.msra.mxu0 %v1407
        %1411 = vmatprep.subr.bf16.mxu0 0
        %1412 = vmatpush1.bf16.xpose.msra.mxu0 0
        %1413 = vmatprep.subr.bf16.mxu0 0
        %1414 = vmatpush1.bf16.xpose.msra.mxu0 0
        %1415 = vmatprep.subr.bf16.mxu0 0
        %1416 = vmatpush1.bf16.xpose.msra.mxu0 0
        %1417 = vmatprep.subr.bf16.mxu0 0
        %1418 = vmatpush1.bf16.xpose.msra.mxu0 0
        %1419 = vmatprep.subr.bf16.mxu0 0
        %1420 = vmatpush1.bf16.xpose.msra.mxu0 0
        %1421 = vmatprep.subr.bf16.mxu0 0
        %1422 = vmatpush1.bf16.xpose.msra.mxu0 0
        %1423 = vmatprep.subr.bf16.mxu0 0
        %1424 = vmatpush1.bf16.xpose.msra.mxu0 0
        %1425 = vmatprep.subr.bf16.mxu0 0
        %1426 = vmatpush1.bf16.xpose.msra.mxu0 0
        %1427 = vmatprep.subr.bf16.mxu0 0
        %1428 = vmatpush1.bf16.xpose.msra.mxu0 0
        %1429 = vmatprep.subr.bf16.mxu0 0
        %1430 = vmatpush1.bf16.xpose.msra.mxu0 0
        %1431 = vmatprep.subr.bf16.mxu0 0
        %1432 = vmatpush1.bf16.xpose.msra.mxu0 0
        %1433 = vmatprep.subr.bf16.mxu0 0
        %1434 = vmatpush1.bf16.xpose.msra.mxu0 0
        %1435 = vmatprep.subr.bf16.mxu0 0
        %1436 = vmatpush1.bf16.xpose.msra.mxu0 0
        %1437 = vmatprep.subr.bf16.mxu0 0
        %1438 = vmatpush1.bf16.xpose.msra.mxu0 0
        %1439 = vmatprep.subr.bf16.mxu0 0
        %1440 = vmatpush1.bf16.xpose.msra.mxu0 0
        %1441 = vmatprep.mubr.bf16.mxu0 0
        %1442 = vmatmul.mubr.bf16.gmra.mrb[0].mxu0 %v1404
        %v1443 = vpop.f32.mrb[0].mxu0
        %v1444 = vadd.f32 0.0, %v1443
        %v1445 = vpop.f32.mrb[0].mxu0
        %v1446 = vpop.f32.mrb[0].mxu0
        %v1447 = vpop.f32.mrb[0].mxu0
        %1448 = vdwg.mxu0
        %v1449 = vadd.f32 %v1306, %v698
        %v1450 = vadd.f32 %v1352, %v698
        %v1451 = vadd.f32 %v1398, %v698
        %v1452 = vadd.f32 %v1444, %v698
        %v1453 = vsel %vm1264, %v1449, -inf
        %1454 = vmax.xlane.f32.xlu0 %v1453
        %v1455 = vpop.xlane.xlu0 %1454
        %v1456 = vsel %vm1264, %v1450, -inf
        %1457 = vmax.xlane.f32.xlu0 %v1456
        %v1458 = vpop.xlane.xlu0 %1457
        %v1459 = vsel %vm1264, %v1451, -inf
        %1460 = vmax.xlane.f32.xlu0 %v1459
        %v1461 = vpop.xlane.xlu0 %1460
        %v1462 = vsel %vm1264, %v1452, -inf
        %1463 = vmax.xlane.f32.xlu0 %v1462
        %v1464 = vpop.xlane.xlu0 %1463
        %v1465 = vsub.f32 %v1449, %v1455
        %v1466 = vsub.f32 %v1450, %v1458
        %v1467 = vsub.f32 %v1451, %v1461
        %v1468 = vsub.f32 %v1452, %v1464
        %v1469 = vmul.f32 %v1465, 1.442695
        %v1470 = vpow.pop %v1469
        %v1471 = vmul.f32 %v1466, 1.442695
        %v1472 = vpow.pop %v1471
        %v1473 = vmul.f32 %v1467, 1.442695
        %v1474 = vpow.pop %v1473
        %v1475 = vmul.f32 %v1468, 1.442695
        %v1476 = vpow.pop %v1475
        %v1477 = vsel %vm1264, %v1470, 0.0
        %1478 = vadd.xlane.f32.xlu0 %v1477
        %v1479 = vpop.xlane.xlu0 %1478
        %v1480 = vsel %vm1264, %v1472, 0.0
        %1481 = vadd.xlane.f32.xlu0 %v1480
        %v1482 = vpop.xlane.xlu0 %1481
        %v1483 = vsel %vm1264, %v1474, 0.0
        %1484 = vadd.xlane.f32.xlu0 %v1483
        %v1485 = vpop.xlane.xlu0 %1484
        %v1486 = vsel %vm1264, %v1476, 0.0
        %1487 = vadd.xlane.f32.xlu0 %v1486
        %v1488 = vpop.xlane.xlu0 %1487
        %v1489 = vrcp.pop %v1479
        %v1490 = vrcp.pop %v1482
        %v1491 = vrcp.pop %v1485
        %v1492 = vrcp.pop %v1488
        %v1493 = vmul.f32 %v1470, %v1489
        %v1494 = vmul.f32 %v1472, %v1490
        %v1495 = vmul.f32 %v1474, %v1491
        %v1496 = vmul.f32 %v1476, %v1492
        %v1497 = vpack.c.bf16 %v1493, %v1493
        %v1498 = vpack.c.bf16 %v1494, %v1494
        %v1499 = vpack.c.bf16 %v1495, %v1495
        %v1500 = vpack.c.bf16 %v1496, %v1496
        %v1502 = vsel %vm1264, %v1497, 0
        %vm1504 = vcmask 1043456
        %v1506 = vsel %vm1504, %v1260, 0
        %1508 = vmatprep.subr.bf16.mxu0 0
        %1509 = vmatpush1.bf16.msra.mxu0 %v1506
        %1510 = vmatprep.subr.bf16.mxu0 0
        %1511 = vmatpush1.bf16.msra.mxu0 0
        %1512 = vmatprep.subr.bf16.mxu0 0
        %1513 = vmatpush1.bf16.msra.mxu0 0
        %1514 = vmatprep.subr.bf16.mxu0 0
        %1515 = vmatpush1.bf16.msra.mxu0 0
        %1516 = vmatprep.subr.bf16.mxu0 0
        %1517 = vmatpush1.bf16.msra.mxu0 0
        %1518 = vmatprep.subr.bf16.mxu0 0
        %1519 = vmatpush1.bf16.msra.mxu0 0
        %1520 = vmatprep.subr.bf16.mxu0 0
        %1521 = vmatpush1.bf16.msra.mxu0 0
        %1522 = vmatprep.subr.bf16.mxu0 0
        %1523 = vmatpush1.bf16.msra.mxu0 0
        %1524 = vmatprep.subr.bf16.mxu0 0
        %1525 = vmatpush1.bf16.msra.mxu0 0
        %1526 = vmatprep.subr.bf16.mxu0 0
        %1527 = vmatpush1.bf16.msra.mxu0 0
        %1528 = vmatprep.subr.bf16.mxu0 0
        %1529 = vmatpush1.bf16.msra.mxu0 0
        %1530 = vmatprep.subr.bf16.mxu0 0
        %1531 = vmatpush1.bf16.msra.mxu0 0
        %1532 = vmatprep.subr.bf16.mxu0 0
        %1533 = vmatpush1.bf16.msra.mxu0 0
        %1534 = vmatprep.subr.bf16.mxu0 0
        %1535 = vmatpush1.bf16.msra.mxu0 0
        %1536 = vmatprep.subr.bf16.mxu0 0
        %1537 = vmatpush1.bf16.msra.mxu0 0
        %1538 = vmatprep.subr.bf16.mxu0 0
        %1539 = vmatpush1.bf16.msra.mxu0 0
        %1540 = vmatprep.mubr.bf16.mxu0 0
        %1541 = vmatmul.mubr.bf16.gmra.mrb[0].mxu0 %v1502
        %v1542 = vpop.f32.mrb[0].mxu0
        %v1543 = vadd.f32 0.0, %v1542
        %v1544 = vpop.f32.mrb[0].mxu0
        %v1545 = vpop.f32.mrb[0].mxu0
        %v1546 = vpop.f32.mrb[0].mxu0
        %1547 = vdwg.mxu0
        %v1549 = vsel %vm1264, %v1498, 0
        %v1552 = vsel %vm1504, %v1261, 0
        %1554 = vmatprep.subr.bf16.mxu0 0
        %1555 = vmatpush1.bf16.msra.mxu0 %v1552
        %1556 = vmatprep.subr.bf16.mxu0 0
        %1557 = vmatpush1.bf16.msra.mxu0 0
        %1558 = vmatprep.subr.bf16.mxu0 0
        %1559 = vmatpush1.bf16.msra.mxu0 0
        %1560 = vmatprep.subr.bf16.mxu0 0
        %1561 = vmatpush1.bf16.msra.mxu0 0
        %1562 = vmatprep.subr.bf16.mxu0 0
        %1563 = vmatpush1.bf16.msra.mxu0 0
        %1564 = vmatprep.subr.bf16.mxu0 0
        %1565 = vmatpush1.bf16.msra.mxu0 0
        %1566 = vmatprep.subr.bf16.mxu0 0
        %1567 = vmatpush1.bf16.msra.mxu0 0
        %1568 = vmatprep.subr.bf16.mxu0 0
        %1569 = vmatpush1.bf16.msra.mxu0 0
        %1570 = vmatprep.subr.bf16.mxu0 0
        %1571 = vmatpush1.bf16.msra.mxu0 0
        %1572 = vmatprep.subr.bf16.mxu0 0
        %1573 = vmatpush1.bf16.msra.mxu0 0
        %1574 = vmatprep.subr.bf16.mxu0 0
        %1575 = vmatpush1.bf16.msra.mxu0 0
        %1576 = vmatprep.subr.bf16.mxu0 0
        %1577 = vmatpush1.bf16.msra.mxu0 0
        %1578 = vmatprep.subr.bf16.mxu0 0
        %1579 = vmatpush1.bf16.msra.mxu0 0
        %1580 = vmatprep.subr.bf16.mxu0 0
        %1581 = vmatpush1.bf16.msra.mxu0 0
        %1582 = vmatprep.subr.bf16.mxu0 0
        %1583 = vmatpush1.bf16.msra.mxu0 0
        %1584 = vmatprep.subr.bf16.mxu0 0
        %1585 = vmatpush1.bf16.msra.mxu0 0
        %1586 = vmatprep.mubr.bf16.mxu0 0
        %1587 = vmatmul.mubr.bf16.gmra.mrb[0].mxu0 %v1549
        %v1588 = vpop.f32.mrb[0].mxu0
        %v1589 = vadd.f32 0.0, %v1588
        %v1590 = vpop.f32.mrb[0].mxu0
        %v1591 = vpop.f32.mrb[0].mxu0
        %v1592 = vpop.f32.mrb[0].mxu0
        %1593 = vdwg.mxu0
        %v1595 = vsel %vm1264, %v1499, 0
        %v1598 = vsel %vm1504, %v1262, 0
        %1600 = vmatprep.subr.bf16.mxu0 0
        %1601 = vmatpush1.bf16.msra.mxu0 %v1598
        %1602 = vmatprep.subr.bf16.mxu0 0
        %1603 = vmatpush1.bf16.msra.mxu0 0
        %1604 = vmatprep.subr.bf16.mxu0 0
        %1605 = vmatpush1.bf16.msra.mxu0 0
        %1606 = vmatprep.subr.bf16.mxu0 0
        %1607 = vmatpush1.bf16.msra.mxu0 0
        %1608 = vmatprep.subr.bf16.mxu0 0
        %1609 = vmatpush1.bf16.msra.mxu0 0
        %1610 = vmatprep.subr.bf16.mxu0 0
        %1611 = vmatpush1.bf16.msra.mxu0 0
        %1612 = vmatprep.subr.bf16.mxu0 0
        %1613 = vmatpush1.bf16.msra.mxu0 0
        %1614 = vmatprep.subr.bf16.mxu0 0
        %1615 = vmatpush1.bf16.msra.mxu0 0
        %1616 = vmatprep.subr.bf16.mxu0 0
        %1617 = vmatpush1.bf16.msra.mxu0 0
        %1618 = vmatprep.subr.bf16.mxu0 0
        %1619 = vmatpush1.bf16.msra.mxu0 0
        %1620 = vmatprep.subr.bf16.mxu0 0
        %1621 = vmatpush1.bf16.msra.mxu0 0
        %1622 = vmatprep.subr.bf16.mxu0 0
        %1623 = vmatpush1.bf16.msra.mxu0 0
        %1624 = vmatprep.subr.bf16.mxu0 0
        %1625 = vmatpush1.bf16.msra.mxu0 0
        %1626 = vmatprep.subr.bf16.mxu0 0
        %1627 = vmatpush1.bf16.msra.mxu0 0
        %1628 = vmatprep.subr.bf16.mxu0 0
        %1629 = vmatpush1.bf16.msra.mxu0 0
        %1630 = vmatprep.subr.bf16.mxu0 0
        %1631 = vmatpush1.bf16.msra.mxu0 0
        %1632 = vmatprep.mubr.bf16.mxu0 0
        %1633 = vmatmul.mubr.bf16.gmra.mrb[0].mxu0 %v1595
        %v1634 = vpop.f32.mrb[0].mxu0
        %v1635 = vadd.f32 0.0, %v1634
        %v1636 = vpop.f32.mrb[0].mxu0
        %v1637 = vpop.f32.mrb[0].mxu0
        %v1638 = vpop.f32.mrb[0].mxu0
        %1639 = vdwg.mxu0
        %v1641 = vsel %vm1264, %v1500, 0
        %v1644 = vsel %vm1504, %v1263, 0
        %1646 = vmatprep.subr.bf16.mxu0 0
        %1647 = vmatpush1.bf16.msra.mxu0 %v1644
        %1648 = vmatprep.subr.bf16.mxu0 0
        %1649 = vmatpush1.bf16.msra.mxu0 0
        %1650 = vmatprep.subr.bf16.mxu0 0
        %1651 = vmatpush1.bf16.msra.mxu0 0
        %1652 = vmatprep.subr.bf16.mxu0 0
        %1653 = vmatpush1.bf16.msra.mxu0 0
        %1654 = vmatprep.subr.bf16.mxu0 0
        %1655 = vmatpush1.bf16.msra.mxu0 0
        %1656 = vmatprep.subr.bf16.mxu0 0
        %1657 = vmatpush1.bf16.msra.mxu0 0
        %1658 = vmatprep.subr.bf16.mxu0 0
        %1659 = vmatpush1.bf16.msra.mxu0 0
        %1660 = vmatprep.subr.bf16.mxu0 0
        %1661 = vmatpush1.bf16.msra.mxu0 0
        %1662 = vmatprep.subr.bf16.mxu0 0
        %1663 = vmatpush1.bf16.msra.mxu0 0
        %1664 = vmatprep.subr.bf16.mxu0 0
        %1665 = vmatpush1.bf16.msra.mxu0 0
        %1666 = vmatprep.subr.bf16.mxu0 0
        %1667 = vmatpush1.bf16.msra.mxu0 0
        %1668 = vmatprep.subr.bf16.mxu0 0
        %1669 = vmatpush1.bf16.msra.mxu0 0
        %1670 = vmatprep.subr.bf16.mxu0 0
        %1671 = vmatpush1.bf16.msra.mxu0 0
        %1672 = vmatprep.subr.bf16.mxu0 0
        %1673 = vmatpush1.bf16.msra.mxu0 0
        %1674 = vmatprep.subr.bf16.mxu0 0
        %1675 = vmatpush1.bf16.msra.mxu0 0
        %1676 = vmatprep.subr.bf16.mxu0 0
        %1677 = vmatpush1.bf16.msra.mxu0 0
        %1678 = vmatprep.mubr.bf16.mxu0 0
        %1679 = vmatmul.mubr.bf16.gmra.mrb[0].mxu0 %v1641
        %v1680 = vpop.f32.mrb[0].mxu0
        %v1681 = vadd.f32 0.0, %v1680
        %v1682 = vpop.f32.mrb[0].mxu0
        %v1683 = vpop.f32.mrb[0].mxu0
        %v1684 = vpop.f32.mrb[0].mxu0
        %1685 = vdwg.mxu0
        %v1686 = vcombine.low %v1543, %v1635
        %v1687 = vcombine.high %v1543, %v1635
        %v1689 = vunpack.c.l.s4 1983009808
        %v1690 = vunpack.c.0.s8 %v1689
        %v1691 = vlaneseq
        %v1692 = vshrl.u32 %v1691, 7
        %v1693 = vsub.s32 %v1690, %v1692
        %v1694 = vrot.slane %v1686, %v1693
        %v1696 = vunpack.c.l.s4 1983009808
        %v1697 = vunpack.c.0.s8 %v1696
        %v1698 = vlaneseq
        %v1699 = vshrl.u32 %v1698, 7
        %v1700 = vsub.s32 %v1697, %v1699
        %v1701 = vrot.slane %v1687, %v1700
        %v1702 = vcombine.low %v1589, %v1681
        %v1703 = vcombine.high %v1589, %v1681
        %v1705 = vunpack.c.l.s4 1983009808
        %v1706 = vunpack.c.0.s8 %v1705
        %v1707 = vlaneseq
        %v1708 = vshrl.u32 %v1707, 7
        %v1709 = vsub.s32 %v1706, %v1708
        %v1710 = vrot.slane %v1702, %v1709
        %v1712 = vunpack.c.l.s4 1983009808
        %v1713 = vunpack.c.0.s8 %v1712
        %v1714 = vlaneseq
        %v1715 = vshrl.u32 %v1714, 7
        %v1716 = vsub.s32 %v1713, %v1715
        %v1717 = vrot.slane %v1703, %v1716
        %v1718 = vcombine.low %v1694, %v1710
        %v1719 = vcombine.high %v1694, %v1710
        %v1721 = vunpack.c.l.s4 1934713408
        %v1722 = vunpack.c.0.s8 %v1721
        %v1723 = vlaneseq
        %v1724 = vshrl.u32 %v1723, 7
        %v1725 = vsub.s32 %v1722, %v1724
        %v1726 = vrot.slane %v1718, %v1725
        %v1728 = vunpack.c.l.s4 1934713408
        %v1729 = vunpack.c.0.s8 %v1728
        %v1730 = vlaneseq
        %v1731 = vshrl.u32 %v1730, 7
        %v1732 = vsub.s32 %v1729, %v1731
        %v1733 = vrot.slane %v1719, %v1732
        %v1734 = vcombine.low %v1701, %v1717
        %v1735 = vcombine.high %v1701, %v1717
        %v1737 = vunpack.c.l.s4 1934713408
        %v1738 = vunpack.c.0.s8 %v1737
        %v1739 = vlaneseq
        %v1740 = vshrl.u32 %v1739, 7
        %v1741 = vsub.s32 %v1738, %v1740
        %v1742 = vrot.slane %v1734, %v1741
        %v1744 = vunpack.c.l.s4 1934713408
        %v1745 = vunpack.c.0.s8 %v1744
        %v1746 = vlaneseq
        %v1747 = vshrl.u32 %v1746, 7
        %v1748 = vsub.s32 %v1745, %v1747
        %v1749 = vrot.slane %v1735, %v1748
        %v1750 = vcombine.high %v1726, 0.0
        %v1751 = vcombine.high %v1733, 0.0
        %v1752 = vcombine.high %v1742, 0.0
        %v1753 = vcombine.high %v1749, 0.0
        %v1754 = vcombine.low %v1726, %v1733
        %v1756 = vunpack.c.l.s4 1983009808
        %v1757 = vunpack.c.0.s8 %v1756
        %v1758 = vlaneseq
        %v1759 = vshrl.u32 %v1758, 7
        %v1760 = vsub.s32 %v1757, %v1759
        %v1761 = vrot.slane %v1754, %v1760
        %v1762 = vcombine.low %v1750, %v1751
        %v1764 = vunpack.c.l.s4 1983009808
        %v1765 = vunpack.c.0.s8 %v1764
        %v1766 = vlaneseq
        %v1767 = vshrl.u32 %v1766, 7
        %v1768 = vsub.s32 %v1765, %v1767
        %v1769 = vrot.slane %v1762, %v1768
        %v1770 = vcombine.low %v1742, %v1749
        %v1772 = vunpack.c.l.s4 1983009808
        %v1773 = vunpack.c.0.s8 %v1772
        %v1774 = vlaneseq
        %v1775 = vshrl.u32 %v1774, 7
        %v1776 = vsub.s32 %v1773, %v1775
        %v1777 = vrot.slane %v1770, %v1776
        %v1778 = vcombine.low %v1752, %v1753
        %v1780 = vunpack.c.l.s4 1983009808
        %v1781 = vunpack.c.0.s8 %v1780
        %v1782 = vlaneseq
        %v1783 = vshrl.u32 %v1782, 7
        %v1784 = vsub.s32 %v1781, %v1783
        %v1785 = vrot.slane %v1778, %v1784
        %v1786 = vcombine.low %v1761, %v1769
        %v1787 = vcombine.high %v1761, %v1769
        %v1789 = vunpack.c.l.s4 1934713408
        %v1790 = vunpack.c.0.s8 %v1789
        %v1791 = vlaneseq
        %v1792 = vshrl.u32 %v1791, 7
        %v1793 = vsub.s32 %v1790, %v1792
        %v1794 = vrot.slane %v1786, %v1793
        %v1796 = vunpack.c.l.s4 1934713408
        %v1797 = vunpack.c.0.s8 %v1796
        %v1798 = vlaneseq
        %v1799 = vshrl.u32 %v1798, 7
        %v1800 = vsub.s32 %v1797, %v1799
        %v1801 = vrot.slane %v1787, %v1800
        %v1802 = vcombine.low %v1777, %v1785
        %v1803 = vcombine.high %v1777, %v1785
        %v1805 = vunpack.c.l.s4 1934713408
        %v1806 = vunpack.c.0.s8 %v1805
        %v1807 = vlaneseq
        %v1808 = vshrl.u32 %v1807, 7
        %v1809 = vsub.s32 %v1806, %v1808
        %v1810 = vrot.slane %v1802, %v1809
        %v1812 = vunpack.c.l.s4 1934713408
        %v1813 = vunpack.c.0.s8 %v1812
        %v1814 = vlaneseq
        %v1815 = vshrl.u32 %v1814, 7
        %v1816 = vsub.s32 %v1813, %v1815
        %v1817 = vrot.slane %v1803, %v1816
        %v1818 = vcombine.low %v1794, %v1810
        %v1819 = vcombine.high %v1794, %v1810
        %v1820 = vcombine.low %v1801, %v1817
        %v1821 = vcombine.high %v1801, %v1817
        %1823 = vrot.lane.b32.xlu0 %v1819, 8
        %v1824 = vpop.permute.xlu0 %1823
        %1827 = vrot.lane.b32.xlu0 %v1820, 16
        %v1828 = vpop.permute.xlu0 %1827
        %1831 = vrot.lane.b32.xlu0 %v1821, 24
        %v1832 = vpop.permute.xlu0 %1831
        %v1834 = vsel %vm1264, %v1818, %v1824
        %vm1835 = vcmask 130048
        %v1836 = vsel %vm1835, %v1834, %v1828
        %vm1837 = vcmask 195584
        %v1838 = vsel %vm1837, %v1836, %v1832
        %v1839 = vpack.c.bf16 %v1838, %v1838
        %v1840 = vlaneseq
        %v1841 = vshrl.u32 %v1840, 7
        %v1842 = vsub.s32 0, %v1841
        %v1843 = vrot.slane %v695, %v1842
        %v1848 = vunpack.c.l.b16 %v799
        %v1849 = vunpack.c.l.b16 %v800
        %v1850 = vunpack.c.l.b16 %v801
        %v1851 = vunpack.c.l.b16 %v802
        %v1852 = vpack.c.b16 %v1849, %v1848
        %v1853 = vpack.c.b16 %v1851, %v1850
        %v1857 = vsel %vm704, %v1839, 0
        %1859 = vmatprep.subr.bf16.mxu0 0
        %1860 = vmatpush1.bf16.msra.mxu0 %v1852
        %1861 = vmatprep.subr.bf16.mxu0 0
        %1862 = vmatpush1.bf16.msra.mxu0 %v1853
        %1863 = vmatprep.subr.bf16.mxu0 0
        %1864 = vmatpush1.bf16.msra.mxu0 0
        %1865 = vmatprep.subr.bf16.mxu0 0
        %1866 = vmatpush1.bf16.msra.mxu0 0
        %1867 = vmatprep.subr.bf16.mxu0 0
        %1868 = vmatpush1.bf16.msra.mxu0 0
        %1869 = vmatprep.subr.bf16.mxu0 0
        %1870 = vmatpush1.bf16.msra.mxu0 0
        %1871 = vmatprep.subr.bf16.mxu0 0
        %1872 = vmatpush1.bf16.msra.mxu0 0
        %1873 = vmatprep.subr.bf16.mxu0 0
        %1874 = vmatpush1.bf16.msra.mxu0 0
        %1875 = vmatprep.subr.bf16.mxu0 0
        %1876 = vmatpush1.bf16.msra.mxu0 0
        %1877 = vmatprep.subr.bf16.mxu0 0
        %1878 = vmatpush1.bf16.msra.mxu0 0
        %1879 = vmatprep.subr.bf16.mxu0 0
        %1880 = vmatpush1.bf16.msra.mxu0 0
        %1881 = vmatprep.subr.bf16.mxu0 0
        %1882 = vmatpush1.bf16.msra.mxu0 0
        %1883 = vmatprep.subr.bf16.mxu0 0
        %1884 = vmatpush1.bf16.msra.mxu0 0
        %1885 = vmatprep.subr.bf16.mxu0 0
        %1886 = vmatpush1.bf16.msra.mxu0 0
        %1887 = vmatprep.subr.bf16.mxu0 0
        %1888 = vmatpush1.bf16.msra.mxu0 0
        %1889 = vmatprep.subr.bf16.mxu0 0
        %1890 = vmatpush1.bf16.msra.mxu0 0
        %1891 = vmatprep.mubr.bf16.mxu0 0
        %1892 = vmatmul.mubr.bf16.gmra.mrb[0].mxu0 %v1857
        %v1893 = vpop.f32.mrb[0].mxu0
        %v1894 = vadd.f32 %v1843, %v1893
        %v1895 = vpop.f32.mrb[0].mxu0
        %v1896 = vpop.f32.mrb[0].mxu0
        %v1897 = vpop.f32.mrb[0].mxu0
        %1898 = vdwg.mxu0
        %v1899 = vadd.f32 %v692, %v1894
        %s1900 = sld [smem:[#allocation2 + $0x80]]
        %s1901 = sld [smem:[#allocation2 + $0x81]]
        %v1902 = vsel %vm704, %v1899, 0.0
        %1903 = vadd.xlane.f32.xlu0 %v1902
        %v1904 = vpop.xlane.xlu0 %1903
        %v1905 = vmul.f32 %v1904, %v708
        %v1906 = vsub.f32 %v1899, %v1905
        %v1907 = vmul.f32 %v1906, %v1906
        %v1908 = vsel %vm704, %v1907, 0.0
        %1909 = vadd.xlane.f32.xlu0 %v1908
        %v1910 = vpop.xlane.xlu0 %1909
        %v1911 = vmul.f32 %v1910, %v715
        %v1912 = vstv %s1900
        %v1913 = vmul.f32 %v1912, %v1906
        %v1914 = vrsqrt.pop %v1911
        %v1915 = vmul.f32 %v1911, %v1914
        %vm1916 = vcmp.eq.f32.partialorder %v1911, inf
        %v1917 = vsel %vm1916, %v1911, %v1915
        %vm1918 = vcmp.eq.f32.partialorder %v1911, 0.0
        %v1919 = vand.u32 %v1911, 2147483648
        %v1920 = vsel %vm1918, %v1919, %v1917
        %v1921 = vadd.f32 %v1920, 1e-06
        %v1922 = vrcp.pop %v1921
        %v1923 = vmul.f32 %v1913, %v1922
        %v1924 = vstv %s1901
        %v1925 = vadd.f32 %v1923, %v1924
        %v1926 = vpack.c.bf16 %v1925, %v1925
        %v1927 = vld [vmem:[#allocation10] sm:$0xf]
        %v1928 = vld [vmem:[#allocation10 + $0x4] sm:$0xf]
        %v1929 = vld [vmem:[#allocation10 + $0x8] sm:$0xf]
        %v1930 = vld [vmem:[#allocation10 + $0xc] sm:$0xf]
        %v1931 = vlaneseq
        %v1932 = vshrl.u32 %v1931, 7
        %v1933 = vsub.s32 1, %v1932
        %v1934 = vrot.slane %v695, %v1933
        %v1939 = vunpack.c.l.b16 %v1927
        %v1940 = vunpack.c.l.b16 %v1928
        %v1941 = vunpack.c.l.b16 %v1929
        %v1942 = vunpack.c.l.b16 %v1930
        %v1943 = vpack.c.b16 %v1940, %v1939
        %v1944 = vpack.c.b16 %v1942, %v1941
        %v1948 = vsel %vm704, %v1926, 0
        %1950 = vmatprep.subr.bf16.mxu0 0
        %1951 = vmatpush1.bf16.msra.mxu0 %v1943
        %1952 = vmatprep.subr.bf16.mxu0 0
        %1953 = vmatpush1.bf16.msra.mxu0 %v1944
        %1954 = vmatprep.subr.bf16.mxu0 0
        %1955 = vmatpush1.bf16.msra.mxu0 0
        %1956 = vmatprep.subr.bf16.mxu0 0
        %1957 = vmatpush1.bf16.msra.mxu0 0
        %1958 = vmatprep.subr.bf16.mxu0 0
        %1959 = vmatpush1.bf16.msra.mxu0 0
        %1960 = vmatprep.subr.bf16.mxu0 0
        %1961 = vmatpush1.bf16.msra.mxu0 0
        %1962 = vmatprep.subr.bf16.mxu0 0
        %1963 = vmatpush1.bf16.msra.mxu0 0
        %1964 = vmatprep.subr.bf16.mxu0 0
        %1965 = vmatpush1.bf16.msra.mxu0 0
        %1966 = vmatprep.subr.bf16.mxu0 0
        %1967 = vmatpush1.bf16.msra.mxu0 0
        %1968 = vmatprep.subr.bf16.mxu0 0
        %1969 = vmatpush1.bf16.msra.mxu0 0
        %1970 = vmatprep.subr.bf16.mxu0 0
        %1971 = vmatpush1.bf16.msra.mxu0 0
        %1972 = vmatprep.subr.bf16.mxu0 0
        %1973 = vmatpush1.bf16.msra.mxu0 0
        %1974 = vmatprep.subr.bf16.mxu0 0
        %1975 = vmatpush1.bf16.msra.mxu0 0
        %1976 = vmatprep.subr.bf16.mxu0 0
        %1977 = vmatpush1.bf16.msra.mxu0 0
        %1978 = vmatprep.subr.bf16.mxu0 0
        %1979 = vmatpush1.bf16.msra.mxu0 0
        %1980 = vmatprep.subr.bf16.mxu0 0
        %1981 = vmatpush1.bf16.msra.mxu0 0
        %1982 = vmatprep.mubr.bf16.mxu0 0
        %1983 = vmatmul.mubr.bf16.gmra.mrb[0].mxu0 %v1948
        %v1984 = vpop.f32.mrb[0].mxu0
        %v1985 = vadd.f32 %v1934, %v1984
        %v1986 = vpop.f32.mrb[0].mxu0
        %v1987 = vpop.f32.mrb[0].mxu0
        %v1988 = vpop.f32.mrb[0].mxu0
        %1989 = vdwg.mxu0
        %v1990 = vmul.f32 %v1985, 0.35355338
        %v1991 = vpack.c.bf16 %v694, %v693
        %v1992 = vld [vmem:[#allocation12] sm:$0xf]
        %v1993 = vld [vmem:[#allocation12 + $0x4] sm:$0xf]
        %v1994 = vld [vmem:[#allocation12 + $0x8] sm:$0xf]
        %v1995 = vld [vmem:[#allocation12 + $0xc] sm:$0xf]
        %v1996 = vld [vmem:[%s13] sm:$0x1]
        %v1998 = vlaneseq
        %v1999 = vshrl.u32 %v1998, 7
        %v2000 = vsub.s32 0, %v1999
        %v2001 = vrot.slane %v1996, %v2000
        %v2007 = vunpack.c.l.b16 %v1992
        %v2008 = vunpack.c.l.b16 %v1993
        %v2009 = vunpack.c.l.b16 %v1994
        %v2010 = vunpack.c.l.b16 %v1995
        %v2011 = vpack.c.b16 %v2008, %v2007
        %v2012 = vpack.c.b16 %v2010, %v2009
        %v2016 = vsel %vm704, %v1991, 0
        %2018 = vmatprep.subr.bf16.mxu0 0
        %2019 = vmatpush1.bf16.msra.mxu0 %v2011
        %2020 = vmatprep.subr.bf16.mxu0 0
        %2021 = vmatpush1.bf16.msra.mxu0 %v2012
        %2022 = vmatprep.subr.bf16.mxu0 0
        %2023 = vmatpush1.bf16.msra.mxu0 0
        %2024 = vmatprep.subr.bf16.mxu0 0
        %2025 = vmatpush1.bf16.msra.mxu0 0
        %2026 = vmatprep.subr.bf16.mxu0 0
        %2027 = vmatpush1.bf16.msra.mxu0 0
        %2028 = vmatprep.subr.bf16.mxu0 0
        %2029 = vmatpush1.bf16.msra.mxu0 0
        %2030 = vmatprep.subr.bf16.mxu0 0
        %2031 = vmatpush1.bf16.msra.mxu0 0
        %2032 = vmatprep.subr.bf16.mxu0 0
        %2033 = vmatpush1.bf16.msra.mxu0 0
        %2034 = vmatprep.subr.bf16.mxu0 0
        %2035 = vmatpush1.bf16.msra.mxu0 0
        %2036 = vmatprep.subr.bf16.mxu0 0
        %2037 = vmatpush1.bf16.msra.mxu0 0
        %2038 = vmatprep.subr.bf16.mxu0 0
        %2039 = vmatpush1.bf16.msra.mxu0 0
        %2040 = vmatprep.subr.bf16.mxu0 0
        %2041 = vmatpush1.bf16.msra.mxu0 0
        %2042 = vmatprep.subr.bf16.mxu0 0
        %2043 = vmatpush1.bf16.msra.mxu0 0
        %2044 = vmatprep.subr.bf16.mxu0 0
        %2045 = vmatpush1.bf16.msra.mxu0 0
        %2046 = vmatprep.subr.bf16.mxu0 0
        %2047 = vmatpush1.bf16.msra.mxu0 0
        %2048 = vmatprep.subr.bf16.mxu0 0
        %2049 = vmatpush1.bf16.msra.mxu0 0
        %2050 = vmatprep.mubr.bf16.mxu0 0
        %2051 = vmatmul.mubr.bf16.gmra.mrb[0].mxu0 %v2016
        %v2052 = vpop.f32.mrb[0].mxu0
        %v2053 = vadd.f32 %v2001, %v2052
        %v2054 = vpop.f32.mrb[0].mxu0
        %v2055 = vpop.f32.mrb[0].mxu0
        %v2056 = vadd.f32 %v2001, %v2055
        %v2057 = vpop.f32.mrb[0].mxu0
        %2058 = vdwg.mxu0
        %v2059 = vld [vmem:[#allocation13] sm:$0xf]
        %v2060 = vld [vmem:[#allocation13 + $0x4] sm:$0xf]
        %v2061 = vld [vmem:[#allocation13 + $0x8] sm:$0xf]
        %v2062 = vld [vmem:[#allocation13 + $0xc] sm:$0xf]
        %2064 = vrot.lane.b32.xlu0 %v1990, 120
        %v2065 = vpop.permute.xlu0 %2064
        %2067 = vrot.lane.b32.xlu0 %v1990, 112
        %v2068 = vpop.permute.xlu0 %2067
        %2070 = vrot.lane.b32.xlu0 %v1990, 104
        %v2071 = vpop.permute.xlu0 %2070
        %v2073 = vcombine.low %v1990, %v2068
        %v2074 = vcombine.high %v1990, %v2068
        %v2076 = vunpack.c.l.s4 1983009808
        %v2077 = vunpack.c.0.s8 %v2076
        %v2078 = vlaneseq
        %v2079 = vshrl.u32 %v2078, 7
        %v2080 = vsub.s32 %v2077, %v2079
        %v2081 = vrot.slane %v2073, %v2080
        %v2083 = vunpack.c.l.s4 1983009808
        %v2084 = vunpack.c.0.s8 %v2083
        %v2085 = vlaneseq
        %v2086 = vshrl.u32 %v2085, 7
        %v2087 = vsub.s32 %v2084, %v2086
        %v2088 = vrot.slane %v2074, %v2087
        %v2089 = vcombine.low %v2065, %v2071
        %v2090 = vcombine.high %v2065, %v2071
        %v2092 = vunpack.c.l.s4 1983009808
        %v2093 = vunpack.c.0.s8 %v2092
        %v2094 = vlaneseq
        %v2095 = vshrl.u32 %v2094, 7
        %v2096 = vsub.s32 %v2093, %v2095
        %v2097 = vrot.slane %v2089, %v2096
        %v2099 = vunpack.c.l.s4 1983009808
        %v2100 = vunpack.c.0.s8 %v2099
        %v2101 = vlaneseq
        %v2102 = vshrl.u32 %v2101, 7
        %v2103 = vsub.s32 %v2100, %v2102
        %v2104 = vrot.slane %v2090, %v2103
        %v2105 = vcombine.low %v2081, %v2097
        %v2106 = vcombine.high %v2081, %v2097
        %v2108 = vunpack.c.l.s4 1934713408
        %v2109 = vunpack.c.0.s8 %v2108
        %v2110 = vlaneseq
        %v2111 = vshrl.u32 %v2110, 7
        %v2112 = vsub.s32 %v2109, %v2111
        %v2113 = vrot.slane %v2105, %v2112
        %v2115 = vunpack.c.l.s4 1934713408
        %v2116 = vunpack.c.0.s8 %v2115
        %v2117 = vlaneseq
        %v2118 = vshrl.u32 %v2117, 7
        %v2119 = vsub.s32 %v2116, %v2118
        %v2120 = vrot.slane %v2106, %v2119
        %v2121 = vcombine.low %v2088, %v2104
        %v2122 = vcombine.high %v2088, %v2104
        %v2124 = vunpack.c.l.s4 1934713408
        %v2125 = vunpack.c.0.s8 %v2124
        %v2126 = vlaneseq
        %v2127 = vshrl.u32 %v2126, 7
        %v2128 = vsub.s32 %v2125, %v2127
        %v2129 = vrot.slane %v2121, %v2128
        %v2131 = vunpack.c.l.s4 1934713408
        %v2132 = vunpack.c.0.s8 %v2131
        %v2133 = vlaneseq
        %v2134 = vshrl.u32 %v2133, 7
        %v2135 = vsub.s32 %v2132, %v2134
        %v2136 = vrot.slane %v2122, %v2135
        %v2137 = vcombine.high %v2113, 0.0
        %v2138 = vcombine.high %v2120, 0.0
        %v2139 = vcombine.high %v2129, 0.0
        %v2140 = vcombine.high %v2136, 0.0
        %v2141 = vcombine.low %v2113, %v2120
        %v2143 = vunpack.c.l.s4 1983009808
        %v2144 = vunpack.c.0.s8 %v2143
        %v2145 = vlaneseq
        %v2146 = vshrl.u32 %v2145, 7
        %v2147 = vsub.s32 %v2144, %v2146
        %v2148 = vrot.slane %v2141, %v2147
        %v2149 = vcombine.low %v2137, %v2138
        %v2151 = vunpack.c.l.s4 1983009808
        %v2152 = vunpack.c.0.s8 %v2151
        %v2153 = vlaneseq
        %v2154 = vshrl.u32 %v2153, 7
        %v2155 = vsub.s32 %v2152, %v2154
        %v2156 = vrot.slane %v2149, %v2155
        %v2157 = vcombine.low %v2129, %v2136
        %v2159 = vunpack.c.l.s4 1983009808
        %v2160 = vunpack.c.0.s8 %v2159
        %v2161 = vlaneseq
        %v2162 = vshrl.u32 %v2161, 7
        %v2163 = vsub.s32 %v2160, %v2162
        %v2164 = vrot.slane %v2157, %v2163
        %v2165 = vcombine.low %v2139, %v2140
        %v2167 = vunpack.c.l.s4 1983009808
        %v2168 = vunpack.c.0.s8 %v2167
        %v2169 = vlaneseq
        %v2170 = vshrl.u32 %v2169, 7
        %v2171 = vsub.s32 %v2168, %v2170
        %v2172 = vrot.slane %v2165, %v2171
        %v2173 = vcombine.low %v2148, %v2156
        %v2174 = vcombine.high %v2148, %v2156
        %v2176 = vunpack.c.l.s4 1934713408
        %v2177 = vunpack.c.0.s8 %v2176
        %v2178 = vlaneseq
        %v2179 = vshrl.u32 %v2178, 7
        %v2180 = vsub.s32 %v2177, %v2179
        %v2181 = vrot.slane %v2173, %v2180
        %v2183 = vunpack.c.l.s4 1934713408
        %v2184 = vunpack.c.0.s8 %v2183
        %v2185 = vlaneseq
        %v2186 = vshrl.u32 %v2185, 7
        %v2187 = vsub.s32 %v2184, %v2186
        %v2188 = vrot.slane %v2174, %v2187
        %v2189 = vcombine.low %v2164, %v2172
        %v2190 = vcombine.high %v2164, %v2172
        %v2192 = vunpack.c.l.s4 1934713408
        %v2193 = vunpack.c.0.s8 %v2192
        %v2194 = vlaneseq
        %v2195 = vshrl.u32 %v2194, 7
        %v2196 = vsub.s32 %v2193, %v2195
        %v2197 = vrot.slane %v2189, %v2196
        %v2199 = vunpack.c.l.s4 1934713408
        %v2200 = vunpack.c.0.s8 %v2199
        %v2201 = vlaneseq
        %v2202 = vshrl.u32 %v2201, 7
        %v2203 = vsub.s32 %v2200, %v2202
        %v2204 = vrot.slane %v2190, %v2203
        %v2205 = vcombine.low %v2181, %v2197
        %v2206 = vcombine.high %v2181, %v2197
        %v2207 = vcombine.low %v2188, %v2204
        %v2208 = vcombine.high %v2188, %v2204
        %v2209 = vpack.c.bf16 %v2205, %v2205
        %v2210 = vpack.c.bf16 %v2206, %v2206
        %v2211 = vpack.c.bf16 %v2207, %v2207
        %v2212 = vpack.c.bf16 %v2208, %v2208
        %2215 = vrot.lane.b32.xlu0 %v2053, 120
        %v2216 = vpop.permute.xlu0 %2215
        %2217 = vrot.lane.b32.xlu0 %v2056, 120
        %v2218 = vpop.permute.xlu0 %2217
        %2221 = vrot.lane.b32.xlu0 %v2053, 112
        %v2222 = vpop.permute.xlu0 %2221
        %2223 = vrot.lane.b32.xlu0 %v2056, 112
        %v2224 = vpop.permute.xlu0 %2223
        %2227 = vrot.lane.b32.xlu0 %v2053, 104
        %v2228 = vpop.permute.xlu0 %2227
        %2229 = vrot.lane.b32.xlu0 %v2056, 104
        %v2230 = vpop.permute.xlu0 %2229
        %v2233 = vcombine.low %v2053, %v2222
        %v2234 = vcombine.high %v2053, %v2222
        %v2236 = vunpack.c.l.s4 1983009808
        %v2237 = vunpack.c.0.s8 %v2236
        %v2238 = vlaneseq
        %v2239 = vshrl.u32 %v2238, 7
        %v2240 = vsub.s32 %v2237, %v2239
        %v2241 = vrot.slane %v2233, %v2240
        %v2243 = vunpack.c.l.s4 1983009808
        %v2244 = vunpack.c.0.s8 %v2243
        %v2245 = vlaneseq
        %v2246 = vshrl.u32 %v2245, 7
        %v2247 = vsub.s32 %v2244, %v2246
        %v2248 = vrot.slane %v2234, %v2247
        %v2249 = vcombine.low %v2216, %v2228
        %v2250 = vcombine.high %v2216, %v2228
        %v2252 = vunpack.c.l.s4 1983009808
        %v2253 = vunpack.c.0.s8 %v2252
        %v2254 = vlaneseq
        %v2255 = vshrl.u32 %v2254, 7
        %v2256 = vsub.s32 %v2253, %v2255
        %v2257 = vrot.slane %v2249, %v2256
        %v2259 = vunpack.c.l.s4 1983009808
        %v2260 = vunpack.c.0.s8 %v2259
        %v2261 = vlaneseq
        %v2262 = vshrl.u32 %v2261, 7
        %v2263 = vsub.s32 %v2260, %v2262
        %v2264 = vrot.slane %v2250, %v2263
        %v2265 = vcombine.low %v2241, %v2257
        %v2266 = vcombine.high %v2241, %v2257
        %v2268 = vunpack.c.l.s4 1934713408
        %v2269 = vunpack.c.0.s8 %v2268
        %v2270 = vlaneseq
        %v2271 = vshrl.u32 %v2270, 7
        %v2272 = vsub.s32 %v2269, %v2271
        %v2273 = vrot.slane %v2265, %v2272
        %v2275 = vunpack.c.l.s4 1934713408
        %v2276 = vunpack.c.0.s8 %v2275
        %v2277 = vlaneseq
        %v2278 = vshrl.u32 %v2277, 7
        %v2279 = vsub.s32 %v2276, %v2278
        %v2280 = vrot.slane %v2266, %v2279
        %v2281 = vcombine.low %v2248, %v2264
        %v2282 = vcombine.high %v2248, %v2264
        %v2284 = vunpack.c.l.s4 1934713408
        %v2285 = vunpack.c.0.s8 %v2284
        %v2286 = vlaneseq
        %v2287 = vshrl.u32 %v2286, 7
        %v2288 = vsub.s32 %v2285, %v2287
        %v2289 = vrot.slane %v2281, %v2288
        %v2291 = vunpack.c.l.s4 1934713408
        %v2292 = vunpack.c.0.s8 %v2291
        %v2293 = vlaneseq
        %v2294 = vshrl.u32 %v2293, 7
        %v2295 = vsub.s32 %v2292, %v2294
        %v2296 = vrot.slane %v2282, %v2295
        %v2297 = vcombine.high %v2273, 0.0
        %v2298 = vcombine.high %v2280, 0.0
        %v2299 = vcombine.high %v2289, 0.0
        %v2300 = vcombine.high %v2296, 0.0
        %v2301 = vcombine.low %v2056, %v2224
        %v2302 = vcombine.high %v2056, %v2224
        %v2304 = vunpack.c.l.s4 1983009808
        %v2305 = vunpack.c.0.s8 %v2304
        %v2306 = vlaneseq
        %v2307 = vshrl.u32 %v2306, 7
        %v2308 = vsub.s32 %v2305, %v2307
        %v2309 = vrot.slane %v2301, %v2308
        %v2311 = vunpack.c.l.s4 1983009808
        %v2312 = vunpack.c.0.s8 %v2311
        %v2313 = vlaneseq
        %v2314 = vshrl.u32 %v2313, 7
        %v2315 = vsub.s32 %v2312, %v2314
        %v2316 = vrot.slane %v2302, %v2315
        %v2317 = vcombine.low %v2218, %v2230
        %v2318 = vcombine.high %v2218, %v2230
        %v2320 = vunpack.c.l.s4 1983009808
        %v2321 = vunpack.c.0.s8 %v2320
        %v2322 = vlaneseq
        %v2323 = vshrl.u32 %v2322, 7
        %v2324 = vsub.s32 %v2321, %v2323
        %v2325 = vrot.slane %v2317, %v2324
        %v2327 = vunpack.c.l.s4 1983009808
        %v2328 = vunpack.c.0.s8 %v2327
        %v2329 = vlaneseq
        %v2330 = vshrl.u32 %v2329, 7
        %v2331 = vsub.s32 %v2328, %v2330
        %v2332 = vrot.slane %v2318, %v2331
        %v2333 = vcombine.low %v2309, %v2325
        %v2334 = vcombine.high %v2309, %v2325
        %v2336 = vunpack.c.l.s4 1934713408
        %v2337 = vunpack.c.0.s8 %v2336
        %v2338 = vlaneseq
        %v2339 = vshrl.u32 %v2338, 7
        %v2340 = vsub.s32 %v2337, %v2339
        %v2341 = vrot.slane %v2333, %v2340
        %v2343 = vunpack.c.l.s4 1934713408
        %v2344 = vunpack.c.0.s8 %v2343
        %v2345 = vlaneseq
        %v2346 = vshrl.u32 %v2345, 7
        %v2347 = vsub.s32 %v2344, %v2346
        %v2348 = vrot.slane %v2334, %v2347
        %v2349 = vcombine.low %v2316, %v2332
        %v2350 = vcombine.high %v2316, %v2332
        %v2352 = vunpack.c.l.s4 1934713408
        %v2353 = vunpack.c.0.s8 %v2352
        %v2354 = vlaneseq
        %v2355 = vshrl.u32 %v2354, 7
        %v2356 = vsub.s32 %v2353, %v2355
        %v2357 = vrot.slane %v2349, %v2356
        %v2359 = vunpack.c.l.s4 1934713408
        %v2360 = vunpack.c.0.s8 %v2359
        %v2361 = vlaneseq
        %v2362 = vshrl.u32 %v2361, 7
        %v2363 = vsub.s32 %v2360, %v2362
        %v2364 = vrot.slane %v2350, %v2363
        %v2365 = vcombine.high %v2341, 0.0
        %v2366 = vcombine.high %v2348, 0.0
        %v2367 = vcombine.high %v2357, 0.0
        %v2368 = vcombine.high %v2364, 0.0
        %v2369 = vcombine.low %v2273, %v2280
        %v2371 = vunpack.c.l.s4 1983009808
        %v2372 = vunpack.c.0.s8 %v2371
        %v2373 = vlaneseq
        %v2374 = vshrl.u32 %v2373, 7
        %v2375 = vsub.s32 %v2372, %v2374
        %v2376 = vrot.slane %v2369, %v2375
        %v2377 = vcombine.low %v2297, %v2298
        %v2379 = vunpack.c.l.s4 1983009808
        %v2380 = vunpack.c.0.s8 %v2379
        %v2381 = vlaneseq
        %v2382 = vshrl.u32 %v2381, 7
        %v2383 = vsub.s32 %v2380, %v2382
        %v2384 = vrot.slane %v2377, %v2383
        %v2385 = vcombine.low %v2289, %v2296
        %v2387 = vunpack.c.l.s4 1983009808
        %v2388 = vunpack.c.0.s8 %v2387
        %v2389 = vlaneseq
        %v2390 = vshrl.u32 %v2389, 7
        %v2391 = vsub.s32 %v2388, %v2390
        %v2392 = vrot.slane %v2385, %v2391
        %v2393 = vcombine.low %v2299, %v2300
        %v2395 = vunpack.c.l.s4 1983009808
        %v2396 = vunpack.c.0.s8 %v2395
        %v2397 = vlaneseq
        %v2398 = vshrl.u32 %v2397, 7
        %v2399 = vsub.s32 %v2396, %v2398
        %v2400 = vrot.slane %v2393, %v2399
        %v2401 = vcombine.low %v2376, %v2384
        %v2402 = vcombine.high %v2376, %v2384
        %v2404 = vunpack.c.l.s4 1934713408
        %v2405 = vunpack.c.0.s8 %v2404
        %v2406 = vlaneseq
        %v2407 = vshrl.u32 %v2406, 7
        %v2408 = vsub.s32 %v2405, %v2407
        %v2409 = vrot.slane %v2401, %v2408
        %v2411 = vunpack.c.l.s4 1934713408
        %v2412 = vunpack.c.0.s8 %v2411
        %v2413 = vlaneseq
        %v2414 = vshrl.u32 %v2413, 7
        %v2415 = vsub.s32 %v2412, %v2414
        %v2416 = vrot.slane %v2402, %v2415
        %v2417 = vcombine.low %v2392, %v2400
        %v2418 = vcombine.high %v2392, %v2400
        %v2420 = vunpack.c.l.s4 1934713408
        %v2421 = vunpack.c.0.s8 %v2420
        %v2422 = vlaneseq
        %v2423 = vshrl.u32 %v2422, 7
        %v2424 = vsub.s32 %v2421, %v2423
        %v2425 = vrot.slane %v2417, %v2424
        %v2427 = vunpack.c.l.s4 1934713408
        %v2428 = vunpack.c.0.s8 %v2427
        %v2429 = vlaneseq
        %v2430 = vshrl.u32 %v2429, 7
        %v2431 = vsub.s32 %v2428, %v2430
        %v2432 = vrot.slane %v2418, %v2431
        %v2433 = vcombine.low %v2409, %v2425
        %v2434 = vcombine.high %v2409, %v2425
        %v2435 = vcombine.low %v2416, %v2432
        %v2436 = vcombine.high %v2416, %v2432
        %v2437 = vcombine.low %v2341, %v2348
        %v2439 = vunpack.c.l.s4 1983009808
        %v2440 = vunpack.c.0.s8 %v2439
        %v2441 = vlaneseq
        %v2442 = vshrl.u32 %v2441, 7
        %v2443 = vsub.s32 %v2440, %v2442
        %v2444 = vrot.slane %v2437, %v2443
        %v2445 = vcombine.low %v2365, %v2366
        %v2447 = vunpack.c.l.s4 1983009808
        %v2448 = vunpack.c.0.s8 %v2447
        %v2449 = vlaneseq
        %v2450 = vshrl.u32 %v2449, 7
        %v2451 = vsub.s32 %v2448, %v2450
        %v2452 = vrot.slane %v2445, %v2451
        %v2453 = vcombine.low %v2357, %v2364
        %v2455 = vunpack.c.l.s4 1983009808
        %v2456 = vunpack.c.0.s8 %v2455
        %v2457 = vlaneseq
        %v2458 = vshrl.u32 %v2457, 7
        %v2459 = vsub.s32 %v2456, %v2458
        %v2460 = vrot.slane %v2453, %v2459
        %v2461 = vcombine.low %v2367, %v2368
        %v2463 = vunpack.c.l.s4 1983009808
        %v2464 = vunpack.c.0.s8 %v2463
        %v2465 = vlaneseq
        %v2466 = vshrl.u32 %v2465, 7
        %v2467 = vsub.s32 %v2464, %v2466
        %v2468 = vrot.slane %v2461, %v2467
        %v2469 = vcombine.low %v2444, %v2452
        %v2470 = vcombine.high %v2444, %v2452
        %v2472 = vunpack.c.l.s4 1934713408
        %v2473 = vunpack.c.0.s8 %v2472
        %v2474 = vlaneseq
        %v2475 = vshrl.u32 %v2474, 7
        %v2476 = vsub.s32 %v2473, %v2475
        %v2477 = vrot.slane %v2469, %v2476
        %v2479 = vunpack.c.l.s4 1934713408
        %v2480 = vunpack.c.0.s8 %v2479
        %v2481 = vlaneseq
        %v2482 = vshrl.u32 %v2481, 7
        %v2483 = vsub.s32 %v2480, %v2482
        %v2484 = vrot.slane %v2470, %v2483
        %v2485 = vcombine.low %v2460, %v2468
        %v2486 = vcombine.high %v2460, %v2468
        %v2488 = vunpack.c.l.s4 1934713408
        %v2489 = vunpack.c.0.s8 %v2488
        %v2490 = vlaneseq
        %v2491 = vshrl.u32 %v2490, 7
        %v2492 = vsub.s32 %v2489, %v2491
        %v2493 = vrot.slane %v2485, %v2492
        %v2495 = vunpack.c.l.s4 1934713408
        %v2496 = vunpack.c.0.s8 %v2495
        %v2497 = vlaneseq
        %v2498 = vshrl.u32 %v2497, 7
        %v2499 = vsub.s32 %v2496, %v2498
        %v2500 = vrot.slane %v2486, %v2499
        %v2501 = vcombine.low %v2477, %v2493
        %v2502 = vcombine.high %v2477, %v2493
        %v2503 = vcombine.low %v2484, %v2500
        %v2504 = vcombine.high %v2484, %v2500
        %v2505 = vpack.c.bf16 %v2501, %v2433
        %v2506 = vpack.c.bf16 %v2502, %v2434
        %v2507 = vpack.c.bf16 %v2503, %v2435
        %v2508 = vpack.c.bf16 %v2504, %v2436
        %2509 = vrot.lane.b32.xlu0 %v2053, 96
        %v2510 = vpop.permute.xlu0 %2509
        %2511 = vrot.lane.b32.xlu0 %v2056, 96
        %v2512 = vpop.permute.xlu0 %2511
        %2513 = vrot.lane.b32.xlu0 %v2216, 96
        %v2514 = vpop.permute.xlu0 %2513
        %2515 = vrot.lane.b32.xlu0 %v2218, 96
        %v2516 = vpop.permute.xlu0 %2515
        %2517 = vrot.lane.b32.xlu0 %v2222, 96
        %v2518 = vpop.permute.xlu0 %2517
        %2519 = vrot.lane.b32.xlu0 %v2224, 96
        %v2520 = vpop.permute.xlu0 %2519
        %2521 = vrot.lane.b32.xlu0 %v2228, 96
        %v2522 = vpop.permute.xlu0 %2521
        %2523 = vrot.lane.b32.xlu0 %v2230, 96
        %v2524 = vpop.permute.xlu0 %2523
        %v2533 = vcombine.low %v2510, %v2518
        %v2534 = vcombine.high %v2510, %v2518
        %v2536 = vunpack.c.l.s4 1983009808
        %v2537 = vunpack.c.0.s8 %v2536
        %v2538 = vlaneseq
        %v2539 = vshrl.u32 %v2538, 7
        %v2540 = vsub.s32 %v2537, %v2539
        %v2541 = vrot.slane %v2533, %v2540
        %v2543 = vunpack.c.l.s4 1983009808
        %v2544 = vunpack.c.0.s8 %v2543
        %v2545 = vlaneseq
        %v2546 = vshrl.u32 %v2545, 7
        %v2547 = vsub.s32 %v2544, %v2546
        %v2548 = vrot.slane %v2534, %v2547
        %v2549 = vcombine.low %v2514, %v2522
        %v2550 = vcombine.high %v2514, %v2522
        %v2552 = vunpack.c.l.s4 1983009808
        %v2553 = vunpack.c.0.s8 %v2552
        %v2554 = vlaneseq
        %v2555 = vshrl.u32 %v2554, 7
        %v2556 = vsub.s32 %v2553, %v2555
        %v2557 = vrot.slane %v2549, %v2556
        %v2559 = vunpack.c.l.s4 1983009808
        %v2560 = vunpack.c.0.s8 %v2559
        %v2561 = vlaneseq
        %v2562 = vshrl.u32 %v2561, 7
        %v2563 = vsub.s32 %v2560, %v2562
        %v2564 = vrot.slane %v2550, %v2563
        %v2565 = vcombine.low %v2541, %v2557
        %v2566 = vcombine.high %v2541, %v2557
        %v2568 = vunpack.c.l.s4 1934713408
        %v2569 = vunpack.c.0.s8 %v2568
        %v2570 = vlaneseq
        %v2571 = vshrl.u32 %v2570, 7
        %v2572 = vsub.s32 %v2569, %v2571
        %v2573 = vrot.slane %v2565, %v2572
        %v2575 = vunpack.c.l.s4 1934713408
        %v2576 = vunpack.c.0.s8 %v2575
        %v2577 = vlaneseq
        %v2578 = vshrl.u32 %v2577, 7
        %v2579 = vsub.s32 %v2576, %v2578
        %v2580 = vrot.slane %v2566, %v2579
        %v2581 = vcombine.low %v2548, %v2564
        %v2582 = vcombine.high %v2548, %v2564
        %v2584 = vunpack.c.l.s4 1934713408
        %v2585 = vunpack.c.0.s8 %v2584
        %v2586 = vlaneseq
        %v2587 = vshrl.u32 %v2586, 7
        %v2588 = vsub.s32 %v2585, %v2587
        %v2589 = vrot.slane %v2581, %v2588
        %v2591 = vunpack.c.l.s4 1934713408
        %v2592 = vunpack.c.0.s8 %v2591
        %v2593 = vlaneseq
        %v2594 = vshrl.u32 %v2593, 7
        %v2595 = vsub.s32 %v2592, %v2594
        %v2596 = vrot.slane %v2582, %v2595
        %v2597 = vcombine.high %v2573, 0.0
        %v2598 = vcombine.high %v2580, 0.0
        %v2599 = vcombine.high %v2589, 0.0
        %v2600 = vcombine.high %v2596, 0.0
        %v2601 = vcombine.low %v2512, %v2520
        %v2602 = vcombine.high %v2512, %v2520
        %v2604 = vunpack.c.l.s4 1983009808
        %v2605 = vunpack.c.0.s8 %v2604
        %v2606 = vlaneseq
        %v2607 = vshrl.u32 %v2606, 7
        %v2608 = vsub.s32 %v2605, %v2607
        %v2609 = vrot.slane %v2601, %v2608
        %v2611 = vunpack.c.l.s4 1983009808
        %v2612 = vunpack.c.0.s8 %v2611
        %v2613 = vlaneseq
        %v2614 = vshrl.u32 %v2613, 7
        %v2615 = vsub.s32 %v2612, %v2614
        %v2616 = vrot.slane %v2602, %v2615
        %v2617 = vcombine.low %v2516, %v2524
        %v2618 = vcombine.high %v2516, %v2524
        %v2620 = vunpack.c.l.s4 1983009808
        %v2621 = vunpack.c.0.s8 %v2620
        %v2622 = vlaneseq
        %v2623 = vshrl.u32 %v2622, 7
        %v2624 = vsub.s32 %v2621, %v2623
        %v2625 = vrot.slane %v2617, %v2624
        %v2627 = vunpack.c.l.s4 1983009808
        %v2628 = vunpack.c.0.s8 %v2627
        %v2629 = vlaneseq
        %v2630 = vshrl.u32 %v2629, 7
        %v2631 = vsub.s32 %v2628, %v2630
        %v2632 = vrot.slane %v2618, %v2631
        %v2633 = vcombine.low %v2609, %v2625
        %v2634 = vcombine.high %v2609, %v2625
        %v2636 = vunpack.c.l.s4 1934713408
        %v2637 = vunpack.c.0.s8 %v2636
        %v2638 = vlaneseq
        %v2639 = vshrl.u32 %v2638, 7
        %v2640 = vsub.s32 %v2637, %v2639
        %v2641 = vrot.slane %v2633, %v2640
        %v2643 = vunpack.c.l.s4 1934713408
        %v2644 = vunpack.c.0.s8 %v2643
        %v2645 = vlaneseq
        %v2646 = vshrl.u32 %v2645, 7
        %v2647 = vsub.s32 %v2644, %v2646
        %v2648 = vrot.slane %v2634, %v2647
        %v2649 = vcombine.low %v2616, %v2632
        %v2650 = vcombine.high %v2616, %v2632
        %v2652 = vunpack.c.l.s4 1934713408
        %v2653 = vunpack.c.0.s8 %v2652
        %v2654 = vlaneseq
        %v2655 = vshrl.u32 %v2654, 7
        %v2656 = vsub.s32 %v2653, %v2655
        %v2657 = vrot.slane %v2649, %v2656
        %v2659 = vunpack.c.l.s4 1934713408
        %v2660 = vunpack.c.0.s8 %v2659
        %v2661 = vlaneseq
        %v2662 = vshrl.u32 %v2661, 7
        %v2663 = vsub.s32 %v2660, %v2662
        %v2664 = vrot.slane %v2650, %v2663
        %v2665 = vcombine.high %v2641, 0.0
        %v2666 = vcombine.high %v2648, 0.0
        %v2667 = vcombine.high %v2657, 0.0
        %v2668 = vcombine.high %v2664, 0.0
        %v2669 = vcombine.low %v2573, %v2580
        %v2671 = vunpack.c.l.s4 1983009808
        %v2672 = vunpack.c.0.s8 %v2671
        %v2673 = vlaneseq
        %v2674 = vshrl.u32 %v2673, 7
        %v2675 = vsub.s32 %v2672, %v2674
        %v2676 = vrot.slane %v2669, %v2675
        %v2677 = vcombine.low %v2597, %v2598
        %v2679 = vunpack.c.l.s4 1983009808
        %v2680 = vunpack.c.0.s8 %v2679
        %v2681 = vlaneseq
        %v2682 = vshrl.u32 %v2681, 7
        %v2683 = vsub.s32 %v2680, %v2682
        %v2684 = vrot.slane %v2677, %v2683
        %v2685 = vcombine.low %v2589, %v2596
        %v2687 = vunpack.c.l.s4 1983009808
        %v2688 = vunpack.c.0.s8 %v2687
        %v2689 = vlaneseq
        %v2690 = vshrl.u32 %v2689, 7
        %v2691 = vsub.s32 %v2688, %v2690
        %v2692 = vrot.slane %v2685, %v2691
        %v2693 = vcombine.low %v2599, %v2600
        %v2695 = vunpack.c.l.s4 1983009808
        %v2696 = vunpack.c.0.s8 %v2695
        %v2697 = vlaneseq
        %v2698 = vshrl.u32 %v2697, 7
        %v2699 = vsub.s32 %v2696, %v2698
        %v2700 = vrot.slane %v2693, %v2699
        %v2701 = vcombine.low %v2676, %v2684
        %v2702 = vcombine.high %v2676, %v2684
        %v2704 = vunpack.c.l.s4 1934713408
        %v2705 = vunpack.c.0.s8 %v2704
        %v2706 = vlaneseq
        %v2707 = vshrl.u32 %v2706, 7
        %v2708 = vsub.s32 %v2705, %v2707
        %v2709 = vrot.slane %v2701, %v2708
        %v2711 = vunpack.c.l.s4 1934713408
        %v2712 = vunpack.c.0.s8 %v2711
        %v2713 = vlaneseq
        %v2714 = vshrl.u32 %v2713, 7
        %v2715 = vsub.s32 %v2712, %v2714
        %v2716 = vrot.slane %v2702, %v2715
        %v2717 = vcombine.low %v2692, %v2700
        %v2718 = vcombine.high %v2692, %v2700
        %v2720 = vunpack.c.l.s4 1934713408
        %v2721 = vunpack.c.0.s8 %v2720
        %v2722 = vlaneseq
        %v2723 = vshrl.u32 %v2722, 7
        %v2724 = vsub.s32 %v2721, %v2723
        %v2725 = vrot.slane %v2717, %v2724
        %v2727 = vunpack.c.l.s4 1934713408
        %v2728 = vunpack.c.0.s8 %v2727
        %v2729 = vlaneseq
        %v2730 = vshrl.u32 %v2729, 7
        %v2731 = vsub.s32 %v2728, %v2730
        %v2732 = vrot.slane %v2718, %v2731
        %v2733 = vcombine.low %v2709, %v2725
        %v2734 = vcombine.high %v2709, %v2725
        %v2735 = vcombine.low %v2716, %v2732
        %v2736 = vcombine.high %v2716, %v2732
        %v2737 = vcombine.low %v2641, %v2648
        %v2739 = vunpack.c.l.s4 1983009808
        %v2740 = vunpack.c.0.s8 %v2739
        %v2741 = vlaneseq
        %v2742 = vshrl.u32 %v2741, 7
        %v2743 = vsub.s32 %v2740, %v2742
        %v2744 = vrot.slane %v2737, %v2743
        %v2745 = vcombine.low %v2665, %v2666
        %v2747 = vunpack.c.l.s4 1983009808
        %v2748 = vunpack.c.0.s8 %v2747
        %v2749 = vlaneseq
        %v2750 = vshrl.u32 %v2749, 7
        %v2751 = vsub.s32 %v2748, %v2750
        %v2752 = vrot.slane %v2745, %v2751
        %v2753 = vcombine.low %v2657, %v2664
        %v2755 = vunpack.c.l.s4 1983009808
        %v2756 = vunpack.c.0.s8 %v2755
        %v2757 = vlaneseq
        %v2758 = vshrl.u32 %v2757, 7
        %v2759 = vsub.s32 %v2756, %v2758
        %v2760 = vrot.slane %v2753, %v2759
        %v2761 = vcombine.low %v2667, %v2668
        %v2763 = vunpack.c.l.s4 1983009808
        %v2764 = vunpack.c.0.s8 %v2763
        %v2765 = vlaneseq
        %v2766 = vshrl.u32 %v2765, 7
        %v2767 = vsub.s32 %v2764, %v2766
        %v2768 = vrot.slane %v2761, %v2767
        %v2769 = vcombine.low %v2744, %v2752
        %v2770 = vcombine.high %v2744, %v2752
        %v2772 = vunpack.c.l.s4 1934713408
        %v2773 = vunpack.c.0.s8 %v2772
        %v2774 = vlaneseq
        %v2775 = vshrl.u32 %v2774, 7
        %v2776 = vsub.s32 %v2773, %v2775
        %v2777 = vrot.slane %v2769, %v2776
        %v2779 = vunpack.c.l.s4 1934713408
        %v2780 = vunpack.c.0.s8 %v2779
        %v2781 = vlaneseq
        %v2782 = vshrl.u32 %v2781, 7
        %v2783 = vsub.s32 %v2780, %v2782
        %v2784 = vrot.slane %v2770, %v2783
        %v2785 = vcombine.low %v2760, %v2768
        %v2786 = vcombine.high %v2760, %v2768
        %v2788 = vunpack.c.l.s4 1934713408
        %v2789 = vunpack.c.0.s8 %v2788
        %v2790 = vlaneseq
        %v2791 = vshrl.u32 %v2790, 7
        %v2792 = vsub.s32 %v2789, %v2791
        %v2793 = vrot.slane %v2785, %v2792
        %v2795 = vunpack.c.l.s4 1934713408
        %v2796 = vunpack.c.0.s8 %v2795
        %v2797 = vlaneseq
        %v2798 = vshrl.u32 %v2797, 7
        %v2799 = vsub.s32 %v2796, %v2798
        %v2800 = vrot.slane %v2786, %v2799
        %v2801 = vcombine.low %v2777, %v2793
        %v2802 = vcombine.high %v2777, %v2793
        %v2803 = vcombine.low %v2784, %v2800
        %v2804 = vcombine.high %v2784, %v2800
        %v2805 = vpack.c.bf16 %v2801, %v2733
        %v2806 = vpack.c.bf16 %v2802, %v2734
        %v2807 = vpack.c.bf16 %v2803, %v2735
        %v2808 = vpack.c.bf16 %v2804, %v2736
        %v2810 = vsel %vm1264, %v2209, 0
        %v2813 = vsel %vm1264, %v2505, 0
        %2815 = vmatprep.subr.bf16.mxu0 0
        %2816 = vmatpush1.bf16.xpose.msra.mxu0 %v2813
        %2817 = vmatprep.subr.bf16.mxu0 0
        %2818 = vmatpush1.bf16.xpose.msra.mxu0 0
        %2819 = vmatprep.subr.bf16.mxu0 0
        %2820 = vmatpush1.bf16.xpose.msra.mxu0 0
        %2821 = vmatprep.subr.bf16.mxu0 0
        %2822 = vmatpush1.bf16.xpose.msra.mxu0 0
        %2823 = vmatprep.subr.bf16.mxu0 0
        %2824 = vmatpush1.bf16.xpose.msra.mxu0 0
        %2825 = vmatprep.subr.bf16.mxu0 0
        %2826 = vmatpush1.bf16.xpose.msra.mxu0 0
        %2827 = vmatprep.subr.bf16.mxu0 0
        %2828 = vmatpush1.bf16.xpose.msra.mxu0 0
        %2829 = vmatprep.subr.bf16.mxu0 0
        %2830 = vmatpush1.bf16.xpose.msra.mxu0 0
        %2831 = vmatprep.subr.bf16.mxu0 0
        %2832 = vmatpush1.bf16.xpose.msra.mxu0 0
        %2833 = vmatprep.subr.bf16.mxu0 0
        %2834 = vmatpush1.bf16.xpose.msra.mxu0 0
        %2835 = vmatprep.subr.bf16.mxu0 0
        %2836 = vmatpush1.bf16.xpose.msra.mxu0 0
        %2837 = vmatprep.subr.bf16.mxu0 0
        %2838 = vmatpush1.bf16.xpose.msra.mxu0 0
        %2839 = vmatprep.subr.bf16.mxu0 0
        %2840 = vmatpush1.bf16.xpose.msra.mxu0 0
        %2841 = vmatprep.subr.bf16.mxu0 0
        %2842 = vmatpush1.bf16.xpose.msra.mxu0 0
        %2843 = vmatprep.subr.bf16.mxu0 0
        %2844 = vmatpush1.bf16.xpose.msra.mxu0 0
        %2845 = vmatprep.subr.bf16.mxu0 0
        %2846 = vmatpush1.bf16.xpose.msra.mxu0 0
        %2847 = vmatprep.mubr.bf16.mxu0 0
        %2848 = vmatmul.mubr.bf16.gmra.mrb[0].mxu0 %v2810
        %v2849 = vpop.f32.mrb[0].mxu0
        %v2850 = vadd.f32 0.0, %v2849
        %v2851 = vpop.f32.mrb[0].mxu0
        %v2852 = vpop.f32.mrb[0].mxu0
        %v2853 = vpop.f32.mrb[0].mxu0
        %2854 = vdwg.mxu0
        %v2856 = vsel %vm1264, %v2210, 0
        %v2859 = vsel %vm1264, %v2506, 0
        %2861 = vmatprep.subr.bf16.mxu0 0
        %2862 = vmatpush1.bf16.xpose.msra.mxu0 %v2859
        %2863 = vmatprep.subr.bf16.mxu0 0
        %2864 = vmatpush1.bf16.xpose.msra.mxu0 0
        %2865 = vmatprep.subr.bf16.mxu0 0
        %2866 = vmatpush1.bf16.xpose.msra.mxu0 0
        %2867 = vmatprep.subr.bf16.mxu0 0
        %2868 = vmatpush1.bf16.xpose.msra.mxu0 0
        %2869 = vmatprep.subr.bf16.mxu0 0
        %2870 = vmatpush1.bf16.xpose.msra.mxu0 0
        %2871 = vmatprep.subr.bf16.mxu0 0
        %2872 = vmatpush1.bf16.xpose.msra.mxu0 0
        %2873 = vmatprep.subr.bf16.mxu0 0
        %2874 = vmatpush1.bf16.xpose.msra.mxu0 0
        %2875 = vmatprep.subr.bf16.mxu0 0
        %2876 = vmatpush1.bf16.xpose.msra.mxu0 0
        %2877 = vmatprep.subr.bf16.mxu0 0
        %2878 = vmatpush1.bf16.xpose.msra.mxu0 0
        %2879 = vmatprep.subr.bf16.mxu0 0
        %2880 = vmatpush1.bf16.xpose.msra.mxu0 0
        %2881 = vmatprep.subr.bf16.mxu0 0
        %2882 = vmatpush1.bf16.xpose.msra.mxu0 0
        %2883 = vmatprep.subr.bf16.mxu0 0
        %2884 = vmatpush1.bf16.xpose.msra.mxu0 0
        %2885 = vmatprep.subr.bf16.mxu0 0
        %2886 = vmatpush1.bf16.xpose.msra.mxu0 0
        %2887 = vmatprep.subr.bf16.mxu0 0
        %2888 = vmatpush1.bf16.xpose.msra.mxu0 0
        %2889 = vmatprep.subr.bf16.mxu0 0
        %2890 = vmatpush1.bf16.xpose.msra.mxu0 0
        %2891 = vmatprep.subr.bf16.mxu0 0
        %2892 = vmatpush1.bf16.xpose.msra.mxu0 0
        %2893 = vmatprep.mubr.bf16.mxu0 0
        %2894 = vmatmul.mubr.bf16.gmra.mrb[0].mxu0 %v2856
        %v2895 = vpop.f32.mrb[0].mxu0
        %v2896 = vadd.f32 0.0, %v2895
        %v2897 = vpop.f32.mrb[0].mxu0
        %v2898 = vpop.f32.mrb[0].mxu0
        %v2899 = vpop.f32.mrb[0].mxu0
        %2900 = vdwg.mxu0
        %v2902 = vsel %vm1264, %v2211, 0
        %v2905 = vsel %vm1264, %v2507, 0
        %2907 = vmatprep.subr.bf16.mxu0 0
        %2908 = vmatpush1.bf16.xpose.msra.mxu0 %v2905
        %2909 = vmatprep.subr.bf16.mxu0 0
        %2910 = vmatpush1.bf16.xpose.msra.mxu0 0
        %2911 = vmatprep.subr.bf16.mxu0 0
        %2912 = vmatpush1.bf16.xpose.msra.mxu0 0
        %2913 = vmatprep.subr.bf16.mxu0 0
        %2914 = vmatpush1.bf16.xpose.msra.mxu0 0
        %2915 = vmatprep.subr.bf16.mxu0 0
        %2916 = vmatpush1.bf16.xpose.msra.mxu0 0
        %2917 = vmatprep.subr.bf16.mxu0 0
        %2918 = vmatpush1.bf16.xpose.msra.mxu0 0
        %2919 = vmatprep.subr.bf16.mxu0 0
        %2920 = vmatpush1.bf16.xpose.msra.mxu0 0
        %2921 = vmatprep.subr.bf16.mxu0 0
        %2922 = vmatpush1.bf16.xpose.msra.mxu0 0
        %2923 = vmatprep.subr.bf16.mxu0 0
        %2924 = vmatpush1.bf16.xpose.msra.mxu0 0
        %2925 = vmatprep.subr.bf16.mxu0 0
        %2926 = vmatpush1.bf16.xpose.msra.mxu0 0
        %2927 = vmatprep.subr.bf16.mxu0 0
        %2928 = vmatpush1.bf16.xpose.msra.mxu0 0
        %2929 = vmatprep.subr.bf16.mxu0 0
        %2930 = vmatpush1.bf16.xpose.msra.mxu0 0
        %2931 = vmatprep.subr.bf16.mxu0 0
        %2932 = vmatpush1.bf16.xpose.msra.mxu0 0
        %2933 = vmatprep.subr.bf16.mxu0 0
        %2934 = vmatpush1.bf16.xpose.msra.mxu0 0
        %2935 = vmatprep.subr.bf16.mxu0 0
        %2936 = vmatpush1.bf16.xpose.msra.mxu0 0
        %2937 = vmatprep.subr.bf16.mxu0 0
        %2938 = vmatpush1.bf16.xpose.msra.mxu0 0
        %2939 = vmatprep.mubr.bf16.mxu0 0
        %2940 = vmatmul.mubr.bf16.gmra.mrb[0].mxu0 %v2902
        %v2941 = vpop.f32.mrb[0].mxu0
        %v2942 = vadd.f32 0.0, %v2941
        %v2943 = vpop.f32.mrb[0].mxu0
        %v2944 = vpop.f32.mrb[0].mxu0
        %v2945 = vpop.f32.mrb[0].mxu0
        %2946 = vdwg.mxu0
        %v2948 = vsel %vm1264, %v2212, 0
        %v2951 = vsel %vm1264, %v2508, 0
        %2953 = vmatprep.subr.bf16.mxu0 0
        %2954 = vmatpush1.bf16.xpose.msra.mxu0 %v2951
        %2955 = vmatprep.subr.bf16.mxu0 0
        %2956 = vmatpush1.bf16.xpose.msra.mxu0 0
        %2957 = vmatprep.subr.bf16.mxu0 0
        %2958 = vmatpush1.bf16.xpose.msra.mxu0 0
        %2959 = vmatprep.subr.bf16.mxu0 0
        %2960 = vmatpush1.bf16.xpose.msra.mxu0 0
        %2961 = vmatprep.subr.bf16.mxu0 0
        %2962 = vmatpush1.bf16.xpose.msra.mxu0 0
        %2963 = vmatprep.subr.bf16.mxu0 0
        %2964 = vmatpush1.bf16.xpose.msra.mxu0 0
        %2965 = vmatprep.subr.bf16.mxu0 0
        %2966 = vmatpush1.bf16.xpose.msra.mxu0 0
        %2967 = vmatprep.subr.bf16.mxu0 0
        %2968 = vmatpush1.bf16.xpose.msra.mxu0 0
        %2969 = vmatprep.subr.bf16.mxu0 0
        %2970 = vmatpush1.bf16.xpose.msra.mxu0 0
        %2971 = vmatprep.subr.bf16.mxu0 0
        %2972 = vmatpush1.bf16.xpose.msra.mxu0 0
        %2973 = vmatprep.subr.bf16.mxu0 0
        %2974 = vmatpush1.bf16.xpose.msra.mxu0 0
        %2975 = vmatprep.subr.bf16.mxu0 0
        %2976 = vmatpush1.bf16.xpose.msra.mxu0 0
        %2977 = vmatprep.subr.bf16.mxu0 0
        %2978 = vmatpush1.bf16.xpose.msra.mxu0 0
        %2979 = vmatprep.subr.bf16.mxu0 0
        %2980 = vmatpush1.bf16.xpose.msra.mxu0 0
        %2981 = vmatprep.subr.bf16.mxu0 0
        %2982 = vmatpush1.bf16.xpose.msra.mxu0 0
        %2983 = vmatprep.subr.bf16.mxu0 0
        %2984 = vmatpush1.bf16.xpose.msra.mxu0 0
        %2985 = vmatprep.mubr.bf16.mxu0 0
        %2986 = vmatmul.mubr.bf16.gmra.mrb[0].mxu0 %v2948
        %v2987 = vpop.f32.mrb[0].mxu0
        %v2988 = vadd.f32 0.0, %v2987
        %v2989 = vpop.f32.mrb[0].mxu0
        %v2990 = vpop.f32.mrb[0].mxu0
        %v2991 = vpop.f32.mrb[0].mxu0
        %2992 = vdwg.mxu0
        %v2994 = vlaneseq
        %v2995 = vshrl.u32 %v2994, 7
        %v2996 = vsub.s32 0, %v2995
        %v2997 = vrot.slane %v701, %v2996
        %v2999 = vadd.f32 %v2850, %v2997
        %v3000 = vadd.f32 %v2896, %v2997
        %v3001 = vadd.f32 %v2942, %v2997
        %v3002 = vadd.f32 %v2988, %v2997
        %v3003 = vsel %vm1835, %v2999, -inf
        %3004 = vmax.xlane.f32.xlu0 %v3003
        %v3005 = vpop.xlane.xlu0 %3004
        %v3006 = vsel %vm1835, %v3000, -inf
        %3007 = vmax.xlane.f32.xlu0 %v3006
        %v3008 = vpop.xlane.xlu0 %3007
        %v3009 = vsel %vm1835, %v3001, -inf
        %3010 = vmax.xlane.f32.xlu0 %v3009
        %v3011 = vpop.xlane.xlu0 %3010
        %v3012 = vsel %vm1835, %v3002, -inf
        %3013 = vmax.xlane.f32.xlu0 %v3012
        %v3014 = vpop.xlane.xlu0 %3013
        %v3015 = vsub.f32 %v2999, %v3005
        %v3016 = vsub.f32 %v3000, %v3008
        %v3017 = vsub.f32 %v3001, %v3011
        %v3018 = vsub.f32 %v3002, %v3014
        %v3019 = vmul.f32 %v3015, 1.442695
        %v3020 = vpow.pop %v3019
        %v3021 = vmul.f32 %v3016, 1.442695
        %v3022 = vpow.pop %v3021
        %v3023 = vmul.f32 %v3017, 1.442695
        %v3024 = vpow.pop %v3023
        %v3025 = vmul.f32 %v3018, 1.442695
        %v3026 = vpow.pop %v3025
        %v3027 = vsel %vm1835, %v3020, 0.0
        %3028 = vadd.xlane.f32.xlu0 %v3027
        %v3029 = vpop.xlane.xlu0 %3028
        %v3030 = vsel %vm1835, %v3022, 0.0
        %3031 = vadd.xlane.f32.xlu0 %v3030
        %v3032 = vpop.xlane.xlu0 %3031
        %v3033 = vsel %vm1835, %v3024, 0.0
        %3034 = vadd.xlane.f32.xlu0 %v3033
        %v3035 = vpop.xlane.xlu0 %3034
        %v3036 = vsel %vm1835, %v3026, 0.0
        %3037 = vadd.xlane.f32.xlu0 %v3036
        %v3038 = vpop.xlane.xlu0 %3037
        %v3039 = vrcp.pop %v3029
        %v3040 = vrcp.pop %v3032
        %v3041 = vrcp.pop %v3035
        %v3042 = vrcp.pop %v3038
        %v3043 = vmul.f32 %v3020, %v3039
        %v3044 = vmul.f32 %v3022, %v3040
        %v3045 = vmul.f32 %v3024, %v3041
        %v3046 = vmul.f32 %v3026, %v3042
        %v3047 = vpack.c.bf16 %v3043, %v3043
        %v3048 = vpack.c.bf16 %v3044, %v3044
        %v3049 = vpack.c.bf16 %v3045, %v3045
        %v3050 = vpack.c.bf16 %v3046, %v3046
        %v3052 = vsel %vm1835, %v3047, 0
        %3054 = vmatprep.subr.bf16.mxu0 0
        %3055 = vmatpush1.bf16.msra.mxu0 %v2805
        %3056 = vmatprep.subr.bf16.mxu0 0
        %3057 = vmatpush1.bf16.msra.mxu0 0
        %3058 = vmatprep.subr.bf16.mxu0 0
        %3059 = vmatpush1.bf16.msra.mxu0 0
        %3060 = vmatprep.subr.bf16.mxu0 0
        %3061 = vmatpush1.bf16.msra.mxu0 0
        %3062 = vmatprep.subr.bf16.mxu0 0
        %3063 = vmatpush1.bf16.msra.mxu0 0
        %3064 = vmatprep.subr.bf16.mxu0 0
        %3065 = vmatpush1.bf16.msra.mxu0 0
        %3066 = vmatprep.subr.bf16.mxu0 0
        %3067 = vmatpush1.bf16.msra.mxu0 0
        %3068 = vmatprep.subr.bf16.mxu0 0
        %3069 = vmatpush1.bf16.msra.mxu0 0
        %3070 = vmatprep.subr.bf16.mxu0 0
        %3071 = vmatpush1.bf16.msra.mxu0 0
        %3072 = vmatprep.subr.bf16.mxu0 0
        %3073 = vmatpush1.bf16.msra.mxu0 0
        %3074 = vmatprep.subr.bf16.mxu0 0
        %3075 = vmatpush1.bf16.msra.mxu0 0
        %3076 = vmatprep.subr.bf16.mxu0 0
        %3077 = vmatpush1.bf16.msra.mxu0 0
        %3078 = vmatprep.subr.bf16.mxu0 0
        %3079 = vmatpush1.bf16.msra.mxu0 0
        %3080 = vmatprep.subr.bf16.mxu0 0
        %3081 = vmatpush1.bf16.msra.mxu0 0
        %3082 = vmatprep.subr.bf16.mxu0 0
        %3083 = vmatpush1.bf16.msra.mxu0 0
        %3084 = vmatprep.subr.bf16.mxu0 0
        %3085 = vmatpush1.bf16.msra.mxu0 0
        %3086 = vmatprep.mubr.bf16.mxu0 0
        %3087 = vmatmul.mubr.bf16.gmra.mrb[0].mxu0 %v3052
        %v3088 = vpop.f32.mrb[0].mxu0
        %v3089 = vadd.f32 0.0, %v3088
        %v3090 = vpop.f32.mrb[0].mxu0
        %v3091 = vpop.f32.mrb[0].mxu0
        %v3092 = vpop.f32.mrb[0].mxu0
        %3093 = vdwg.mxu0
        %v3095 = vsel %vm1835, %v3048, 0
        %3097 = vmatprep.subr.bf16.mxu0 0
        %3098 = vmatpush1.bf16.msra.mxu0 %v2806
        %3099 = vmatprep.subr.bf16.mxu0 0
        %3100 = vmatpush1.bf16.msra.mxu0 0
        %3101 = vmatprep.subr.bf16.mxu0 0
        %3102 = vmatpush1.bf16.msra.mxu0 0
        %3103 = vmatprep.subr.bf16.mxu0 0
        %3104 = vmatpush1.bf16.msra.mxu0 0
        %3105 = vmatprep.subr.bf16.mxu0 0
        %3106 = vmatpush1.bf16.msra.mxu0 0
        %3107 = vmatprep.subr.bf16.mxu0 0
        %3108 = vmatpush1.bf16.msra.mxu0 0
        %3109 = vmatprep.subr.bf16.mxu0 0
        %3110 = vmatpush1.bf16.msra.mxu0 0
        %3111 = vmatprep.subr.bf16.mxu0 0
        %3112 = vmatpush1.bf16.msra.mxu0 0
        %3113 = vmatprep.subr.bf16.mxu0 0
        %3114 = vmatpush1.bf16.msra.mxu0 0
        %3115 = vmatprep.subr.bf16.mxu0 0
        %3116 = vmatpush1.bf16.msra.mxu0 0
        %3117 = vmatprep.subr.bf16.mxu0 0
        %3118 = vmatpush1.bf16.msra.mxu0 0
        %3119 = vmatprep.subr.bf16.mxu0 0
        %3120 = vmatpush1.bf16.msra.mxu0 0
        %3121 = vmatprep.subr.bf16.mxu0 0
        %3122 = vmatpush1.bf16.msra.mxu0 0
        %3123 = vmatprep.subr.bf16.mxu0 0
        %3124 = vmatpush1.bf16.msra.mxu0 0
        %3125 = vmatprep.subr.bf16.mxu0 0
        %3126 = vmatpush1.bf16.msra.mxu0 0
        %3127 = vmatprep.subr.bf16.mxu0 0
        %3128 = vmatpush1.bf16.msra.mxu0 0
        %3129 = vmatprep.mubr.bf16.mxu0 0
        %3130 = vmatmul.mubr.bf16.gmra.mrb[0].mxu0 %v3095
        %v3131 = vpop.f32.mrb[0].mxu0
        %v3132 = vadd.f32 0.0, %v3131
        %v3133 = vpop.f32.mrb[0].mxu0
        %v3134 = vpop.f32.mrb[0].mxu0
        %v3135 = vpop.f32.mrb[0].mxu0
        %3136 = vdwg.mxu0
        %v3138 = vsel %vm1835, %v3049, 0
        %3140 = vmatprep.subr.bf16.mxu0 0
        %3141 = vmatpush1.bf16.msra.mxu0 %v2807
        %3142 = vmatprep.subr.bf16.mxu0 0
        %3143 = vmatpush1.bf16.msra.mxu0 0
        %3144 = vmatprep.subr.bf16.mxu0 0
        %3145 = vmatpush1.bf16.msra.mxu0 0
        %3146 = vmatprep.subr.bf16.mxu0 0
        %3147 = vmatpush1.bf16.msra.mxu0 0
        %3148 = vmatprep.subr.bf16.mxu0 0
        %3149 = vmatpush1.bf16.msra.mxu0 0
        %3150 = vmatprep.subr.bf16.mxu0 0
        %3151 = vmatpush1.bf16.msra.mxu0 0
        %3152 = vmatprep.subr.bf16.mxu0 0
        %3153 = vmatpush1.bf16.msra.mxu0 0
        %3154 = vmatprep.subr.bf16.mxu0 0
        %3155 = vmatpush1.bf16.msra.mxu0 0
        %3156 = vmatprep.subr.bf16.mxu0 0
        %3157 = vmatpush1.bf16.msra.mxu0 0
        %3158 = vmatprep.subr.bf16.mxu0 0
        %3159 = vmatpush1.bf16.msra.mxu0 0
        %3160 = vmatprep.subr.bf16.mxu0 0
        %3161 = vmatpush1.bf16.msra.mxu0 0
        %3162 = vmatprep.subr.bf16.mxu0 0
        %3163 = vmatpush1.bf16.msra.mxu0 0
        %3164 = vmatprep.subr.bf16.mxu0 0
        %3165 = vmatpush1.bf16.msra.mxu0 0
        %3166 = vmatprep.subr.bf16.mxu0 0
        %3167 = vmatpush1.bf16.msra.mxu0 0
        %3168 = vmatprep.subr.bf16.mxu0 0
        %3169 = vmatpush1.bf16.msra.mxu0 0
        %3170 = vmatprep.subr.bf16.mxu0 0
        %3171 = vmatpush1.bf16.msra.mxu0 0
        %3172 = vmatprep.mubr.bf16.mxu0 0
        %3173 = vmatmul.mubr.bf16.gmra.mrb[0].mxu0 %v3138
        %v3174 = vpop.f32.mrb[0].mxu0
        %v3175 = vadd.f32 0.0, %v3174
        %v3176 = vpop.f32.mrb[0].mxu0
        %v3177 = vpop.f32.mrb[0].mxu0
        %v3178 = vpop.f32.mrb[0].mxu0
        %3179 = vdwg.mxu0
        %v3181 = vsel %vm1835, %v3050, 0
        %3183 = vmatprep.subr.bf16.mxu0 0
        %3184 = vmatpush1.bf16.msra.mxu0 %v2808
        %3185 = vmatprep.subr.bf16.mxu0 0
        %3186 = vmatpush1.bf16.msra.mxu0 0
        %3187 = vmatprep.subr.bf16.mxu0 0
        %3188 = vmatpush1.bf16.msra.mxu0 0
        %3189 = vmatprep.subr.bf16.mxu0 0
        %3190 = vmatpush1.bf16.msra.mxu0 0
        %3191 = vmatprep.subr.bf16.mxu0 0
        %3192 = vmatpush1.bf16.msra.mxu0 0
        %3193 = vmatprep.subr.bf16.mxu0 0
        %3194 = vmatpush1.bf16.msra.mxu0 0
        %3195 = vmatprep.subr.bf16.mxu0 0
        %3196 = vmatpush1.bf16.msra.mxu0 0
        %3197 = vmatprep.subr.bf16.mxu0 0
        %3198 = vmatpush1.bf16.msra.mxu0 0
        %3199 = vmatprep.subr.bf16.mxu0 0
        %3200 = vmatpush1.bf16.msra.mxu0 0
        %3201 = vmatprep.subr.bf16.mxu0 0
        %3202 = vmatpush1.bf16.msra.mxu0 0
        %3203 = vmatprep.subr.bf16.mxu0 0
        %3204 = vmatpush1.bf16.msra.mxu0 0
        %3205 = vmatprep.subr.bf16.mxu0 0
        %3206 = vmatpush1.bf16.msra.mxu0 0
        %3207 = vmatprep.subr.bf16.mxu0 0
        %3208 = vmatpush1.bf16.msra.mxu0 0
        %3209 = vmatprep.subr.bf16.mxu0 0
        %3210 = vmatpush1.bf16.msra.mxu0 0
        %3211 = vmatprep.subr.bf16.mxu0 0
        %3212 = vmatpush1.bf16.msra.mxu0 0
        %3213 = vmatprep.subr.bf16.mxu0 0
        %3214 = vmatpush1.bf16.msra.mxu0 0
        %3215 = vmatprep.mubr.bf16.mxu0 0
        %3216 = vmatmul.mubr.bf16.gmra.mrb[0].mxu0 %v3181
        %v3217 = vpop.f32.mrb[0].mxu0
        %v3218 = vadd.f32 0.0, %v3217
        %v3219 = vpop.f32.mrb[0].mxu0
        %v3220 = vpop.f32.mrb[0].mxu0
        %v3221 = vpop.f32.mrb[0].mxu0
        %3222 = vdwg.mxu0
        %v3223 = vcombine.low %v3089, %v3175
        %v3224 = vcombine.high %v3089, %v3175
        %v3226 = vunpack.c.l.s4 1983009808
        %v3227 = vunpack.c.0.s8 %v3226
        %v3228 = vlaneseq
        %v3229 = vshrl.u32 %v3228, 7
        %v3230 = vsub.s32 %v3227, %v3229
        %v3231 = vrot.slane %v3223, %v3230
        %v3233 = vunpack.c.l.s4 1983009808
        %v3234 = vunpack.c.0.s8 %v3233
        %v3235 = vlaneseq
        %v3236 = vshrl.u32 %v3235, 7
        %v3237 = vsub.s32 %v3234, %v3236
        %v3238 = vrot.slane %v3224, %v3237
        %v3239 = vcombine.low %v3132, %v3218
        %v3240 = vcombine.high %v3132, %v3218
        %v3242 = vunpack.c.l.s4 1983009808
        %v3243 = vunpack.c.0.s8 %v3242
        %v3244 = vlaneseq
        %v3245 = vshrl.u32 %v3244, 7
        %v3246 = vsub.s32 %v3243, %v3245
        %v3247 = vrot.slane %v3239, %v3246
        %v3249 = vunpack.c.l.s4 1983009808
        %v3250 = vunpack.c.0.s8 %v3249
        %v3251 = vlaneseq
        %v3252 = vshrl.u32 %v3251, 7
        %v3253 = vsub.s32 %v3250, %v3252
        %v3254 = vrot.slane %v3240, %v3253
        %v3255 = vcombine.low %v3231, %v3247
        %v3256 = vcombine.high %v3231, %v3247
        %v3258 = vunpack.c.l.s4 1934713408
        %v3259 = vunpack.c.0.s8 %v3258
        %v3260 = vlaneseq
        %v3261 = vshrl.u32 %v3260, 7
        %v3262 = vsub.s32 %v3259, %v3261
        %v3263 = vrot.slane %v3255, %v3262
        %v3265 = vunpack.c.l.s4 1934713408
        %v3266 = vunpack.c.0.s8 %v3265
        %v3267 = vlaneseq
        %v3268 = vshrl.u32 %v3267, 7
        %v3269 = vsub.s32 %v3266, %v3268
        %v3270 = vrot.slane %v3256, %v3269
        %v3271 = vcombine.low %v3238, %v3254
        %v3272 = vcombine.high %v3238, %v3254
        %v3274 = vunpack.c.l.s4 1934713408
        %v3275 = vunpack.c.0.s8 %v3274
        %v3276 = vlaneseq
        %v3277 = vshrl.u32 %v3276, 7
        %v3278 = vsub.s32 %v3275, %v3277
        %v3279 = vrot.slane %v3271, %v3278
        %v3281 = vunpack.c.l.s4 1934713408
        %v3282 = vunpack.c.0.s8 %v3281
        %v3283 = vlaneseq
        %v3284 = vshrl.u32 %v3283, 7
        %v3285 = vsub.s32 %v3282, %v3284
        %v3286 = vrot.slane %v3272, %v3285
        %v3287 = vcombine.high %v3263, 0.0
        %v3288 = vcombine.high %v3270, 0.0
        %v3289 = vcombine.high %v3279, 0.0
        %v3290 = vcombine.high %v3286, 0.0
        %v3291 = vcombine.low %v3263, %v3270
        %v3293 = vunpack.c.l.s4 1983009808
        %v3294 = vunpack.c.0.s8 %v3293
        %v3295 = vlaneseq
        %v3296 = vshrl.u32 %v3295, 7
        %v3297 = vsub.s32 %v3294, %v3296
        %v3298 = vrot.slane %v3291, %v3297
        %v3299 = vcombine.low %v3287, %v3288
        %v3301 = vunpack.c.l.s4 1983009808
        %v3302 = vunpack.c.0.s8 %v3301
        %v3303 = vlaneseq
        %v3304 = vshrl.u32 %v3303, 7
        %v3305 = vsub.s32 %v3302, %v3304
        %v3306 = vrot.slane %v3299, %v3305
        %v3307 = vcombine.low %v3279, %v3286
        %v3309 = vunpack.c.l.s4 1983009808
        %v3310 = vunpack.c.0.s8 %v3309
        %v3311 = vlaneseq
        %v3312 = vshrl.u32 %v3311, 7
        %v3313 = vsub.s32 %v3310, %v3312
        %v3314 = vrot.slane %v3307, %v3313
        %v3315 = vcombine.low %v3289, %v3290
        %v3317 = vunpack.c.l.s4 1983009808
        %v3318 = vunpack.c.0.s8 %v3317
        %v3319 = vlaneseq
        %v3320 = vshrl.u32 %v3319, 7
        %v3321 = vsub.s32 %v3318, %v3320
        %v3322 = vrot.slane %v3315, %v3321
        %v3323 = vcombine.low %v3298, %v3306
        %v3324 = vcombine.high %v3298, %v3306
        %v3326 = vunpack.c.l.s4 1934713408
        %v3327 = vunpack.c.0.s8 %v3326
        %v3328 = vlaneseq
        %v3329 = vshrl.u32 %v3328, 7
        %v3330 = vsub.s32 %v3327, %v3329
        %v3331 = vrot.slane %v3323, %v3330
        %v3333 = vunpack.c.l.s4 1934713408
        %v3334 = vunpack.c.0.s8 %v3333
        %v3335 = vlaneseq
        %v3336 = vshrl.u32 %v3335, 7
        %v3337 = vsub.s32 %v3334, %v3336
        %v3338 = vrot.slane %v3324, %v3337
        %v3339 = vcombine.low %v3314, %v3322
        %v3340 = vcombine.high %v3314, %v3322
        %v3342 = vunpack.c.l.s4 1934713408
        %v3343 = vunpack.c.0.s8 %v3342
        %v3344 = vlaneseq
        %v3345 = vshrl.u32 %v3344, 7
        %v3346 = vsub.s32 %v3343, %v3345
        %v3347 = vrot.slane %v3339, %v3346
        %v3349 = vunpack.c.l.s4 1934713408
        %v3350 = vunpack.c.0.s8 %v3349
        %v3351 = vlaneseq
        %v3352 = vshrl.u32 %v3351, 7
        %v3353 = vsub.s32 %v3350, %v3352
        %v3354 = vrot.slane %v3340, %v3353
        %v3355 = vcombine.low %v3331, %v3347
        %v3356 = vcombine.high %v3331, %v3347
        %v3357 = vcombine.low %v3338, %v3354
        %v3358 = vcombine.high %v3338, %v3354
        %3360 = vrot.lane.b32.xlu0 %v3356, 8
        %v3361 = vpop.permute.xlu0 %3360
        %3364 = vrot.lane.b32.xlu0 %v3357, 16
        %v3365 = vpop.permute.xlu0 %3364
        %3368 = vrot.lane.b32.xlu0 %v3358, 24
        %v3369 = vpop.permute.xlu0 %3368
        %v3371 = vsel %vm1264, %v3355, %v3361
        %v3372 = vsel %vm1835, %v3371, %v3365
        %v3373 = vsel %vm1837, %v3372, %v3369
        %v3374 = vpack.c.bf16 %v3373, %v3373
        %v3375 = vlaneseq
        %v3376 = vshrl.u32 %v3375, 7
        %v3377 = vsub.s32 2, %v3376
        %v3378 = vrot.slane %v695, %v3377
        %v3383 = vunpack.c.l.b16 %v2059
        %v3384 = vunpack.c.l.b16 %v2060
        %v3385 = vunpack.c.l.b16 %v2061
        %v3386 = vunpack.c.l.b16 %v2062
        %v3387 = vpack.c.b16 %v3384, %v3383
        %v3388 = vpack.c.b16 %v3386, %v3385
        %v3392 = vsel %vm704, %v3374, 0
        %3394 = vmatprep.subr.bf16.mxu0 0
        %3395 = vmatpush1.bf16.msra.mxu0 %v3387
        %3396 = vmatprep.subr.bf16.mxu0 0
        %3397 = vmatpush1.bf16.msra.mxu0 %v3388
        %3398 = vmatprep.subr.bf16.mxu0 0
        %3399 = vmatpush1.bf16.msra.mxu0 0
        %3400 = vmatprep.subr.bf16.mxu0 0
        %3401 = vmatpush1.bf16.msra.mxu0 0
        %3402 = vmatprep.subr.bf16.mxu0 0
        %3403 = vmatpush1.bf16.msra.mxu0 0
        %3404 = vmatprep.subr.bf16.mxu0 0
        %3405 = vmatpush1.bf16.msra.mxu0 0
        %3406 = vmatprep.subr.bf16.mxu0 0
        %3407 = vmatpush1.bf16.msra.mxu0 0
        %3408 = vmatprep.subr.bf16.mxu0 0
        %3409 = vmatpush1.bf16.msra.mxu0 0
        %3410 = vmatprep.subr.bf16.mxu0 0
        %3411 = vmatpush1.bf16.msra.mxu0 0
        %3412 = vmatprep.subr.bf16.mxu0 0
        %3413 = vmatpush1.bf16.msra.mxu0 0
        %3414 = vmatprep.subr.bf16.mxu0 0
        %3415 = vmatpush1.bf16.msra.mxu0 0
        %3416 = vmatprep.subr.bf16.mxu0 0
        %3417 = vmatpush1.bf16.msra.mxu0 0
        %3418 = vmatprep.subr.bf16.mxu0 0
        %3419 = vmatpush1.bf16.msra.mxu0 0
        %3420 = vmatprep.subr.bf16.mxu0 0
        %3421 = vmatpush1.bf16.msra.mxu0 0
        %3422 = vmatprep.subr.bf16.mxu0 0
        %3423 = vmatpush1.bf16.msra.mxu0 0
        %3424 = vmatprep.subr.bf16.mxu0 0
        %3425 = vmatpush1.bf16.msra.mxu0 0
        %3426 = vmatprep.mubr.bf16.mxu0 0
        %3427 = vmatmul.mubr.bf16.gmra.mrb[0].mxu0 %v3392
        %v3428 = vpop.f32.mrb[0].mxu0
        %v3429 = vadd.f32 %v3378, %v3428
        %v3430 = vpop.f32.mrb[0].mxu0
        %v3431 = vpop.f32.mrb[0].mxu0
        %v3432 = vpop.f32.mrb[0].mxu0
        %3433 = vdwg.mxu0
        %v3434 = vadd.f32 %v1899, %v3429
        %s3435 = sld [smem:[#allocation2 + $0x100]]
        %s3436 = sld [smem:[#allocation2 + $0x101]]
        %v3437 = vsel %vm704, %v3434, 0.0
        %3438 = vadd.xlane.f32.xlu0 %v3437
        %v3439 = vpop.xlane.xlu0 %3438
        %v3440 = vmul.f32 %v3439, %v708
        %v3441 = vsub.f32 %v3434, %v3440
        %v3442 = vmul.f32 %v3441, %v3441
        %v3443 = vsel %vm704, %v3442, 0.0
        %3444 = vadd.xlane.f32.xlu0 %v3443
        %v3445 = vpop.xlane.xlu0 %3444
        %v3446 = vmul.f32 %v3445, %v715
        %v3447 = vstv %s3435
        %v3448 = vmul.f32 %v3447, %v3441
        %v3449 = vrsqrt.pop %v3446
        %v3450 = vmul.f32 %v3446, %v3449
        %vm3451 = vcmp.eq.f32.partialorder %v3446, inf
        %v3452 = vsel %vm3451, %v3446, %v3450
        %vm3453 = vcmp.eq.f32.partialorder %v3446, 0.0
        %v3454 = vand.u32 %v3446, 2147483648
        %v3455 = vsel %vm3453, %v3454, %v3452
        %v3456 = vadd.f32 %v3455, 1e-06
        %v3457 = vrcp.pop %v3456
        %v3458 = vmul.f32 %v3448, %v3457
        %v3459 = vstv %s3436
        %v3460 = vadd.f32 %v3458, %v3459
        %v3461 = vpack.c.bf16 %v3460, %v3460
        %v3462 = vld [vmem:[#allocation15] sm:$0xf]
        %v3463 = vld [vmem:[#allocation15 + $0x4] sm:$0xf]
        %v3464 = vld [vmem:[#allocation15 + $0x8] sm:$0xf]
        %v3465 = vld [vmem:[#allocation15 + $0xc] sm:$0xf]
        %v3466 = vld [vmem:[%s15] sm:$0x1]
        %v3468 = vlaneseq
        %v3469 = vshrl.u32 %v3468, 7
        %v3470 = vsub.s32 0, %v3469
        %v3471 = vrot.slane %v3466, %v3470
        %v3477 = vunpack.c.l.b16 %v3462
        %v3478 = vunpack.c.l.b16 %v3463
        %v3479 = vunpack.c.l.b16 %v3464
        %v3480 = vunpack.c.l.b16 %v3465
        %v3481 = vpack.c.b16 %v3478, %v3477
        %v3482 = vpack.c.b16 %v3480, %v3479
        %v3486 = vsel %vm704, %v3461, 0
        %3488 = vmatprep.subr.bf16.mxu0 0
        %3489 = vmatpush1.bf16.msra.mxu0 %v3481
        %3490 = vmatprep.subr.bf16.mxu0 0
        %3491 = vmatpush1.bf16.msra.mxu0 %v3482
        %3492 = vmatprep.subr.bf16.mxu0 0
        %3493 = vmatpush1.bf16.msra.mxu0 0
        %3494 = vmatprep.subr.bf16.mxu0 0
        %3495 = vmatpush1.bf16.msra.mxu0 0
        %3496 = vmatprep.subr.bf16.mxu0 0
        %3497 = vmatpush1.bf16.msra.mxu0 0
        %3498 = vmatprep.subr.bf16.mxu0 0
        %3499 = vmatpush1.bf16.msra.mxu0 0
        %3500 = vmatprep.subr.bf16.mxu0 0
        %3501 = vmatpush1.bf16.msra.mxu0 0
        %3502 = vmatprep.subr.bf16.mxu0 0
        %3503 = vmatpush1.bf16.msra.mxu0 0
        %3504 = vmatprep.subr.bf16.mxu0 0
        %3505 = vmatpush1.bf16.msra.mxu0 0
        %3506 = vmatprep.subr.bf16.mxu0 0
        %3507 = vmatpush1.bf16.msra.mxu0 0
        %3508 = vmatprep.subr.bf16.mxu0 0
        %3509 = vmatpush1.bf16.msra.mxu0 0
        %3510 = vmatprep.subr.bf16.mxu0 0
        %3511 = vmatpush1.bf16.msra.mxu0 0
        %3512 = vmatprep.subr.bf16.mxu0 0
        %3513 = vmatpush1.bf16.msra.mxu0 0
        %3514 = vmatprep.subr.bf16.mxu0 0
        %3515 = vmatpush1.bf16.msra.mxu0 0
        %3516 = vmatprep.subr.bf16.mxu0 0
        %3517 = vmatpush1.bf16.msra.mxu0 0
        %3518 = vmatprep.subr.bf16.mxu0 0
        %3519 = vmatpush1.bf16.msra.mxu0 0
        %3520 = vmatprep.mubr.bf16.mxu0 0
        %3521 = vmatmul.mubr.bf16.gmra.mrb[0].mxu0 %v3486
        %v3522 = vpop.f32.mrb[0].mxu0
        %v3523 = vadd.f32 %v3471, %v3522
        %v3524 = vpop.f32.mrb[0].mxu0
        %v3525 = vpop.f32.mrb[0].mxu0
        %v3526 = vpop.f32.mrb[0].mxu0
        %3527 = vdwg.mxu0
        %v3528 = vmax.f32 %v3523, 0.0
        %v3529 = vpack.c.bf16 %v3528, %v3528
        %v3530 = vld [vmem:[%s11] sm:$0xf]
        %v3531 = vld [vmem:[%s11 + $0x4] sm:$0xf]
        %v3532 = vld [vmem:[%s11 + $0x8] sm:$0xf]
        %v3533 = vld [vmem:[%s11 + $0xc] sm:$0xf]
        %v3534 = vld [vmem:[%s11 + $0x10] sm:$0xf]
        %v3535 = vld [vmem:[%s11 + $0x14] sm:$0xf]
        %v3536 = vld [vmem:[%s11 + $0x18] sm:$0xf]
        %v3537 = vld [vmem:[%s11 + $0x1c] sm:$0xf]
        %v3538 = vlaneseq
        %v3539 = vshrl.u32 %v3538, 7
        %v3540 = vsub.s32 3, %v3539
        %v3541 = vrot.slane %v695, %v3540
        %v3550 = vunpack.c.l.b16 %v3530
        %v3551 = vunpack.c.l.b16 %v3531
        %v3552 = vunpack.c.l.b16 %v3532
        %v3553 = vunpack.c.l.b16 %v3533
        %v3554 = vunpack.c.l.b16 %v3534
        %v3555 = vunpack.c.l.b16 %v3535
        %v3556 = vunpack.c.l.b16 %v3536
        %v3557 = vunpack.c.l.b16 %v3537
        %v3558 = vpack.c.b16 %v3551, %v3550
        %v3559 = vpack.c.b16 %v3553, %v3552
        %v3560 = vpack.c.b16 %v3555, %v3554
        %v3561 = vpack.c.b16 %v3557, %v3556
        %vm3566 = vcmask 523264
        %v3568 = vsel %vm3566, %v3529, 0
        %3570 = vmatprep.subr.bf16.mxu0 0
        %3571 = vmatpush1.bf16.msra.mxu0 %v3558
        %3572 = vmatprep.subr.bf16.mxu0 0
        %3573 = vmatpush1.bf16.msra.mxu0 %v3559
        %3574 = vmatprep.subr.bf16.mxu0 0
        %3575 = vmatpush1.bf16.msra.mxu0 %v3560
        %3576 = vmatprep.subr.bf16.mxu0 0
        %3577 = vmatpush1.bf16.msra.mxu0 %v3561
        %3578 = vmatprep.subr.bf16.mxu0 0
        %3579 = vmatpush1.bf16.msra.mxu0 0
        %3580 = vmatprep.subr.bf16.mxu0 0
        %3581 = vmatpush1.bf16.msra.mxu0 0
        %3582 = vmatprep.subr.bf16.mxu0 0
        %3583 = vmatpush1.bf16.msra.mxu0 0
        %3584 = vmatprep.subr.bf16.mxu0 0
        %3585 = vmatpush1.bf16.msra.mxu0 0
        %3586 = vmatprep.subr.bf16.mxu0 0
        %3587 = vmatpush1.bf16.msra.mxu0 0
        %3588 = vmatprep.subr.bf16.mxu0 0
        %3589 = vmatpush1.bf16.msra.mxu0 0
        %3590 = vmatprep.subr.bf16.mxu0 0
        %3591 = vmatpush1.bf16.msra.mxu0 0
        %3592 = vmatprep.subr.bf16.mxu0 0
        %3593 = vmatpush1.bf16.msra.mxu0 0
        %3594 = vmatprep.subr.bf16.mxu0 0
        %3595 = vmatpush1.bf16.msra.mxu0 0
        %3596 = vmatprep.subr.bf16.mxu0 0
        %3597 = vmatpush1.bf16.msra.mxu0 0
        %3598 = vmatprep.subr.bf16.mxu0 0
        %3599 = vmatpush1.bf16.msra.mxu0 0
        %3600 = vmatprep.subr.bf16.mxu0 0
        %3601 = vmatpush1.bf16.msra.mxu0 0
        %3602 = vmatprep.mubr.bf16.mxu0 0
        %3603 = vmatmul.mubr.bf16.gmra.mrb[0].mxu0 %v3568
        %v3604 = vpop.f32.mrb[0].mxu0
        %v3605 = vadd.f32 %v3541, %v3604
        %v3606 = vpop.f32.mrb[0].mxu0
        %v3607 = vpop.f32.mrb[0].mxu0
        %v3608 = vpop.f32.mrb[0].mxu0
        %3609 = vdwg.mxu0
        %v3610 = vadd.f32 %v3434, %v3605
        %3611 = vst.msk [vmem:[%s676] sm:$0xff] %vm704, %v3610
        %s3612 = sand.u32 %s401, 1
        %s3613 = scalar_lea.sflag [#allocation4], %s3612
        %s3614 = sand.u32 %s401, 1
        %s3615 = smul.addr %s3614, 8
        %s3616 = scalar_lea.vmem [#allocation16], %s3615
        // Predicated region
        $region117: #{tpu_custom_call.1} parent=83 // pred_check
          %p3617 = pneg %p411
        $region118: #{tpu_custom_call.1} parent=83 // pred_check_branch
          %3619 = sbr.rel (%p3617) target = $region120
        $region119: #{tpu_custom_call.1} parent=83 // pred_region
          %s3621 = ssub.s32 128, 128
          %3622 = vsyncadd %s3613, %s3621
          %s3623 = smul.addr %s37, 128
          %s3624 = scalar_lea.hbm %s16, %s3623
          %s3626 = sshll.u32 %s3616, 4
          %s3627 = int_to_ptr.vmem [resolvable:$true] %s3626
          %3629 = dma.vmem_to_hbm [thread:$0]  %s3627, 128, %s3624, %s3613
        $region120: #{tpu_custom_call.1} parent=83 // pred_fallthru
          _
      $region84: #{tpu_custom_call.1} parent=5 // pred_fallthru
        _
      %p3630 = scmp.le.s32.totalorder 2, %s32
      // Predicated region
      $region121: #{tpu_custom_call.1} parent=5 // pred_check
        %p3631 = pneg %p3630
      $region122: #{tpu_custom_call.1} parent=5 // pred_check_branch
        %3633 = sbr.rel (%p3631) target = $region124
      $region123: #{tpu_custom_call.1} parent=5 // pred_region
        %s3634 = ssub.s32 %s32, 2
        // Predicated region
        $region125: #{tpu_custom_call.1} parent=123 // pred_check
          %p3635 = pneg %p417
        $region126: #{tpu_custom_call.1} parent=123 // pred_check_branch
          %3637 = sbr.rel (%p3635) target = $region128
        $region127: #{tpu_custom_call.1} parent=123 // pred_region
          %s3638 = sand.u32 %s402, 1
          %s3639 = scalar_lea.sflag [#allocation4], %s3638
          %s3640 = sand.u32 %s402, 1
          %s3641 = smul.addr %s3640, 8
          %s3642 = scalar_lea.vmem [#allocation16], %s3641
          %3643 = dma.done %s3639, 128
        $region128: #{tpu_custom_call.1} parent=123 // pred_fallthru
          _
      $region124: #{tpu_custom_call.1} parent=5 // pred_fallthru
        _
    $region6: #{tpu_custom_call.1} parent=1 // loop_footer
      %s36 = sadd.s32 1, %s32
    $region7: #{tpu_custom_call.1} parent=1 // loop_footer_branch
      %31 = sbr.rel target = $region3
    $region8: #{tpu_custom_call.1} parent=1 // loop_exit
      _
    %3644 = vsyncpa [#allocation3], 1
    %s3645 = scalar_lea.sflag [#allocation3], 1
    %3646 = vsyncpa %s3645, 1
    %3647 = vsyncpa [#allocation8], 1
    %3648 = vsyncpa [#allocation11], 1
    %3649 = vsyncpa [#allocation14], 1
    %3650 = vsyncpa [#allocation4], 1
    %s3651 = scalar_lea.sflag [#allocation4], 1
    %3652 = vsyncpa %s3651, 1
    %3653 = vsyncpa [#allocation5], 1
    %s3654 = scalar_lea.sflag [#allocation5], 1
    %3655 = vsyncpa %s3654, 1

</llo_original>
